<compile_context>
chip_gen: v7x
topology: tpu7x:2x2x1
jax: 0.10.0
libtpu: 0.0.40
codegen_flags: <defaults>
</compile_context>

<pallas_src>
import functools

import jax
import jax.numpy as jnp
from jax.experimental import pallas as pl
from jax.experimental.pallas import tpu as pltpu

HIDDEN = 768        # transformer hidden size (CLS embedding dim)
MID1 = 768          # classifier hidden 1
MID2 = 256          # classifier hidden 2
NUM_CLASSES = 6
OUT_PAD = 128       # lane-dense padded logits width (>= NUM_CLASSES)
LEAKY_SLOPE = 0.01  # nn.LeakyReLU default negative_slope


def _leaky_relu(x):
    return jnp.where(x > 0, x, LEAKY_SLOPE * x)


def _round_up(x, m):
    return (x + m - 1) // m * m


# ----------------------------- kernels ------------------------------------ #

def _concat_head_kernel(g_ref, p_ref, n_ref,
                        w1g_ref, w1p_ref, w1n_ref, b1_ref,
                        w2_ref, b2_ref,
                        w3_ref, b3_ref,
                        out_ref):
    # concat(g, p, n) @ W1  ==  g @ W1g + p @ W1p + n @ W1n  (row-split of W1).
    # Inputs arrive in their upstream dtype (f32); cast to bf16 at dot time.
    bf16 = jnp.bfloat16
    h1 = jnp.dot(g_ref[...].astype(bf16), w1g_ref[...],
                 preferred_element_type=jnp.float32)
    h1 = h1 + jnp.dot(p_ref[...].astype(bf16), w1p_ref[...],
                      preferred_element_type=jnp.float32)
    h1 = h1 + jnp.dot(n_ref[...].astype(bf16), w1n_ref[...],
                      preferred_element_type=jnp.float32)
    h1 = _leaky_relu(h1 + b1_ref[...])                       # f32 elementwise
    h2 = jnp.dot(h1.astype(bf16), w2_ref[...],
                 preferred_element_type=jnp.float32) + b2_ref[...]
    h2 = _leaky_relu(h2)                                     # f32 elementwise
    logits = jnp.dot(h2.astype(bf16), w3_ref[...],
                     preferred_element_type=jnp.float32) + b3_ref[...]
    out_ref[...] = logits.astype(out_ref.dtype)              # (TB, 128) unmasked store


def _mul_head_kernel(g_ref, p_ref, n_ref,
                     w1_ref, b1_ref,
                     w2_ref, b2_ref,
                     w3_ref, b3_ref,
                     out_ref):
    bf16 = jnp.bfloat16
    # Elementwise product in f32 (v5e VPU has no bf16); matmuls in bf16.
    x = (g_ref[...].astype(jnp.float32)
         * p_ref[...].astype(jnp.float32)
         * n_ref[...].astype(jnp.float32))
    h1 = jnp.dot(x.astype(bf16), w1_ref[...],
                 preferred_element_type=jnp.float32) + b1_ref[...]
    h1 = _leaky_relu(h1)
    h2 = jnp.dot(h1.astype(bf16), w2_ref[...],
                 preferred_element_type=jnp.float32) + b2_ref[...]
    h2 = _leaky_relu(h2)
    logits = jnp.dot(h2.astype(bf16), w3_ref[...],
                     preferred_element_type=jnp.float32) + b3_ref[...]
    out_ref[...] = logits.astype(out_ref.dtype)


# ----------------------------- params -------------------------------------- #

def init_classifier_params(key, fusion="concat", num_classes=NUM_CLASSES):
    """Deterministic init of the nn.Sequential classifier weights.

    Weights are stored as (in_features, out_features); biases as (1, out)."""
    n = 3 if fusion == "concat" else 1
    k1, k2, k3, k4, k5, k6 = jax.random.split(key, 6)
    scale = 0.02
    return {
        "w1": jax.random.normal(k1, (n * HIDDEN, MID1), jnp.float32) * scale,
        "b1": jax.random.normal(k2, (1, MID1), jnp.float32) * scale,
        "w2": jax.random.normal(k3, (MID1, MID2), jnp.float32) * scale,
        "b2": jax.random.normal(k4, (1, MID2), jnp.float32) * scale,
        "w3": jax.random.normal(k5, (MID2, num_classes), jnp.float32) * scale,
        "b3": jax.random.normal(k6, (1, num_classes), jnp.float32) * scale,
    }


def prepare_params(params, fusion="concat", num_classes=NUM_CLASSES):
    """One-time prep: bf16 weights, f32 biases, lane-pad final layer to 128."""
    w3p = jnp.zeros((MID2, OUT_PAD), jnp.float32).at[:, :num_classes].set(params["w3"])
    b3p = jnp.zeros((1, OUT_PAD), jnp.float32).at[:, :num_classes].set(params["b3"])
    out = {
        "b1": params["b1"].astype(jnp.float32),
        "w2": params["w2"].astype(jnp.bfloat16),
        "b2": params["b2"].astype(jnp.float32),
        "w3": w3p.astype(jnp.bfloat16),
        "b3": b3p,  # f32, added to the f32 accumulator
    }
    if fusion == "concat":
        w1 = params["w1"]
        out["w1g"] = w1[:HIDDEN].astype(jnp.bfloat16)
        out["w1p"] = w1[HIDDEN:2 * HIDDEN].astype(jnp.bfloat16)
        out["w1n"] = w1[2 * HIDDEN:].astype(jnp.bfloat16)
    else:
        out["w1"] = params["w1"].astype(jnp.bfloat16)
    return out


# ----------------------- single-buffer weight probe ------------------------ #

@functools.lru_cache(maxsize=None)
def _single_buffer_supported():
    """Probe whether pipeline_mode=pl.Buffered(1) lowers on this backend."""
    def copy_kernel(x_ref, o_ref):
        o_ref[...] = x_ref[...]
    try:
        out = pl.pallas_call(
            copy_kernel,
            out_shape=jax.ShapeDtypeStruct((8, 128), jnp.float32),
            grid=(1,),
            in_specs=[pl.BlockSpec((8, 128), lambda i: (0, 0),
                                   pipeline_mode=pl.Buffered(1))],
            out_specs=pl.BlockSpec((8, 128), lambda i: (0, 0)),
        )(jnp.zeros((8, 128), jnp.float32))
        jax.block_until_ready(out)
        return True
    except Exception:
        return False


# ----------------------------- wrapper ------------------------------------- #

def _choose_batch_tile(B):
    """Batch tile.

    Tiny batches: a single full-array tile (no ragged rows, one grid step).
    Larger batches: 16-row-multiple tiles sized so the grid has >= 2 steps,
    letting dimension_semantics=("parallel",) shard across v7x's 2 TCs.
    Cap 512 keeps f32 activation double-buffers + weights well under the
    32 MiB scoped VMEM limit on every generation."""
    if B <= 32:
        return B
    return min(512, _round_up((B + 1) // 2, 16))


@functools.partial(
    jax.jit, static_argnames=("fusion", "num_classes", "single_buffer_weights"))
def _bloomnet_head_impl(cls_generic, cls_pos, cls_ner, prepared, *,
                        fusion, num_classes, single_buffer_weights):
    B = cls_generic.shape[0]
    TB = _choose_batch_tile(B)
    grid_steps = pl.cdiv(B, TB)

    if fusion == "concat":
        weight_args = (prepared["w1g"], prepared["w1p"], prepared["w1n"],
                       prepared["b1"], prepared["w2"], prepared["b2"],
                       prepared["w3"], prepared["b3"])
        kernel = _concat_head_kernel
        n_blocks = 3
    else:
        weight_args = (prepared["w1"], prepared["b1"],
                       prepared["w2"], prepared["b2"],
                       prepared["w3"], prepared["b3"])
        kernel = _mul_head_kernel
        n_blocks = 1

    # Activations stream in (TB, 768) f32 tiles; no wrapper cast/pad passes.
    act_spec = pl.BlockSpec((TB, HIDDEN), lambda i: (i, 0))

    # Weights/biases: constant index_map -> fetched once, VMEM-resident across
    # grid steps; single-buffered (Buffered(1)) when the backend supports it.
    def const_spec(shape):
        if single_buffer_weights:
            return pl.BlockSpec(shape, lambda i: (0, 0),
                                pipeline_mode=pl.Buffered(1))
        return pl.BlockSpec(shape, lambda i: (0, 0))

    in_specs = ([act_spec, act_spec, act_spec]
                + [const_spec(w.shape) for w in weight_args])
    out_spec = pl.BlockSpec((TB, OUT_PAD), lambda i: (i, 0))

    work_rows = grid_steps * TB
    flops = 2 * work_rows * (n_blocks * HIDDEN * MID1 + MID1 * MID2 + MID2 * OUT_PAD)
    weight_bytes = sum(int(w.size) * w.dtype.itemsize for w in weight_args)
    bytes_accessed = weight_bytes + 3 * B * HIDDEN * 4 + B * OUT_PAD * 4
    cost = pl.CostEstimate(flops=flops, transcendentals=0,
                           bytes_accessed=bytes_accessed)

    out = pl.pallas_call(
        kernel,
        out_shape=jax.ShapeDtypeStruct((B, OUT_PAD), jnp.float32),
        grid=(grid_steps,),
        in_specs=in_specs,
        out_specs=out_spec,
        compiler_params=pltpu.CompilerParams(
            dimension_semantics=("parallel",),
            vmem_limit_bytes=32 << 20),
        cost_estimate=cost,
    )(cls_generic, cls_pos, cls_ner, *weight_args)

    return out[:, :num_classes]


def bloomnet_head(cls_generic, cls_pos, cls_ner, prepared,
                  fusion="concat", num_classes=NUM_CLASSES):
    """Fusion + 3-layer MLP classifier in a single batch-tiled Pallas kernel."""
    return _bloomnet_head_impl(
        cls_generic, cls_pos, cls_ner, prepared,
        fusion=fusion, num_classes=num_classes,
        single_buffer_weights=_single_buffer_supported())


# ------------------------- pure-JAX reference ------------------------------ #

def _ref_head(cls_generic, cls_pos, cls_ner, prepared, fusion="concat",
              num_classes=NUM_CLASSES):
    """f32 reference modelling the same bf16 rounding points as the kernel."""
    f32 = lambda a: a.astype(jnp.float32)
    bf = lambda a: a.astype(jnp.bfloat16).astype(jnp.float32)
    if fusion == "concat":
        w1 = jnp.concatenate([f32(prepared["w1g"]), f32(prepared["w1p"]),
                              f32(prepared["w1n"])], axis=0)
        x = jnp.concatenate([bf(cls_generic), bf(cls_pos), bf(cls_ner)], axis=1)
    else:
        w1 = f32(prepared["w1"])
        x = bf(f32(cls_generic) * f32(cls_pos) * f32(cls_ner))
    h1 = _leaky_relu(x @ w1 + prepared["b1"])
    h2 = _leaky_relu(bf(h1) @ f32(prepared["w2"]) + prepared["b2"])
    logits = bf(h2) @ f32(prepared["w3"]) + prepared["b3"]
    return logits[:, :num_classes]


# ---------------------------------------------------------------------------- #

if __name__ == "__main__":
    key = jax.random.PRNGKey(0)
    k_g, k_p, k_n, k_params = jax.random.split(key, 4)

    # Synthetic stand-ins for the CLS embeddings the three transformer
    # backbones would produce (outputs[0][:, 0] of each AutoModel).
    # B=2: single full-array tile; B=40: 2-step grid with a ragged last tile.
    for B in (2, 40):
        cls_generic = jax.random.normal(k_g, (B, HIDDEN), jnp.float32)
        cls_pos = jax.random.normal(k_p, (B, HIDDEN), jnp.float32)
        cls_ner = jax.random.normal(k_n, (B, HIDDEN), jnp.float32)

        for fusion in ("concat", "mul"):
            params = init_classifier_params(k_params, fusion=fusion)
            prepared = prepare_params(params, fusion=fusion)

            logits = bloomnet_head(cls_generic, cls_pos, cls_ner, prepared,
                                   fusion=fusion, num_classes=NUM_CLASSES)
            logits = jax.block_until_ready(logits)

            ref = _ref_head(cls_generic, cls_pos, cls_ner, prepared,
                            fusion=fusion)
            assert logits.shape == (B, NUM_CLASSES)
            err = float(jnp.max(jnp.abs(logits - ref)))
            assert bool(jnp.allclose(logits, ref, atol=2e-2, rtol=2e-2)), (
                f"fusion={fusion} B={B}: max abs err {err}")

    print("KERNEL_OK")
</pallas_src>

<mosaic_0001>
module attributes {stable_mosaic.version = 11 : i64} {
  func.func @copy_kernel(%arg0: i32, %arg1: memref<8x128xf32, #tpu.memory_space<vmem>>, %arg2: memref<8x128xf32, #tpu.memory_space<vmem>>) attributes {dimension_semantics = [#tpu.dimension_semantics<arbitrary>], iteration_bounds = array<i64: 1>, scalar_prefetch = 0 : i64, scratch_operands = 0 : i64, tpu.core_type = #tpu.core_type<tc>, window_params = [{pipeline_mode = #tpu.pipeline_mode<synchronous>, transform_indices = @transform_0, window_bounds = array<i64: 8, 128>}, {pipeline_mode = #tpu.pipeline_mode<synchronous>, transform_indices = @transform_1, window_bounds = array<i64: 8, 128>}]} {
    %c0 = arith.constant 0 : index
    %c0_0 = arith.constant 0 : index
    %0 = vector.load %arg1[%c0, %c0_0] : memref<8x128xf32, #tpu.memory_space<vmem>>, vector<8x128xf32>
    %c0_1 = arith.constant 0 : index
    %c0_2 = arith.constant 0 : index
    %1 = vector.load %arg2[%c0_1, %c0_2] : memref<8x128xf32, #tpu.memory_space<vmem>>, vector<8x128xf32>
    tpu.vector_store %arg2[%c0_1, %c0_2], %0 {strides = array<i32>} : memref<8x128xf32, #tpu.memory_space<vmem>>, vector<8x128xf32>,
    return
  }
  func.func @transform_0(%arg0: i32) -> (i32, i32) {
    %c0_i32 = arith.constant 0 : i32
    %c0_i32_0 = arith.constant 0 : i32
    %c0_i32_1 = arith.constant 0 : i32
    return %c0_i32, %c0_i32_0 : i32, i32
  }
  func.func @transform_1(%arg0: i32) -> (i32, i32) {
    %c0_i32 = arith.constant 0 : i32
    %c0_i32_0 = arith.constant 0 : i32
    %c0_i32_1 = arith.constant 0 : i32
    return %c0_i32, %c0_i32_0 : i32, i32
  }
}

module attributes {stable_mosaic.version = 11 : i64} {
  func.func @_concat_head_kernel(%arg0: i32, %arg1: memref<2x768xf32, #tpu.memory_space<vmem>>, %arg2: memref<2x768xf32, #tpu.memory_space<vmem>>, %arg3: memref<2x768xf32, #tpu.memory_space<vmem>>, %arg4: memref<768x768xbf16, #tpu.memory_space<vmem>>, %arg5: memref<768x768xbf16, #tpu.memory_space<vmem>>, %arg6: memref<768x768xbf16, #tpu.memory_space<vmem>>, %arg7: memref<1x768xf32, #tpu.memory_space<vmem>>, %arg8: memref<768x256xbf16, #tpu.memory_space<vmem>>, %arg9: memref<1x256xf32, #tpu.memory_space<vmem>>, %arg10: memref<256x128xbf16, #tpu.memory_space<vmem>>, %arg11: memref<1x128xf32, #tpu.memory_space<vmem>>, %arg12: memref<2x128xf32, #tpu.memory_space<vmem>>) attributes {dimension_semantics = [#tpu.dimension_semantics<parallel>], iteration_bounds = array<i64: 1>, scalar_prefetch = 0 : i64, scratch_operands = 0 : i64, tpu.core_type = #tpu.core_type<tc>, window_params = [{transform_indices = @transform_0, window_bounds = array<i64: 2, 768>}, {transform_indices = @transform_1, window_bounds = array<i64: 2, 768>}, {transform_indices = @transform_2, window_bounds = array<i64: 2, 768>}, {pipeline_mode = #tpu.pipeline_mode<synchronous>, transform_indices = @transform_3, window_bounds = array<i64: 768, 768>}, {pipeline_mode = #tpu.pipeline_mode<synchronous>, transform_indices = @transform_4, window_bounds = array<i64: 768, 768>}, {pipeline_mode = #tpu.pipeline_mode<synchronous>, transform_indices = @transform_5, window_bounds = array<i64: 768, 768>}, {pipeline_mode = #tpu.pipeline_mode<synchronous>, transform_indices = @transform_6, window_bounds = array<i64: 1, 768>}, {pipeline_mode = #tpu.pipeline_mode<synchronous>, transform_indices = @transform_7, window_bounds = array<i64: 768, 256>}, {pipeline_mode = #tpu.pipeline_mode<synchronous>, transform_indices = @transform_8, window_bounds = array<i64: 1, 256>}, {pipeline_mode = #tpu.pipeline_mode<synchronous>, transform_indices = @transform_9, window_bounds = array<i64: 256, 128>}, {pipeline_mode = #tpu.pipeline_mode<synchronous>, transform_indices = @transform_10, window_bounds = array<i64: 1, 128>}, {transform_indices = @transform_11, window_bounds = array<i64: 2, 128>}]} {
    %c0 = arith.constant 0 : index
    %c0_0 = arith.constant 0 : index
    %0 = vector.load %arg1[%c0, %c0_0] : memref<2x768xf32, #tpu.memory_space<vmem>>, vector<2x768xf32>
    %1 = arith.truncf %0 : vector<2x768xf32> to vector<2x768xbf16>
    %c0_1 = arith.constant 0 : index
    %c0_2 = arith.constant 0 : index
    %2 = vector.load %arg4[%c0_1, %c0_2] : memref<768x768xbf16, #tpu.memory_space<vmem>>, vector<768x768xbf16>
    %cst = arith.constant dense<0.000000e+00> : vector<2x768xf32>
    %3 = tpu.matmul %1, %2, %cst {dimension_numbers = #tpu.dot_dimension_numbers<[1], [0], [0], [1], [0, 0, 1, 1], [], []>} : vector<2x768xbf16>, vector<768x768xbf16>, vector<2x768xf32> -> vector<2x768xf32>
    %c0_3 = arith.constant 0 : index
    %c0_4 = arith.constant 0 : index
    %4 = vector.load %arg2[%c0_3, %c0_4] : memref<2x768xf32, #tpu.memory_space<vmem>>, vector<2x768xf32>
    %5 = arith.truncf %4 : vector<2x768xf32> to vector<2x768xbf16>
    %c0_5 = arith.constant 0 : index
    %c0_6 = arith.constant 0 : index
    %6 = vector.load %arg5[%c0_5, %c0_6] : memref<768x768xbf16, #tpu.memory_space<vmem>>, vector<768x768xbf16>
    %cst_7 = arith.constant dense<0.000000e+00> : vector<2x768xf32>
    %7 = tpu.matmul %5, %6, %cst_7 {dimension_numbers = #tpu.dot_dimension_numbers<[1], [0], [0], [1], [0, 0, 1, 1], [], []>} : vector<2x768xbf16>, vector<768x768xbf16>, vector<2x768xf32> -> vector<2x768xf32>
    %8 = arith.addf %3, %7 : vector<2x768xf32>
    %c0_8 = arith.constant 0 : index
    %c0_9 = arith.constant 0 : index
    %9 = vector.load %arg3[%c0_8, %c0_9] : memref<2x768xf32, #tpu.memory_space<vmem>>, vector<2x768xf32>
    %10 = arith.truncf %9 : vector<2x768xf32> to vector<2x768xbf16>
    %c0_10 = arith.constant 0 : index
    %c0_11 = arith.constant 0 : index
    %11 = vector.load %arg6[%c0_10, %c0_11] : memref<768x768xbf16, #tpu.memory_space<vmem>>, vector<768x768xbf16>
    %cst_12 = arith.constant dense<0.000000e+00> : vector<2x768xf32>
    %12 = tpu.matmul %10, %11, %cst_12 {dimension_numbers = #tpu.dot_dimension_numbers<[1], [0], [0], [1], [0, 0, 1, 1], [], []>} : vector<2x768xbf16>, vector<768x768xbf16>, vector<2x768xf32> -> vector<2x768xf32>
    %13 = arith.addf %8, %12 : vector<2x768xf32>
    %c0_13 = arith.constant 0 : index
    %c0_14 = arith.constant 0 : index
    %14 = vector.load %arg7[%c0_13, %c0_14] : memref<1x768xf32, #tpu.memory_space<vmem>>, vector<1x768xf32>
    %15 = vector.broadcast %14 : vector<1x768xf32> to vector<2x768xf32>
    %16 = arith.addf %13, %15 : vector<2x768xf32>
    %cst_15 = arith.constant 0.000000e+00 : f32
    %17 = vector.broadcast %cst_15 : f32 to vector<2x768xf32>
    %18 = arith.cmpf ogt, %16, %17 : vector<2x768xf32>
    %cst_16 = arith.constant 0.00999999977 : f32
    %19 = vector.broadcast %cst_16 : f32 to vector<2x768xf32>
    %20 = arith.mulf %19, %16 : vector<2x768xf32>
    %21 = arith.select %18, %16, %20 : vector<2x768xi1>, vector<2x768xf32>
    %22 = arith.truncf %21 : vector<2x768xf32> to vector<2x768xbf16>
    %c0_17 = arith.constant 0 : index
    %c0_18 = arith.constant 0 : index
    %23 = vector.load %arg8[%c0_17, %c0_18] : memref<768x256xbf16, #tpu.memory_space<vmem>>, vector<768x256xbf16>
    %cst_19 = arith.constant dense<0.000000e+00> : vector<2x256xf32>
    %24 = tpu.matmul %22, %23, %cst_19 {dimension_numbers = #tpu.dot_dimension_numbers<[1], [0], [0], [1], [0, 0, 1, 1], [], []>} : vector<2x768xbf16>, vector<768x256xbf16>, vector<2x256xf32> -> vector<2x256xf32>
    %c0_20 = arith.constant 0 : index
    %c0_21 = arith.constant 0 : index
    %25 = vector.load %arg9[%c0_20, %c0_21] : memref<1x256xf32, #tpu.memory_space<vmem>>, vector<1x256xf32>
    %26 = vector.broadcast %25 : vector<1x256xf32> to vector<2x256xf32>
    %27 = arith.addf %24, %26 : vector<2x256xf32>
    %cst_22 = arith.constant 0.000000e+00 : f32
    %28 = vector.broadcast %cst_22 : f32 to vector<2x256xf32>
    %29 = arith.cmpf ogt, %27, %28 : vector<2x256xf32>
    %cst_23 = arith.constant 0.00999999977 : f32
    %30 = vector.broadcast %cst_23 : f32 to vector<2x256xf32>
    %31 = arith.mulf %30, %27 : vector<2x256xf32>
    %32 = arith.select %29, %27, %31 : vector<2x256xi1>, vector<2x256xf32>
    %33 = arith.truncf %32 : vector<2x256xf32> to vector<2x256xbf16>
    %c0_24 = arith.constant 0 : index
    %c0_25 = arith.constant 0 : index
    %34 = vector.load %arg10[%c0_24, %c0_25] : memref<256x128xbf16, #tpu.memory_space<vmem>>, vector<256x128xbf16>
    %cst_26 = arith.constant dense<0.000000e+00> : vector<2x128xf32>
    %35 = tpu.matmul %33, %34, %cst_26 {dimension_numbers = #tpu.dot_dimension_numbers<[1], [0], [0], [1], [0, 0, 1, 1], [], []>} : vector<2x256xbf16>, vector<256x128xbf16>, vector<2x128xf32> -> vector<2x128xf32>
    %c0_27 = arith.constant 0 : index
    %c0_28 = arith.constant 0 : index
    %36 = vector.load %arg11[%c0_27, %c0_28] : memref<1x128xf32, #tpu.memory_space<vmem>>, vector<1x128xf32>
    %37 = vector.broadcast %36 : vector<1x128xf32> to vector<2x128xf32>
    %38 = arith.addf %35, %37 : vector<2x128xf32>
    %c0_29 = arith.constant 0 : index
    %c0_30 = arith.constant 0 : index
    %39 = vector.load %arg12[%c0_29, %c0_30] : memref<2x128xf32, #tpu.memory_space<vmem>>, vector<2x128xf32>
    tpu.vector_store %arg12[%c0_29, %c0_30], %38 {strides = array<i32>} : memref<2x128xf32, #tpu.memory_space<vmem>>, vector<2x128xf32>,
    return
  }
  func.func @transform_0(%arg0: i32) -> (i32, i32) {
    %c0_i32 = arith.constant 0 : i32
    %c0_i32_0 = arith.constant 0 : i32
    return %arg0, %c0_i32 : i32, i32
  }
  func.func @transform_1(%arg0: i32) -> (i32, i32) {
    %c0_i32 = arith.constant 0 : i32
    %c0_i32_0 = arith.constant 0 : i32
    return %arg0, %c0_i32 : i32, i32
  }
  func.func @transform_2(%arg0: i32) -> (i32, i32) {
    %c0_i32 = arith.constant 0 : i32
    %c0_i32_0 = arith.constant 0 : i32
    return %arg0, %c0_i32 : i32, i32
  }
  func.func @transform_3(%arg0: i32) -> (i32, i32) {
    %c0_i32 = arith.constant 0 : i32
    %c0_i32_0 = arith.constant 0 : i32
    %c0_i32_1 = arith.constant 0 : i32
    return %c0_i32, %c0_i32_0 : i32, i32
  }
  func.func @transform_4(%arg0: i32) -> (i32, i32) {
    %c0_i32 = arith.constant 0 : i32
    %c0_i32_0 = arith.constant 0 : i32
    %c0_i32_1 = arith.constant 0 : i32
    return %c0_i32, %c0_i32_0 : i32, i32
  }
  func.func @transform_5(%arg0: i32) -> (i32, i32) {
    %c0_i32 = arith.constant 0 : i32
    %c0_i32_0 = arith.constant 0 : i32
    %c0_i32_1 = arith.constant 0 : i32
    return %c0_i32, %c0_i32_0 : i32, i32
  }
  func.func @transform_6(%arg0: i32) -> (i32, i32) {
    %c0_i32 = arith.constant 0 : i32
    %c0_i32_0 = arith.constant 0 : i32
    %c0_i32_1 = arith.constant 0 : i32
    return %c0_i32, %c0_i32_0 : i32, i32
  }
  func.func @transform_7(%arg0: i32) -> (i32, i32) {
    %c0_i32 = arith.constant 0 : i32
    %c0_i32_0 = arith.constant 0 : i32
    %c0_i32_1 = arith.constant 0 : i32
    return %c0_i32, %c0_i32_0 : i32, i32
  }
  func.func @transform_8(%arg0: i32) -> (i32, i32) {
    %c0_i32 = arith.constant 0 : i32
    %c0_i32_0 = arith.constant 0 : i32
    %c0_i32_1 = arith.constant 0 : i32
    return %c0_i32, %c0_i32_0 : i32, i32
  }
  func.func @transform_9(%arg0: i32) -> (i32, i32) {
    %c0_i32 = arith.constant 0 : i32
    %c0_i32_0 = arith.constant 0 : i32
    %c0_i32_1 = arith.constant 0 : i32
    return %c0_i32, %c0_i32_0 : i32, i32
  }
  func.func @transform_10(%arg0: i32) -> (i32, i32) {
    %c0_i32 = arith.constant 0 : i32
    %c0_i32_0 = arith.constant 0 : i32
    %c0_i32_1 = arith.constant 0 : i32
    return %c0_i32, %c0_i32_0 : i32, i32
  }
  func.func @transform_11(%arg0: i32) -> (i32, i32) {
    %c0_i32 = arith.constant 0 : i32
    %c0_i32_0 = arith.constant 0 : i32
    return %arg0, %c0_i32 : i32, i32
  }
}

</mosaic_0001>

<llo_original>
// kernel: tpu_custom_call.1
$region0: #{tpu_custom_call.1}
  #allocation0 [shape = 'u32[]', space=smem, size = 0x4, offset = 0x4, fixed_abs, tag = 'smem constant byte address 0x4 - core index']
  #allocation1 [shape = 'u32[144,128]{1,0:T(1,128)}', space=vmem, size = 0x12000, scoped, tag = 'internal scratch']
  %s0 = inlined_call_operand.hbm [shape: f32[8,128], index: 0, kind: input, shape index: {}]
  %s1 = inlined_call_operand.hbm [shape: f32[8,128], index: 1, kind: output, shape index: {}]
  %s2 = sld [smem:[#allocation0]]
  $region18: #{tpu_custom_call.1} parent=0
    _
  %s4 = ssub.s32 1, %s2
  %s5 = scalar_select 0, %s4, %s2
  $region1: #{tpu_custom_call.1} parent=0
    #allocation2 [shape = 'u8[4096]{0}', space=vmem, size = 0x1000, scoped, tag = 'input window, operand 0, single buffered']
    #allocation3 [shape = 's32[1]{0}', space=sflag, size = 0x4, scoped, tag = 'scoped memory for tpu_custom_call.1']
    #allocation4 [shape = 's32[1]{0}', space=sflag, size = 0x4, scoped, tag = 'scoped memory for tpu_custom_call.1']
    #allocation5 [shape = 'u8[4096]{0}', space=vmem, size = 0x1000, scoped, tag = 'output window, operand 0, single buffered']
    %6 = vsyncpa [#allocation3], 0
    %7 = vsyncpa [#allocation4], 0
    // Predicated region
    $region2: #{tpu_custom_call.1} parent=1 // pred_check
      _
    $region3: #{tpu_custom_call.1} parent=1 // pred_check_branch
      %9 = sbr.rel (0) target = $region5
    $region4: #{tpu_custom_call.1} parent=1 // pred_region
      %s11 = ssub.s32 128, 128
      %12 = vsyncadd [#allocation3], %s11
      %s14 = sshll.u32 [#allocation2], 4
      %s15 = int_to_ptr.vmem [resolvable:$true] %s14
      %17 = dma.hbm_to_vmem [thread:$0]  %s0, 128, %s15, [#allocation3]
    $region5: #{tpu_custom_call.1} parent=1 // pred_fallthru
      _
    // Predicated region
    $region6: #{tpu_custom_call.1} parent=1 // pred_check
      _
    $region7: #{tpu_custom_call.1} parent=1 // pred_check_branch
      %19 = sbr.rel (0) target = $region9
    $region8: #{tpu_custom_call.1} parent=1 // pred_region
      %20 = dma.done [#allocation3], 128
    $region9: #{tpu_custom_call.1} parent=1 // pred_fallthru
      _
    %v21 = vld [vmem:[#allocation2] sm:$0xff]
    %22 = vst [vmem:[#allocation5] sm:$0xff] %v21
    // Predicated region
    $region10: #{tpu_custom_call.1} parent=1 // pred_check
      _
    $region11: #{tpu_custom_call.1} parent=1 // pred_check_branch
      %24 = sbr.rel (0) target = $region13
    $region12: #{tpu_custom_call.1} parent=1 // pred_region
      %s26 = ssub.s32 128, 128
      %27 = vsyncadd [#allocation4], %s26
      %s29 = sshll.u32 [#allocation5], 4
      %s30 = int_to_ptr.vmem [resolvable:$true] %s29
      %32 = dma.vmem_to_hbm [thread:$0]  %s30, 128, %s1, [#allocation4]
    $region13: #{tpu_custom_call.1} parent=1 // pred_fallthru
      _
    // Predicated region
    $region14: #{tpu_custom_call.1} parent=1 // pred_check
      _
    $region15: #{tpu_custom_call.1} parent=1 // pred_check_branch
      %34 = sbr.rel (0) target = $region17
    $region16: #{tpu_custom_call.1} parent=1 // pred_region
      %35 = dma.done [#allocation4], 128
    $region17: #{tpu_custom_call.1} parent=1 // pred_fallthru
      _
    %36 = vsyncpa [#allocation3], 1
    %37 = vsyncpa [#allocation4], 1

// kernel: _bloomnet_head_impl.1
$region0: #{_bloomnet_head_impl.1}
  #allocation0 [shape = 'u32[]', space=smem, size = 0x4, offset = 0x4, fixed_abs, tag = 'smem constant byte address 0x4 - core index']
  #allocation1 [shape = 'u32[144,128]{1,0:T(1,128)}', space=vmem, size = 0x12000, scoped, tag = 'internal scratch']
  %s0 = inlined_call_operand.hbm [shape: f32[2,768], index: 0, kind: input, shape index: {}]
  %s1 = inlined_call_operand.hbm [shape: f32[2,768], index: 1, kind: input, shape index: {}]
  %s2 = inlined_call_operand.hbm [shape: f32[2,768], index: 2, kind: input, shape index: {}]
  %s3 = inlined_call_operand.hbm [shape: bf16[768,768], index: 3, kind: input, shape index: {}]
  %s4 = inlined_call_operand.hbm [shape: bf16[768,768], index: 4, kind: input, shape index: {}]
  %s5 = inlined_call_operand.hbm [shape: bf16[768,768], index: 5, kind: input, shape index: {}]
  %s6 = inlined_call_operand.hbm [shape: f32[1,768], index: 6, kind: input, shape index: {}]
  %s7 = inlined_call_operand.hbm [shape: bf16[768,256], index: 7, kind: input, shape index: {}]
  %s8 = inlined_call_operand.hbm [shape: f32[1,256], index: 8, kind: input, shape index: {}]
  %s9 = inlined_call_operand.hbm [shape: bf16[256,128], index: 9, kind: input, shape index: {}]
  %s10 = inlined_call_operand.hbm [shape: f32[1,128], index: 10, kind: input, shape index: {}]
  %s11 = inlined_call_operand.hbm [shape: f32[2,128], index: 11, kind: output, shape index: {}]
  %s12 = sld [smem:[#allocation0]]
  $region98: #{_bloomnet_head_impl.1} parent=0
    _
  %s14 = ssub.s32 1, %s12
  %s15 = scalar_select 0, %s14, %s12
  $region1: #{_bloomnet_head_impl.1} parent=0
    #allocation2 [shape = 'u8[6144]{0}', space=vmem, size = 0x1800, scoped, tag = 'input window, operand 0, single buffered']
    #allocation3 [shape = 's32[1]{0}', space=sflag, size = 0x4, scoped, tag = 'scoped memory for _bloomnet_head_impl.1']
    #allocation4 [shape = 's32[1]{0}', space=sflag, size = 0x4, scoped, tag = 'scoped memory for _bloomnet_head_impl.1']
    #allocation5 [shape = 'u8[6144]{0}', space=vmem, size = 0x1800, scoped, tag = 'input window, operand 1, single buffered']
    #allocation6 [shape = 's32[1]{0}', space=sflag, size = 0x4, scoped, tag = 'scoped memory for _bloomnet_head_impl.1']
    #allocation7 [shape = 'u8[6144]{0}', space=vmem, size = 0x1800, scoped, tag = 'input window, operand 2, single buffered']
    #allocation8 [shape = 'u8[1179648]{0}', space=vmem, size = 0x120000, scoped, tag = 'input window, operand 3, single buffered']
    #allocation9 [shape = 's32[1]{0}', space=sflag, size = 0x4, scoped, tag = 'scoped memory for _bloomnet_head_impl.1']
    #allocation10 [shape = 'u8[1179648]{0}', space=vmem, size = 0x120000, scoped, tag = 'input window, operand 4, single buffered']
    #allocation11 [shape = 'u8[1179648]{0}', space=vmem, size = 0x120000, scoped, tag = 'input window, operand 5, single buffered']
    #allocation12 [shape = 's32[1]{0}', space=sflag, size = 0x4, scoped, tag = 'scoped memory for _bloomnet_head_impl.1']
    #allocation13 [shape = 'u8[3072]{0}', space=vmem, size = 0xc00, scoped, tag = 'input window, operand 6, single buffered']
    #allocation14 [shape = 'u8[393216]{0}', space=vmem, size = 0x60000, scoped, tag = 'input window, operand 7, single buffered']
    #allocation15 [shape = 's32[1]{0}', space=sflag, size = 0x4, scoped, tag = 'scoped memory for _bloomnet_head_impl.1']
    #allocation16 [shape = 'u8[1024]{0}', space=vmem, size = 0x400, scoped, tag = 'input window, operand 8, single buffered']
    #allocation17 [shape = 'u8[65536]{0}', space=vmem, size = 0x10000, scoped, tag = 'input window, operand 9, single buffered']
    #allocation18 [shape = 's32[1]{0}', space=sflag, size = 0x4, scoped, tag = 'scoped memory for _bloomnet_head_impl.1']
    #allocation19 [shape = 'u8[512]{0}', space=vmem, size = 0x400, scoped, tag = 'input window, operand 10, single buffered']
    #allocation20 [shape = 'u8[1024]{0}', space=vmem, size = 0x400, scoped, tag = 'output window, operand 0, single buffered']
    %16 = vsyncpa [#allocation3], 0
    %17 = vsyncpa [#allocation6], 0
    %18 = vsyncpa [#allocation9], 0
    %19 = vsyncpa [#allocation12], 0
    %20 = vsyncpa [#allocation15], 0
    %21 = vsyncpa [#allocation18], 0
    %22 = vsyncpa [#allocation4], 0
    // Predicated region
    $region2: #{_bloomnet_head_impl.1} parent=1 // pred_check
      _
    $region3: #{_bloomnet_head_impl.1} parent=1 // pred_check_branch
      %24 = sbr.rel (0) target = $region5
    $region4: #{_bloomnet_head_impl.1} parent=1 // pred_region
      %s26 = ssub.s32 192, 192
      %27 = vsyncadd [#allocation3], %s26
      %s29 = sshll.u32 [#allocation2], 4
      %s30 = int_to_ptr.vmem [resolvable:$true] %s29
      %32 = dma.hbm_to_vmem [thread:$0]  %s0, 192, %s30, [#allocation3]
    $region5: #{_bloomnet_head_impl.1} parent=1 // pred_fallthru
      _
    // Predicated region
    $region6: #{_bloomnet_head_impl.1} parent=1 // pred_check
      _
    $region7: #{_bloomnet_head_impl.1} parent=1 // pred_check_branch
      %34 = sbr.rel (0) target = $region9
    $region8: #{_bloomnet_head_impl.1} parent=1 // pred_region
      %s36 = ssub.s32 192, 192
      %37 = vsyncadd [#allocation6], %s36
      %s39 = sshll.u32 [#allocation5], 4
      %s40 = int_to_ptr.vmem [resolvable:$true] %s39
      %42 = dma.hbm_to_vmem [thread:$0]  %s1, 192, %s40, [#allocation6]
    $region9: #{_bloomnet_head_impl.1} parent=1 // pred_fallthru
      _
    // Predicated region
    $region10: #{_bloomnet_head_impl.1} parent=1 // pred_check
      _
    $region11: #{_bloomnet_head_impl.1} parent=1 // pred_check_branch
      %44 = sbr.rel (0) target = $region13
    $region12: #{_bloomnet_head_impl.1} parent=1 // pred_region
      %s46 = ssub.s32 192, 192
      %47 = vsyncadd [#allocation6], %s46
      %s49 = sshll.u32 [#allocation7], 4
      %s50 = int_to_ptr.vmem [resolvable:$true] %s49
      %52 = dma.hbm_to_vmem [thread:$0]  %s2, 192, %s50, [#allocation6]
    $region13: #{_bloomnet_head_impl.1} parent=1 // pred_fallthru
      _
    // Predicated region
    $region14: #{_bloomnet_head_impl.1} parent=1 // pred_check
      _
    $region15: #{_bloomnet_head_impl.1} parent=1 // pred_check_branch
      %54 = sbr.rel (0) target = $region17
    $region16: #{_bloomnet_head_impl.1} parent=1 // pred_region
      %s56 = ssub.s32 36864, 36864
      %57 = vsyncadd [#allocation9], %s56
      %s58 = sshll.u32 [#allocation8], 4
      %s59 = int_to_ptr.vmem [resolvable:$true] %s58
      %64 = dma.hbm_to_vmem [thread:$0]  %s3, 36864, %s59, [#allocation9], 384, 384, 24
    $region17: #{_bloomnet_head_impl.1} parent=1 // pred_fallthru
      _
    // Predicated region
    $region18: #{_bloomnet_head_impl.1} parent=1 // pred_check
      _
    $region19: #{_bloomnet_head_impl.1} parent=1 // pred_check_branch
      %66 = sbr.rel (0) target = $region21
    $region20: #{_bloomnet_head_impl.1} parent=1 // pred_region
      %s68 = ssub.s32 36864, 36864
      %69 = vsyncadd [#allocation9], %s68
      %s70 = sshll.u32 [#allocation10], 4
      %s71 = int_to_ptr.vmem [resolvable:$true] %s70
      %76 = dma.hbm_to_vmem [thread:$0]  %s4, 36864, %s71, [#allocation9], 384, 384, 24
    $region21: #{_bloomnet_head_impl.1} parent=1 // pred_fallthru
      _
    // Predicated region
    $region22: #{_bloomnet_head_impl.1} parent=1 // pred_check
      _
    $region23: #{_bloomnet_head_impl.1} parent=1 // pred_check_branch
      %78 = sbr.rel (0) target = $region25
    $region24: #{_bloomnet_head_impl.1} parent=1 // pred_region
      %s80 = ssub.s32 36864, 36864
      %81 = vsyncadd [#allocation12], %s80
      %s82 = sshll.u32 [#allocation11], 4
      %s83 = int_to_ptr.vmem [resolvable:$true] %s82
      %88 = dma.hbm_to_vmem [thread:$0]  %s5, 36864, %s83, [#allocation12], 384, 384, 24
    $region25: #{_bloomnet_head_impl.1} parent=1 // pred_fallthru
      _
    // Predicated region
    $region26: #{_bloomnet_head_impl.1} parent=1 // pred_check
      _
    $region27: #{_bloomnet_head_impl.1} parent=1 // pred_check_branch
      %90 = sbr.rel (0) target = $region29
    $region28: #{_bloomnet_head_impl.1} parent=1 // pred_region
      %s92 = ssub.s32 96, 96
      %93 = vsyncadd [#allocation12], %s92
      %s95 = sshll.u32 [#allocation13], 4
      %s96 = int_to_ptr.vmem [resolvable:$true] %s95
      %98 = dma.hbm_to_vmem [thread:$0]  %s6, 96, %s96, [#allocation12]
    $region29: #{_bloomnet_head_impl.1} parent=1 // pred_fallthru
      _
    // Predicated region
    $region30: #{_bloomnet_head_impl.1} parent=1 // pred_check
      _
    $region31: #{_bloomnet_head_impl.1} parent=1 // pred_check_branch
      %100 = sbr.rel (0) target = $region33
    $region32: #{_bloomnet_head_impl.1} parent=1 // pred_region
      %s102 = ssub.s32 12288, 12288
      %103 = vsyncadd [#allocation15], %s102
      %s104 = sshll.u32 [#allocation14], 4
      %s105 = int_to_ptr.vmem [resolvable:$true] %s104
      %110 = dma.hbm_to_vmem [thread:$0]  %s7, 12288, %s105, [#allocation15], 128, 128, 8
    $region33: #{_bloomnet_head_impl.1} parent=1 // pred_fallthru
      _
    // Predicated region
    $region34: #{_bloomnet_head_impl.1} parent=1 // pred_check
      _
    $region35: #{_bloomnet_head_impl.1} parent=1 // pred_check_branch
      %112 = sbr.rel (0) target = $region37
    $region36: #{_bloomnet_head_impl.1} parent=1 // pred_region
      %s114 = ssub.s32 32, 32
      %115 = vsyncadd [#allocation15], %s114
      %s117 = sshll.u32 [#allocation16], 4
      %s118 = int_to_ptr.vmem [resolvable:$true] %s117
      %120 = dma.hbm_to_vmem [thread:$0]  %s8, 32, %s118, [#allocation15]
    $region37: #{_bloomnet_head_impl.1} parent=1 // pred_fallthru
      _
    // Predicated region
    $region38: #{_bloomnet_head_impl.1} parent=1 // pred_check
      _
    $region39: #{_bloomnet_head_impl.1} parent=1 // pred_check_branch
      %122 = sbr.rel (0) target = $region41
    $region40: #{_bloomnet_head_impl.1} parent=1 // pred_region
      %s124 = ssub.s32 2048, 2048
      %125 = vsyncadd [#allocation18], %s124
      %s126 = sshll.u32 [#allocation17], 4
      %s127 = int_to_ptr.vmem [resolvable:$true] %s126
      %132 = dma.hbm_to_vmem [thread:$0]  %s9, 2048, %s127, [#allocation18], 64, 64, 4
    $region41: #{_bloomnet_head_impl.1} parent=1 // pred_fallthru
      _
    // Predicated region
    $region42: #{_bloomnet_head_impl.1} parent=1 // pred_check
      _
    $region43: #{_bloomnet_head_impl.1} parent=1 // pred_check_branch
      %134 = sbr.rel (0) target = $region45
    $region44: #{_bloomnet_head_impl.1} parent=1 // pred_region
      %s136 = ssub.s32 16, 16
      %137 = vsyncadd [#allocation18], %s136
      %s139 = sshll.u32 [#allocation19], 4
      %s140 = int_to_ptr.vmem [resolvable:$true] %s139
      %142 = dma.hbm_to_vmem [thread:$0]  %s10, 16, %s140, [#allocation18]
    $region45: #{_bloomnet_head_impl.1} parent=1 // pred_fallthru
      _
    // Predicated region
    $region46: #{_bloomnet_head_impl.1} parent=1 // pred_check
      _
    $region47: #{_bloomnet_head_impl.1} parent=1 // pred_check_branch
      %144 = sbr.rel (0) target = $region49
    $region48: #{_bloomnet_head_impl.1} parent=1 // pred_region
      %145 = dma.done [#allocation3], 192
    $region49: #{_bloomnet_head_impl.1} parent=1 // pred_fallthru
      _
    // Predicated region
    $region50: #{_bloomnet_head_impl.1} parent=1 // pred_check
      _
    $region51: #{_bloomnet_head_impl.1} parent=1 // pred_check_branch
      %147 = sbr.rel (0) target = $region53
    $region52: #{_bloomnet_head_impl.1} parent=1 // pred_region
      %148 = dma.done [#allocation6], 192
    $region53: #{_bloomnet_head_impl.1} parent=1 // pred_fallthru
      _
    // Predicated region
    $region54: #{_bloomnet_head_impl.1} parent=1 // pred_check
      _
    $region55: #{_bloomnet_head_impl.1} parent=1 // pred_check_branch
      %150 = sbr.rel (0) target = $region57
    $region56: #{_bloomnet_head_impl.1} parent=1 // pred_region
      %151 = dma.done [#allocation6], 192
    $region57: #{_bloomnet_head_impl.1} parent=1 // pred_fallthru
      _
    // Predicated region
    $region58: #{_bloomnet_head_impl.1} parent=1 // pred_check
      _
    $region59: #{_bloomnet_head_impl.1} parent=1 // pred_check_branch
      %153 = sbr.rel (0) target = $region61
    $region60: #{_bloomnet_head_impl.1} parent=1 // pred_region
      %154 = dma.done [#allocation9], 36864
    $region61: #{_bloomnet_head_impl.1} parent=1 // pred_fallthru
      _
    // Predicated region
    $region62: #{_bloomnet_head_impl.1} parent=1 // pred_check
      _
    $region63: #{_bloomnet_head_impl.1} parent=1 // pred_check_branch
      %156 = sbr.rel (0) target = $region65
    $region64: #{_bloomnet_head_impl.1} parent=1 // pred_region
      %157 = dma.done [#allocation9], 36864
    $region65: #{_bloomnet_head_impl.1} parent=1 // pred_fallthru
      _
    // Predicated region
    $region66: #{_bloomnet_head_impl.1} parent=1 // pred_check
      _
    $region67: #{_bloomnet_head_impl.1} parent=1 // pred_check_branch
      %159 = sbr.rel (0) target = $region69
    $region68: #{_bloomnet_head_impl.1} parent=1 // pred_region
      %160 = dma.done [#allocation12], 36864
    $region69: #{_bloomnet_head_impl.1} parent=1 // pred_fallthru
      _
    // Predicated region
    $region70: #{_bloomnet_head_impl.1} parent=1 // pred_check
      _
    $region71: #{_bloomnet_head_impl.1} parent=1 // pred_check_branch
      %162 = sbr.rel (0) target = $region73
    $region72: #{_bloomnet_head_impl.1} parent=1 // pred_region
      %163 = dma.done [#allocation12], 96
    $region73: #{_bloomnet_head_impl.1} parent=1 // pred_fallthru
      _
    // Predicated region
    $region74: #{_bloomnet_head_impl.1} parent=1 // pred_check
      _
    $region75: #{_bloomnet_head_impl.1} parent=1 // pred_check_branch
      %165 = sbr.rel (0) target = $region77
    $region76: #{_bloomnet_head_impl.1} parent=1 // pred_region
      %166 = dma.done [#allocation15], 12288
    $region77: #{_bloomnet_head_impl.1} parent=1 // pred_fallthru
      _
    // Predicated region
    $region78: #{_bloomnet_head_impl.1} parent=1 // pred_check
      _
    $region79: #{_bloomnet_head_impl.1} parent=1 // pred_check_branch
      %168 = sbr.rel (0) target = $region81
    $region80: #{_bloomnet_head_impl.1} parent=1 // pred_region
      %169 = dma.done [#allocation15], 32
    $region81: #{_bloomnet_head_impl.1} parent=1 // pred_fallthru
      _
    // Predicated region
    $region82: #{_bloomnet_head_impl.1} parent=1 // pred_check
      _
    $region83: #{_bloomnet_head_impl.1} parent=1 // pred_check_branch
      %171 = sbr.rel (0) target = $region85
    $region84: #{_bloomnet_head_impl.1} parent=1 // pred_region
      %172 = dma.done [#allocation18], 2048
    $region85: #{_bloomnet_head_impl.1} parent=1 // pred_fallthru
      _
    // Predicated region
    $region86: #{_bloomnet_head_impl.1} parent=1 // pred_check
      _
    $region87: #{_bloomnet_head_impl.1} parent=1 // pred_check_branch
      %174 = sbr.rel (0) target = $region89
    $region88: #{_bloomnet_head_impl.1} parent=1 // pred_region
      %175 = dma.done [#allocation18], 16
    $region89: #{_bloomnet_head_impl.1} parent=1 // pred_fallthru
      _
    %v177 = vld [vmem:[#allocation2] sm:$0xff]
    %v178 = vld [vmem:[#allocation2 + $0x8] sm:$0xf]
    %v181 = vcombine.high %v177, %v177
    %v183 = vunpack.c.l.s4 1983009808
    %v184 = vunpack.c.0.s8 %v183
    %v185 = vlaneseq
    %v186 = vshrl.u32 %v185, 7
    %v187 = vsub.s32 %v184, %v186
    %v188 = vrot.slane %v177, %v187
    %v190 = vunpack.c.l.s4 1983009808
    %v191 = vunpack.c.0.s8 %v190
    %v192 = vlaneseq
    %v193 = vshrl.u32 %v192, 7
    %v194 = vsub.s32 %v191, %v193
    %v195 = vrot.slane %v181, %v194
    %v196 = vcombine.high %v188, %v188
    %v197 = vcombine.high %v195, %v195
    %v199 = vunpack.c.l.s4 1983009808
    %v200 = vunpack.c.0.s8 %v199
    %v201 = vlaneseq
    %v202 = vshrl.u32 %v201, 7
    %v203 = vsub.s32 %v200, %v202
    %v204 = vrot.slane %v178, %v203
    %v205 = vcombine.high %v204, %v204
    %v212 = vpack.c.bf16 %v188, %v188
    %v213 = vpack.c.bf16 %v196, %v196
    %v214 = vpack.c.bf16 %v195, %v195
    %v215 = vpack.c.bf16 %v197, %v197
    %v216 = vpack.c.bf16 %v204, %v204
    %v217 = vpack.c.bf16 %v205, %v205
    %v218 = vld [vmem:[#allocation8] sm:$0xff]
    %v219 = vld [vmem:[#allocation8 + $0x8] sm:$0xff]
    %v220 = vld [vmem:[#allocation8 + $0x10] sm:$0xff]
    %v221 = vld [vmem:[#allocation8 + $0x18] sm:$0xff]
    %v222 = vld [vmem:[#allocation8 + $0x20] sm:$0xff]
    %v223 = vld [vmem:[#allocation8 + $0x28] sm:$0xff]
    %v224 = vld [vmem:[#allocation8 + $0x30] sm:$0xff]
    %v225 = vld [vmem:[#allocation8 + $0x38] sm:$0xff]
    %v226 = vld [vmem:[#allocation8 + $0x40] sm:$0xff]
    %v227 = vld [vmem:[#allocation8 + $0x48] sm:$0xff]
    %v228 = vld [vmem:[#allocation8 + $0x50] sm:$0xff]
    %v229 = vld [vmem:[#allocation8 + $0x58] sm:$0xff]
    %v230 = vld [vmem:[#allocation8 + $0x60] sm:$0xff]
    %v231 = vld [vmem:[#allocation8 + $0x68] sm:$0xff]
    %v232 = vld [vmem:[#allocation8 + $0x70] sm:$0xff]
    %v233 = vld [vmem:[#allocation8 + $0x78] sm:$0xff]
    %v234 = vld [vmem:[#allocation8 + $0x80] sm:$0xff]
    %v235 = vld [vmem:[#allocation8 + $0x88] sm:$0xff]
    %v236 = vld [vmem:[#allocation8 + $0x90] sm:$0xff]
    %v237 = vld [vmem:[#allocation8 + $0x98] sm:$0xff]
    %v238 = vld [vmem:[#allocation8 + $0xa0] sm:$0xff]
    %v239 = vld [vmem:[#allocation8 + $0xa8] sm:$0xff]
    %v240 = vld [vmem:[#allocation8 + $0xb0] sm:$0xff]
    %v241 = vld [vmem:[#allocation8 + $0xb8] sm:$0xff]
    %v242 = vld [vmem:[#allocation8 + $0xc0] sm:$0xff]
    %v243 = vld [vmem:[#allocation8 + $0xc8] sm:$0xff]
    %v244 = vld [vmem:[#allocation8 + $0xd0] sm:$0xff]
    %v245 = vld [vmem:[#allocation8 + $0xd8] sm:$0xff]
    %v246 = vld [vmem:[#allocation8 + $0xe0] sm:$0xff]
    %v247 = vld [vmem:[#allocation8 + $0xe8] sm:$0xff]
    %v248 = vld [vmem:[#allocation8 + $0xf0] sm:$0xff]
    %v249 = vld [vmem:[#allocation8 + $0xf8] sm:$0xff]
    %v250 = vld [vmem:[#allocation8 + $0x100] sm:$0xff]
    %v251 = vld [vmem:[#allocation8 + $0x108] sm:$0xff]
    %v252 = vld [vmem:[#allocation8 + $0x110] sm:$0xff]
    %v253 = vld [vmem:[#allocation8 + $0x118] sm:$0xff]
    %v254 = vld [vmem:[#allocation8 + $0x120] sm:$0xff]
    %v255 = vld [vmem:[#allocation8 + $0x128] sm:$0xff]
    %v256 = vld [vmem:[#allocation8 + $0x130] sm:$0xff]
    %v257 = vld [vmem:[#allocation8 + $0x138] sm:$0xff]
    %v258 = vld [vmem:[#allocation8 + $0x140] sm:$0xff]
    %v259 = vld [vmem:[#allocation8 + $0x148] sm:$0xff]
    %v260 = vld [vmem:[#allocation8 + $0x150] sm:$0xff]
    %v261 = vld [vmem:[#allocation8 + $0x158] sm:$0xff]
    %v262 = vld [vmem:[#allocation8 + $0x160] sm:$0xff]
    %v263 = vld [vmem:[#allocation8 + $0x168] sm:$0xff]
    %v264 = vld [vmem:[#allocation8 + $0x170] sm:$0xff]
    %v265 = vld [vmem:[#allocation8 + $0x178] sm:$0xff]
    %v266 = vld [vmem:[#allocation8 + $0x180] sm:$0xff]
    %v267 = vld [vmem:[#allocation8 + $0x188] sm:$0xff]
    %v268 = vld [vmem:[#allocation8 + $0x190] sm:$0xff]
    %v269 = vld [vmem:[#allocation8 + $0x198] sm:$0xff]
    %v270 = vld [vmem:[#allocation8 + $0x1a0] sm:$0xff]
    %v271 = vld [vmem:[#allocation8 + $0x1a8] sm:$0xff]
    %v272 = vld [vmem:[#allocation8 + $0x1b0] sm:$0xff]
    %v273 = vld [vmem:[#allocation8 + $0x1b8] sm:$0xff]
    %v274 = vld [vmem:[#allocation8 + $0x1c0] sm:$0xff]
    %v275 = vld [vmem:[#allocation8 + $0x1c8] sm:$0xff]
    %v276 = vld [vmem:[#allocation8 + $0x1d0] sm:$0xff]
    %v277 = vld [vmem:[#allocation8 + $0x1d8] sm:$0xff]
    %v278 = vld [vmem:[#allocation8 + $0x1e0] sm:$0xff]
    %v279 = vld [vmem:[#allocation8 + $0x1e8] sm:$0xff]
    %v280 = vld [vmem:[#allocation8 + $0x1f0] sm:$0xff]
    %v281 = vld [vmem:[#allocation8 + $0x1f8] sm:$0xff]
    %v282 = vld [vmem:[#allocation8 + $0x200] sm:$0xff]
    %v283 = vld [vmem:[#allocation8 + $0x208] sm:$0xff]
    %v284 = vld [vmem:[#allocation8 + $0x210] sm:$0xff]
    %v285 = vld [vmem:[#allocation8 + $0x218] sm:$0xff]
    %v286 = vld [vmem:[#allocation8 + $0x220] sm:$0xff]
    %v287 = vld [vmem:[#allocation8 + $0x228] sm:$0xff]
    %v288 = vld [vmem:[#allocation8 + $0x230] sm:$0xff]
    %v289 = vld [vmem:[#allocation8 + $0x238] sm:$0xff]
    %v290 = vld [vmem:[#allocation8 + $0x240] sm:$0xff]
    %v291 = vld [vmem:[#allocation8 + $0x248] sm:$0xff]
    %v292 = vld [vmem:[#allocation8 + $0x250] sm:$0xff]
    %v293 = vld [vmem:[#allocation8 + $0x258] sm:$0xff]
    %v294 = vld [vmem:[#allocation8 + $0x260] sm:$0xff]
    %v295 = vld [vmem:[#allocation8 + $0x268] sm:$0xff]
    %v296 = vld [vmem:[#allocation8 + $0x270] sm:$0xff]
    %v297 = vld [vmem:[#allocation8 + $0x278] sm:$0xff]
    %v298 = vld [vmem:[#allocation8 + $0x280] sm:$0xff]
    %v299 = vld [vmem:[#allocation8 + $0x288] sm:$0xff]
    %v300 = vld [vmem:[#allocation8 + $0x290] sm:$0xff]
    %v301 = vld [vmem:[#allocation8 + $0x298] sm:$0xff]
    %v302 = vld [vmem:[#allocation8 + $0x2a0] sm:$0xff]
    %v303 = vld [vmem:[#allocation8 + $0x2a8] sm:$0xff]
    %v304 = vld [vmem:[#allocation8 + $0x2b0] sm:$0xff]
    %v305 = vld [vmem:[#allocation8 + $0x2b8] sm:$0xff]
    %v306 = vld [vmem:[#allocation8 + $0x2c0] sm:$0xff]
    %v307 = vld [vmem:[#allocation8 + $0x2c8] sm:$0xff]
    %v308 = vld [vmem:[#allocation8 + $0x2d0] sm:$0xff]
    %v309 = vld [vmem:[#allocation8 + $0x2d8] sm:$0xff]
    %v310 = vld [vmem:[#allocation8 + $0x2e0] sm:$0xff]
    %v311 = vld [vmem:[#allocation8 + $0x2e8] sm:$0xff]
    %v312 = vld [vmem:[#allocation8 + $0x2f0] sm:$0xff]
    %v313 = vld [vmem:[#allocation8 + $0x2f8] sm:$0xff]
    %v314 = vld [vmem:[#allocation8 + $0x300] sm:$0xff]
    %v315 = vld [vmem:[#allocation8 + $0x308] sm:$0xff]
    %v316 = vld [vmem:[#allocation8 + $0x310] sm:$0xff]
    %v317 = vld [vmem:[#allocation8 + $0x318] sm:$0xff]
    %v318 = vld [vmem:[#allocation8 + $0x320] sm:$0xff]
    %v319 = vld [vmem:[#allocation8 + $0x328] sm:$0xff]
    %v320 = vld [vmem:[#allocation8 + $0x330] sm:$0xff]
    %v321 = vld [vmem:[#allocation8 + $0x338] sm:$0xff]
    %v322 = vld [vmem:[#allocation8 + $0x340] sm:$0xff]
    %v323 = vld [vmem:[#allocation8 + $0x348] sm:$0xff]
    %v324 = vld [vmem:[#allocation8 + $0x350] sm:$0xff]
    %v325 = vld [vmem:[#allocation8 + $0x358] sm:$0xff]
    %v326 = vld [vmem:[#allocation8 + $0x360] sm:$0xff]
    %v327 = vld [vmem:[#allocation8 + $0x368] sm:$0xff]
    %v328 = vld [vmem:[#allocation8 + $0x370] sm:$0xff]
    %v329 = vld [vmem:[#allocation8 + $0x378] sm:$0xff]
    %v330 = vld [vmem:[#allocation8 + $0x380] sm:$0xff]
    %v331 = vld [vmem:[#allocation8 + $0x388] sm:$0xff]
    %v332 = vld [vmem:[#allocation8 + $0x390] sm:$0xff]
    %v333 = vld [vmem:[#allocation8 + $0x398] sm:$0xff]
    %v334 = vld [vmem:[#allocation8 + $0x3a0] sm:$0xff]
    %v335 = vld [vmem:[#allocation8 + $0x3a8] sm:$0xff]
    %v336 = vld [vmem:[#allocation8 + $0x3b0] sm:$0xff]
    %v337 = vld [vmem:[#allocation8 + $0x3b8] sm:$0xff]
    %v338 = vld [vmem:[#allocation8 + $0x3c0] sm:$0xff]
    %v339 = vld [vmem:[#allocation8 + $0x3c8] sm:$0xff]
    %v340 = vld [vmem:[#allocation8 + $0x3d0] sm:$0xff]
    %v341 = vld [vmem:[#allocation8 + $0x3d8] sm:$0xff]
    %v342 = vld [vmem:[#allocation8 + $0x3e0] sm:$0xff]
    %v343 = vld [vmem:[#allocation8 + $0x3e8] sm:$0xff]
    %v344 = vld [vmem:[#allocation8 + $0x3f0] sm:$0xff]
    %v345 = vld [vmem:[#allocation8 + $0x3f8] sm:$0xff]
    %v346 = vld [vmem:[#allocation8 + $0x400] sm:$0xff]
    %v347 = vld [vmem:[#allocation8 + $0x408] sm:$0xff]
    %v348 = vld [vmem:[#allocation8 + $0x410] sm:$0xff]
    %v349 = vld [vmem:[#allocation8 + $0x418] sm:$0xff]
    %v350 = vld [vmem:[#allocation8 + $0x420] sm:$0xff]
    %v351 = vld [vmem:[#allocation8 + $0x428] sm:$0xff]
    %v352 = vld [vmem:[#allocation8 + $0x430] sm:$0xff]
    %v353 = vld [vmem:[#allocation8 + $0x438] sm:$0xff]
    %v354 = vld [vmem:[#allocation8 + $0x440] sm:$0xff]
    %v355 = vld [vmem:[#allocation8 + $0x448] sm:$0xff]
    %v356 = vld [vmem:[#allocation8 + $0x450] sm:$0xff]
    %v357 = vld [vmem:[#allocation8 + $0x458] sm:$0xff]
    %v358 = vld [vmem:[#allocation8 + $0x460] sm:$0xff]
    %v359 = vld [vmem:[#allocation8 + $0x468] sm:$0xff]
    %v360 = vld [vmem:[#allocation8 + $0x470] sm:$0xff]
    %v361 = vld [vmem:[#allocation8 + $0x478] sm:$0xff]
    %v362 = vld [vmem:[#allocation8 + $0x480] sm:$0xff]
    %v363 = vld [vmem:[#allocation8 + $0x488] sm:$0xff]
    %v364 = vld [vmem:[#allocation8 + $0x490] sm:$0xff]
    %v365 = vld [vmem:[#allocation8 + $0x498] sm:$0xff]
    %v366 = vld [vmem:[#allocation8 + $0x4a0] sm:$0xff]
    %v367 = vld [vmem:[#allocation8 + $0x4a8] sm:$0xff]
    %v368 = vld [vmem:[#allocation8 + $0x4b0] sm:$0xff]
    %v369 = vld [vmem:[#allocation8 + $0x4b8] sm:$0xff]
    %v370 = vld [vmem:[#allocation8 + $0x4c0] sm:$0xff]
    %v371 = vld [vmem:[#allocation8 + $0x4c8] sm:$0xff]
    %v372 = vld [vmem:[#allocation8 + $0x4d0] sm:$0xff]
    %v373 = vld [vmem:[#allocation8 + $0x4d8] sm:$0xff]
    %v374 = vld [vmem:[#allocation8 + $0x4e0] sm:$0xff]
    %v375 = vld [vmem:[#allocation8 + $0x4e8] sm:$0xff]
    %v376 = vld [vmem:[#allocation8 + $0x4f0] sm:$0xff]
    %v377 = vld [vmem:[#allocation8 + $0x4f8] sm:$0xff]
    %v378 = vld [vmem:[#allocation8 + $0x500] sm:$0xff]
    %v379 = vld [vmem:[#allocation8 + $0x508] sm:$0xff]
    %v380 = vld [vmem:[#allocation8 + $0x510] sm:$0xff]
    %v381 = vld [vmem:[#allocation8 + $0x518] sm:$0xff]
    %v382 = vld [vmem:[#allocation8 + $0x520] sm:$0xff]
    %v383 = vld [vmem:[#allocation8 + $0x528] sm:$0xff]
    %v384 = vld [vmem:[#allocation8 + $0x530] sm:$0xff]
    %v385 = vld [vmem:[#allocation8 + $0x538] sm:$0xff]
    %v386 = vld [vmem:[#allocation8 + $0x540] sm:$0xff]
    %v387 = vld [vmem:[#allocation8 + $0x548] sm:$0xff]
    %v388 = vld [vmem:[#allocation8 + $0x550] sm:$0xff]
    %v389 = vld [vmem:[#allocation8 + $0x558] sm:$0xff]
    %v390 = vld [vmem:[#allocation8 + $0x560] sm:$0xff]
    %v391 = vld [vmem:[#allocation8 + $0x568] sm:$0xff]
    %v392 = vld [vmem:[#allocation8 + $0x570] sm:$0xff]
    %v393 = vld [vmem:[#allocation8 + $0x578] sm:$0xff]
    %v394 = vld [vmem:[#allocation8 + $0x580] sm:$0xff]
    %v395 = vld [vmem:[#allocation8 + $0x588] sm:$0xff]
    %v396 = vld [vmem:[#allocation8 + $0x590] sm:$0xff]
    %v397 = vld [vmem:[#allocation8 + $0x598] sm:$0xff]
    %v398 = vld [vmem:[#allocation8 + $0x5a0] sm:$0xff]
    %v399 = vld [vmem:[#allocation8 + $0x5a8] sm:$0xff]
    %v400 = vld [vmem:[#allocation8 + $0x5b0] sm:$0xff]
    %v401 = vld [vmem:[#allocation8 + $0x5b8] sm:$0xff]
    %v402 = vld [vmem:[#allocation8 + $0x5c0] sm:$0xff]
    %v403 = vld [vmem:[#allocation8 + $0x5c8] sm:$0xff]
    %v404 = vld [vmem:[#allocation8 + $0x5d0] sm:$0xff]
    %v405 = vld [vmem:[#allocation8 + $0x5d8] sm:$0xff]
    %v406 = vld [vmem:[#allocation8 + $0x5e0] sm:$0xff]
    %v407 = vld [vmem:[#allocation8 + $0x5e8] sm:$0xff]
    %v408 = vld [vmem:[#allocation8 + $0x5f0] sm:$0xff]
    %v409 = vld [vmem:[#allocation8 + $0x5f8] sm:$0xff]
    %v410 = vld [vmem:[#allocation8 + $0x600] sm:$0xff]
    %v411 = vld [vmem:[#allocation8 + $0x608] sm:$0xff]
    %v412 = vld [vmem:[#allocation8 + $0x610] sm:$0xff]
    %v413 = vld [vmem:[#allocation8 + $0x618] sm:$0xff]
    %v414 = vld [vmem:[#allocation8 + $0x620] sm:$0xff]
    %v415 = vld [vmem:[#allocation8 + $0x628] sm:$0xff]
    %v416 = vld [vmem:[#allocation8 + $0x630] sm:$0xff]
    %v417 = vld [vmem:[#allocation8 + $0x638] sm:$0xff]
    %v418 = vld [vmem:[#allocation8 + $0x640] sm:$0xff]
    %v419 = vld [vmem:[#allocation8 + $0x648] sm:$0xff]
    %v420 = vld [vmem:[#allocation8 + $0x650] sm:$0xff]
    %v421 = vld [vmem:[#allocation8 + $0x658] sm:$0xff]
    %v422 = vld [vmem:[#allocation8 + $0x660] sm:$0xff]
    %v423 = vld [vmem:[#allocation8 + $0x668] sm:$0xff]
    %v424 = vld [vmem:[#allocation8 + $0x670] sm:$0xff]
    %v425 = vld [vmem:[#allocation8 + $0x678] sm:$0xff]
    %v426 = vld [vmem:[#allocation8 + $0x680] sm:$0xff]
    %v427 = vld [vmem:[#allocation8 + $0x688] sm:$0xff]
    %v428 = vld [vmem:[#allocation8 + $0x690] sm:$0xff]
    %v429 = vld [vmem:[#allocation8 + $0x698] sm:$0xff]
    %v430 = vld [vmem:[#allocation8 + $0x6a0] sm:$0xff]
    %v431 = vld [vmem:[#allocation8 + $0x6a8] sm:$0xff]
    %v432 = vld [vmem:[#allocation8 + $0x6b0] sm:$0xff]
    %v433 = vld [vmem:[#allocation8 + $0x6b8] sm:$0xff]
    %v434 = vld [vmem:[#allocation8 + $0x6c0] sm:$0xff]
    %v435 = vld [vmem:[#allocation8 + $0x6c8] sm:$0xff]
    %v436 = vld [vmem:[#allocation8 + $0x6d0] sm:$0xff]
    %v437 = vld [vmem:[#allocation8 + $0x6d8] sm:$0xff]
    %v438 = vld [vmem:[#allocation8 + $0x6e0] sm:$0xff]
    %v439 = vld [vmem:[#allocation8 + $0x6e8] sm:$0xff]
    %v440 = vld [vmem:[#allocation8 + $0x6f0] sm:$0xff]
    %v441 = vld [vmem:[#allocation8 + $0x6f8] sm:$0xff]
    %v442 = vld [vmem:[#allocation8 + $0x700] sm:$0xff]
    %v443 = vld [vmem:[#allocation8 + $0x708] sm:$0xff]
    %v444 = vld [vmem:[#allocation8 + $0x710] sm:$0xff]
    %v445 = vld [vmem:[#allocation8 + $0x718] sm:$0xff]
    %v446 = vld [vmem:[#allocation8 + $0x720] sm:$0xff]
    %v447 = vld [vmem:[#allocation8 + $0x728] sm:$0xff]
    %v448 = vld [vmem:[#allocation8 + $0x730] sm:$0xff]
    %v449 = vld [vmem:[#allocation8 + $0x738] sm:$0xff]
    %v450 = vld [vmem:[#allocation8 + $0x740] sm:$0xff]
    %v451 = vld [vmem:[#allocation8 + $0x748] sm:$0xff]
    %v452 = vld [vmem:[#allocation8 + $0x750] sm:$0xff]
    %v453 = vld [vmem:[#allocation8 + $0x758] sm:$0xff]
    %v454 = vld [vmem:[#allocation8 + $0x760] sm:$0xff]
    %v455 = vld [vmem:[#allocation8 + $0x768] sm:$0xff]
    %v456 = vld [vmem:[#allocation8 + $0x770] sm:$0xff]
    %v457 = vld [vmem:[#allocation8 + $0x778] sm:$0xff]
    %v458 = vld [vmem:[#allocation8 + $0x780] sm:$0xff]
    %v459 = vld [vmem:[#allocation8 + $0x788] sm:$0xff]
    %v460 = vld [vmem:[#allocation8 + $0x790] sm:$0xff]
    %v461 = vld [vmem:[#allocation8 + $0x798] sm:$0xff]
    %v462 = vld [vmem:[#allocation8 + $0x7a0] sm:$0xff]
    %v463 = vld [vmem:[#allocation8 + $0x7a8] sm:$0xff]
    %v464 = vld [vmem:[#allocation8 + $0x7b0] sm:$0xff]
    %v465 = vld [vmem:[#allocation8 + $0x7b8] sm:$0xff]
    %v466 = vld [vmem:[#allocation8 + $0x7c0] sm:$0xff]
    %v467 = vld [vmem:[#allocation8 + $0x7c8] sm:$0xff]
    %v468 = vld [vmem:[#allocation8 + $0x7d0] sm:$0xff]
    %v469 = vld [vmem:[#allocation8 + $0x7d8] sm:$0xff]
    %v470 = vld [vmem:[#allocation8 + $0x7e0] sm:$0xff]
    %v471 = vld [vmem:[#allocation8 + $0x7e8] sm:$0xff]
    %v472 = vld [vmem:[#allocation8 + $0x7f0] sm:$0xff]
    %v473 = vld [vmem:[#allocation8 + $0x7f8] sm:$0xff]
    %v474 = vld [vmem:[#allocation8 + $0x800] sm:$0xff]
    %v475 = vld [vmem:[#allocation8 + $0x808] sm:$0xff]
    %v476 = vld [vmem:[#allocation8 + $0x810] sm:$0xff]
    %v477 = vld [vmem:[#allocation8 + $0x818] sm:$0xff]
    %v478 = vld [vmem:[#allocation8 + $0x820] sm:$0xff]
    %v479 = vld [vmem:[#allocation8 + $0x828] sm:$0xff]
    %v480 = vld [vmem:[#allocation8 + $0x830] sm:$0xff]
    %v481 = vld [vmem:[#allocation8 + $0x838] sm:$0xff]
    %v482 = vld [vmem:[#allocation8 + $0x840] sm:$0xff]
    %v483 = vld [vmem:[#allocation8 + $0x848] sm:$0xff]
    %v484 = vld [vmem:[#allocation8 + $0x850] sm:$0xff]
    %v485 = vld [vmem:[#allocation8 + $0x858] sm:$0xff]
    %v486 = vld [vmem:[#allocation8 + $0x860] sm:$0xff]
    %v487 = vld [vmem:[#allocation8 + $0x868] sm:$0xff]
    %v488 = vld [vmem:[#allocation8 + $0x870] sm:$0xff]
    %v489 = vld [vmem:[#allocation8 + $0x878] sm:$0xff]
    %v490 = vld [vmem:[#allocation8 + $0x880] sm:$0xff]
    %v491 = vld [vmem:[#allocation8 + $0x888] sm:$0xff]
    %v492 = vld [vmem:[#allocation8 + $0x890] sm:$0xff]
    %v493 = vld [vmem:[#allocation8 + $0x898] sm:$0xff]
    %v494 = vld [vmem:[#allocation8 + $0x8a0] sm:$0xff]
    %v495 = vld [vmem:[#allocation8 + $0x8a8] sm:$0xff]
    %v496 = vld [vmem:[#allocation8 + $0x8b0] sm:$0xff]
    %v497 = vld [vmem:[#allocation8 + $0x8b8] sm:$0xff]
    %v498 = vld [vmem:[#allocation8 + $0x8c0] sm:$0xff]
    %v499 = vld [vmem:[#allocation8 + $0x8c8] sm:$0xff]
    %v500 = vld [vmem:[#allocation8 + $0x8d0] sm:$0xff]
    %v501 = vld [vmem:[#allocation8 + $0x8d8] sm:$0xff]
    %v502 = vld [vmem:[#allocation8 + $0x8e0] sm:$0xff]
    %v503 = vld [vmem:[#allocation8 + $0x8e8] sm:$0xff]
    %v504 = vld [vmem:[#allocation8 + $0x8f0] sm:$0xff]
    %v505 = vld [vmem:[#allocation8 + $0x8f8] sm:$0xff]
    %v506 = vld [vmem:[#allocation5] sm:$0xff]
    %v507 = vld [vmem:[#allocation5 + $0x8] sm:$0xf]
    %v510 = vcombine.high %v506, %v506
    %v512 = vunpack.c.l.s4 1983009808
    %v513 = vunpack.c.0.s8 %v512
    %v514 = vlaneseq
    %v515 = vshrl.u32 %v514, 7
    %v516 = vsub.s32 %v513, %v515
    %v517 = vrot.slane %v506, %v516
    %v519 = vunpack.c.l.s4 1983009808
    %v520 = vunpack.c.0.s8 %v519
    %v521 = vlaneseq
    %v522 = vshrl.u32 %v521, 7
    %v523 = vsub.s32 %v520, %v522
    %v524 = vrot.slane %v510, %v523
    %v525 = vcombine.high %v517, %v517
    %v526 = vcombine.high %v524, %v524
    %v528 = vunpack.c.l.s4 1983009808
    %v529 = vunpack.c.0.s8 %v528
    %v530 = vlaneseq
    %v531 = vshrl.u32 %v530, 7
    %v532 = vsub.s32 %v529, %v531
    %v533 = vrot.slane %v507, %v532
    %v534 = vcombine.high %v533, %v533
    %v541 = vpack.c.bf16 %v517, %v517
    %v542 = vpack.c.bf16 %v525, %v525
    %v543 = vpack.c.bf16 %v524, %v524
    %v544 = vpack.c.bf16 %v526, %v526
    %v545 = vpack.c.bf16 %v533, %v533
    %v546 = vpack.c.bf16 %v534, %v534
    %v547 = vld [vmem:[#allocation10] sm:$0xff]
    %v548 = vld [vmem:[#allocation10 + $0x8] sm:$0xff]
    %v549 = vld [vmem:[#allocation10 + $0x10] sm:$0xff]
    %v550 = vld [vmem:[#allocation10 + $0x18] sm:$0xff]
    %v551 = vld [vmem:[#allocation10 + $0x20] sm:$0xff]
    %v552 = vld [vmem:[#allocation10 + $0x28] sm:$0xff]
    %v553 = vld [vmem:[#allocation10 + $0x30] sm:$0xff]
    %v554 = vld [vmem:[#allocation10 + $0x38] sm:$0xff]
    %v555 = vld [vmem:[#allocation10 + $0x40] sm:$0xff]
    %v556 = vld [vmem:[#allocation10 + $0x48] sm:$0xff]
    %v557 = vld [vmem:[#allocation10 + $0x50] sm:$0xff]
    %v558 = vld [vmem:[#allocation10 + $0x58] sm:$0xff]
    %v559 = vld [vmem:[#allocation10 + $0x60] sm:$0xff]
    %v560 = vld [vmem:[#allocation10 + $0x68] sm:$0xff]
    %v561 = vld [vmem:[#allocation10 + $0x70] sm:$0xff]
    %v562 = vld [vmem:[#allocation10 + $0x78] sm:$0xff]
    %v563 = vld [vmem:[#allocation10 + $0x80] sm:$0xff]
    %v564 = vld [vmem:[#allocation10 + $0x88] sm:$0xff]
    %v565 = vld [vmem:[#allocation10 + $0x90] sm:$0xff]
    %v566 = vld [vmem:[#allocation10 + $0x98] sm:$0xff]
    %v567 = vld [vmem:[#allocation10 + $0xa0] sm:$0xff]
    %v568 = vld [vmem:[#allocation10 + $0xa8] sm:$0xff]
    %v569 = vld [vmem:[#allocation10 + $0xb0] sm:$0xff]
    %v570 = vld [vmem:[#allocation10 + $0xb8] sm:$0xff]
    %v571 = vld [vmem:[#allocation10 + $0xc0] sm:$0xff]
    %v572 = vld [vmem:[#allocation10 + $0xc8] sm:$0xff]
    %v573 = vld [vmem:[#allocation10 + $0xd0] sm:$0xff]
    %v574 = vld [vmem:[#allocation10 + $0xd8] sm:$0xff]
    %v575 = vld [vmem:[#allocation10 + $0xe0] sm:$0xff]
    %v576 = vld [vmem:[#allocation10 + $0xe8] sm:$0xff]
    %v577 = vld [vmem:[#allocation10 + $0xf0] sm:$0xff]
    %v578 = vld [vmem:[#allocation10 + $0xf8] sm:$0xff]
    %v579 = vld [vmem:[#allocation10 + $0x100] sm:$0xff]
    %v580 = vld [vmem:[#allocation10 + $0x108] sm:$0xff]
    %v581 = vld [vmem:[#allocation10 + $0x110] sm:$0xff]
    %v582 = vld [vmem:[#allocation10 + $0x118] sm:$0xff]
    %v583 = vld [vmem:[#allocation10 + $0x120] sm:$0xff]
    %v584 = vld [vmem:[#allocation10 + $0x128] sm:$0xff]
    %v585 = vld [vmem:[#allocation10 + $0x130] sm:$0xff]
    %v586 = vld [vmem:[#allocation10 + $0x138] sm:$0xff]
    %v587 = vld [vmem:[#allocation10 + $0x140] sm:$0xff]
    %v588 = vld [vmem:[#allocation10 + $0x148] sm:$0xff]
    %v589 = vld [vmem:[#allocation10 + $0x150] sm:$0xff]
    %v590 = vld [vmem:[#allocation10 + $0x158] sm:$0xff]
    %v591 = vld [vmem:[#allocation10 + $0x160] sm:$0xff]
    %v592 = vld [vmem:[#allocation10 + $0x168] sm:$0xff]
    %v593 = vld [vmem:[#allocation10 + $0x170] sm:$0xff]
    %v594 = vld [vmem:[#allocation10 + $0x178] sm:$0xff]
    %v595 = vld [vmem:[#allocation10 + $0x180] sm:$0xff]
    %v596 = vld [vmem:[#allocation10 + $0x188] sm:$0xff]
    %v597 = vld [vmem:[#allocation10 + $0x190] sm:$0xff]
    %v598 = vld [vmem:[#allocation10 + $0x198] sm:$0xff]
    %v599 = vld [vmem:[#allocation10 + $0x1a0] sm:$0xff]
    %v600 = vld [vmem:[#allocation10 + $0x1a8] sm:$0xff]
    %v601 = vld [vmem:[#allocation10 + $0x1b0] sm:$0xff]
    %v602 = vld [vmem:[#allocation10 + $0x1b8] sm:$0xff]
    %v603 = vld [vmem:[#allocation10 + $0x1c0] sm:$0xff]
    %v604 = vld [vmem:[#allocation10 + $0x1c8] sm:$0xff]
    %v605 = vld [vmem:[#allocation10 + $0x1d0] sm:$0xff]
    %v606 = vld [vmem:[#allocation10 + $0x1d8] sm:$0xff]
    %v607 = vld [vmem:[#allocation10 + $0x1e0] sm:$0xff]
    %v608 = vld [vmem:[#allocation10 + $0x1e8] sm:$0xff]
    %v609 = vld [vmem:[#allocation10 + $0x1f0] sm:$0xff]
    %v610 = vld [vmem:[#allocation10 + $0x1f8] sm:$0xff]
    %v611 = vld [vmem:[#allocation10 + $0x200] sm:$0xff]
    %v612 = vld [vmem:[#allocation10 + $0x208] sm:$0xff]
    %v613 = vld [vmem:[#allocation10 + $0x210] sm:$0xff]
    %v614 = vld [vmem:[#allocation10 + $0x218] sm:$0xff]
    %v615 = vld [vmem:[#allocation10 + $0x220] sm:$0xff]
    %v616 = vld [vmem:[#allocation10 + $0x228] sm:$0xff]
    %v617 = vld [vmem:[#allocation10 + $0x230] sm:$0xff]
    %v618 = vld [vmem:[#allocation10 + $0x238] sm:$0xff]
    %v619 = vld [vmem:[#allocation10 + $0x240] sm:$0xff]
    %v620 = vld [vmem:[#allocation10 + $0x248] sm:$0xff]
    %v621 = vld [vmem:[#allocation10 + $0x250] sm:$0xff]
    %v622 = vld [vmem:[#allocation10 + $0x258] sm:$0xff]
    %v623 = vld [vmem:[#allocation10 + $0x260] sm:$0xff]
    %v624 = vld [vmem:[#allocation10 + $0x268] sm:$0xff]
    %v625 = vld [vmem:[#allocation10 + $0x270] sm:$0xff]
    %v626 = vld [vmem:[#allocation10 + $0x278] sm:$0xff]
    %v627 = vld [vmem:[#allocation10 + $0x280] sm:$0xff]
    %v628 = vld [vmem:[#allocation10 + $0x288] sm:$0xff]
    %v629 = vld [vmem:[#allocation10 + $0x290] sm:$0xff]
    %v630 = vld [vmem:[#allocation10 + $0x298] sm:$0xff]
    %v631 = vld [vmem:[#allocation10 + $0x2a0] sm:$0xff]
    %v632 = vld [vmem:[#allocation10 + $0x2a8] sm:$0xff]
    %v633 = vld [vmem:[#allocation10 + $0x2b0] sm:$0xff]
    %v634 = vld [vmem:[#allocation10 + $0x2b8] sm:$0xff]
    %v635 = vld [vmem:[#allocation10 + $0x2c0] sm:$0xff]
    %v636 = vld [vmem:[#allocation10 + $0x2c8] sm:$0xff]
    %v637 = vld [vmem:[#allocation10 + $0x2d0] sm:$0xff]
    %v638 = vld [vmem:[#allocation10 + $0x2d8] sm:$0xff]
    %v639 = vld [vmem:[#allocation10 + $0x2e0] sm:$0xff]
    %v640 = vld [vmem:[#allocation10 + $0x2e8] sm:$0xff]
    %v641 = vld [vmem:[#allocation10 + $0x2f0] sm:$0xff]
    %v642 = vld [vmem:[#allocation10 + $0x2f8] sm:$0xff]
    %v643 = vld [vmem:[#allocation10 + $0x300] sm:$0xff]
    %v644 = vld [vmem:[#allocation10 + $0x308] sm:$0xff]
    %v645 = vld [vmem:[#allocation10 + $0x310] sm:$0xff]
    %v646 = vld [vmem:[#allocation10 + $0x318] sm:$0xff]
    %v647 = vld [vmem:[#allocation10 + $0x320] sm:$0xff]
    %v648 = vld [vmem:[#allocation10 + $0x328] sm:$0xff]
    %v649 = vld [vmem:[#allocation10 + $0x330] sm:$0xff]
    %v650 = vld [vmem:[#allocation10 + $0x338] sm:$0xff]
    %v651 = vld [vmem:[#allocation10 + $0x340] sm:$0xff]
    %v652 = vld [vmem:[#allocation10 + $0x348] sm:$0xff]
    %v653 = vld [vmem:[#allocation10 + $0x350] sm:$0xff]
    %v654 = vld [vmem:[#allocation10 + $0x358] sm:$0xff]
    %v655 = vld [vmem:[#allocation10 + $0x360] sm:$0xff]
    %v656 = vld [vmem:[#allocation10 + $0x368] sm:$0xff]
    %v657 = vld [vmem:[#allocation10 + $0x370] sm:$0xff]
    %v658 = vld [vmem:[#allocation10 + $0x378] sm:$0xff]
    %v659 = vld [vmem:[#allocation10 + $0x380] sm:$0xff]
    %v660 = vld [vmem:[#allocation10 + $0x388] sm:$0xff]
    %v661 = vld [vmem:[#allocation10 + $0x390] sm:$0xff]
    %v662 = vld [vmem:[#allocation10 + $0x398] sm:$0xff]
    %v663 = vld [vmem:[#allocation10 + $0x3a0] sm:$0xff]
    %v664 = vld [vmem:[#allocation10 + $0x3a8] sm:$0xff]
    %v665 = vld [vmem:[#allocation10 + $0x3b0] sm:$0xff]
    %v666 = vld [vmem:[#allocation10 + $0x3b8] sm:$0xff]
    %v667 = vld [vmem:[#allocation10 + $0x3c0] sm:$0xff]
    %v668 = vld [vmem:[#allocation10 + $0x3c8] sm:$0xff]
    %v669 = vld [vmem:[#allocation10 + $0x3d0] sm:$0xff]
    %v670 = vld [vmem:[#allocation10 + $0x3d8] sm:$0xff]
    %v671 = vld [vmem:[#allocation10 + $0x3e0] sm:$0xff]
    %v672 = vld [vmem:[#allocation10 + $0x3e8] sm:$0xff]
    %v673 = vld [vmem:[#allocation10 + $0x3f0] sm:$0xff]
    %v674 = vld [vmem:[#allocation10 + $0x3f8] sm:$0xff]
    %v675 = vld [vmem:[#allocation10 + $0x400] sm:$0xff]
    %v676 = vld [vmem:[#allocation10 + $0x408] sm:$0xff]
    %v677 = vld [vmem:[#allocation10 + $0x410] sm:$0xff]
    %v678 = vld [vmem:[#allocation10 + $0x418] sm:$0xff]
    %v679 = vld [vmem:[#allocation10 + $0x420] sm:$0xff]
    %v680 = vld [vmem:[#allocation10 + $0x428] sm:$0xff]
    %v681 = vld [vmem:[#allocation10 + $0x430] sm:$0xff]
    %v682 = vld [vmem:[#allocation10 + $0x438] sm:$0xff]
    %v683 = vld [vmem:[#allocation10 + $0x440] sm:$0xff]
    %v684 = vld [vmem:[#allocation10 + $0x448] sm:$0xff]
    %v685 = vld [vmem:[#allocation10 + $0x450] sm:$0xff]
    %v686 = vld [vmem:[#allocation10 + $0x458] sm:$0xff]
    %v687 = vld [vmem:[#allocation10 + $0x460] sm:$0xff]
    %v688 = vld [vmem:[#allocation10 + $0x468] sm:$0xff]
    %v689 = vld [vmem:[#allocation10 + $0x470] sm:$0xff]
    %v690 = vld [vmem:[#allocation10 + $0x478] sm:$0xff]
    %v691 = vld [vmem:[#allocation10 + $0x480] sm:$0xff]
    %v692 = vld [vmem:[#allocation10 + $0x488] sm:$0xff]
    %v693 = vld [vmem:[#allocation10 + $0x490] sm:$0xff]
    %v694 = vld [vmem:[#allocation10 + $0x498] sm:$0xff]
    %v695 = vld [vmem:[#allocation10 + $0x4a0] sm:$0xff]
    %v696 = vld [vmem:[#allocation10 + $0x4a8] sm:$0xff]
    %v697 = vld [vmem:[#allocation10 + $0x4b0] sm:$0xff]
    %v698 = vld [vmem:[#allocation10 + $0x4b8] sm:$0xff]
    %v699 = vld [vmem:[#allocation10 + $0x4c0] sm:$0xff]
    %v700 = vld [vmem:[#allocation10 + $0x4c8] sm:$0xff]
    %v701 = vld [vmem:[#allocation10 + $0x4d0] sm:$0xff]
    %v702 = vld [vmem:[#allocation10 + $0x4d8] sm:$0xff]
    %v703 = vld [vmem:[#allocation10 + $0x4e0] sm:$0xff]
    %v704 = vld [vmem:[#allocation10 + $0x4e8] sm:$0xff]
    %v705 = vld [vmem:[#allocation10 + $0x4f0] sm:$0xff]
    %v706 = vld [vmem:[#allocation10 + $0x4f8] sm:$0xff]
    %v707 = vld [vmem:[#allocation10 + $0x500] sm:$0xff]
    %v708 = vld [vmem:[#allocation10 + $0x508] sm:$0xff]
    %v709 = vld [vmem:[#allocation10 + $0x510] sm:$0xff]
    %v710 = vld [vmem:[#allocation10 + $0x518] sm:$0xff]
    %v711 = vld [vmem:[#allocation10 + $0x520] sm:$0xff]
    %v712 = vld [vmem:[#allocation10 + $0x528] sm:$0xff]
    %v713 = vld [vmem:[#allocation10 + $0x530] sm:$0xff]
    %v714 = vld [vmem:[#allocation10 + $0x538] sm:$0xff]
    %v715 = vld [vmem:[#allocation10 + $0x540] sm:$0xff]
    %v716 = vld [vmem:[#allocation10 + $0x548] sm:$0xff]
    %v717 = vld [vmem:[#allocation10 + $0x550] sm:$0xff]
    %v718 = vld [vmem:[#allocation10 + $0x558] sm:$0xff]
    %v719 = vld [vmem:[#allocation10 + $0x560] sm:$0xff]
    %v720 = vld [vmem:[#allocation10 + $0x568] sm:$0xff]
    %v721 = vld [vmem:[#allocation10 + $0x570] sm:$0xff]
    %v722 = vld [vmem:[#allocation10 + $0x578] sm:$0xff]
    %v723 = vld [vmem:[#allocation10 + $0x580] sm:$0xff]
    %v724 = vld [vmem:[#allocation10 + $0x588] sm:$0xff]
    %v725 = vld [vmem:[#allocation10 + $0x590] sm:$0xff]
    %v726 = vld [vmem:[#allocation10 + $0x598] sm:$0xff]
    %v727 = vld [vmem:[#allocation10 + $0x5a0] sm:$0xff]
    %v728 = vld [vmem:[#allocation10 + $0x5a8] sm:$0xff]
    %v729 = vld [vmem:[#allocation10 + $0x5b0] sm:$0xff]
    %v730 = vld [vmem:[#allocation10 + $0x5b8] sm:$0xff]
    %v731 = vld [vmem:[#allocation10 + $0x5c0] sm:$0xff]
    %v732 = vld [vmem:[#allocation10 + $0x5c8] sm:$0xff]
    %v733 = vld [vmem:[#allocation10 + $0x5d0] sm:$0xff]
    %v734 = vld [vmem:[#allocation10 + $0x5d8] sm:$0xff]
    %v735 = vld [vmem:[#allocation10 + $0x5e0] sm:$0xff]
    %v736 = vld [vmem:[#allocation10 + $0x5e8] sm:$0xff]
    %v737 = vld [vmem:[#allocation10 + $0x5f0] sm:$0xff]
    %v738 = vld [vmem:[#allocation10 + $0x5f8] sm:$0xff]
    %v739 = vld [vmem:[#allocation10 + $0x600] sm:$0xff]
    %v740 = vld [vmem:[#allocation10 + $0x608] sm:$0xff]
    %v741 = vld [vmem:[#allocation10 + $0x610] sm:$0xff]
    %v742 = vld [vmem:[#allocation10 + $0x618] sm:$0xff]
    %v743 = vld [vmem:[#allocation10 + $0x620] sm:$0xff]
    %v744 = vld [vmem:[#allocation10 + $0x628] sm:$0xff]
    %v745 = vld [vmem:[#allocation10 + $0x630] sm:$0xff]
    %v746 = vld [vmem:[#allocation10 + $0x638] sm:$0xff]
    %v747 = vld [vmem:[#allocation10 + $0x640] sm:$0xff]
    %v748 = vld [vmem:[#allocation10 + $0x648] sm:$0xff]
    %v749 = vld [vmem:[#allocation10 + $0x650] sm:$0xff]
    %v750 = vld [vmem:[#allocation10 + $0x658] sm:$0xff]
    %v751 = vld [vmem:[#allocation10 + $0x660] sm:$0xff]
    %v752 = vld [vmem:[#allocation10 + $0x668] sm:$0xff]
    %v753 = vld [vmem:[#allocation10 + $0x670] sm:$0xff]
    %v754 = vld [vmem:[#allocation10 + $0x678] sm:$0xff]
    %v755 = vld [vmem:[#allocation10 + $0x680] sm:$0xff]
    %v756 = vld [vmem:[#allocation10 + $0x688] sm:$0xff]
    %v757 = vld [vmem:[#allocation10 + $0x690] sm:$0xff]
    %v758 = vld [vmem:[#allocation10 + $0x698] sm:$0xff]
    %v759 = vld [vmem:[#allocation10 + $0x6a0] sm:$0xff]
    %v760 = vld [vmem:[#allocation10 + $0x6a8] sm:$0xff]
    %v761 = vld [vmem:[#allocation10 + $0x6b0] sm:$0xff]
    %v762 = vld [vmem:[#allocation10 + $0x6b8] sm:$0xff]
    %v763 = vld [vmem:[#allocation10 + $0x6c0] sm:$0xff]
    %v764 = vld [vmem:[#allocation10 + $0x6c8] sm:$0xff]
    %v765 = vld [vmem:[#allocation10 + $0x6d0] sm:$0xff]
    %v766 = vld [vmem:[#allocation10 + $0x6d8] sm:$0xff]
    %v767 = vld [vmem:[#allocation10 + $0x6e0] sm:$0xff]
    %v768 = vld [vmem:[#allocation10 + $0x6e8] sm:$0xff]
    %v769 = vld [vmem:[#allocation10 + $0x6f0] sm:$0xff]
    %v770 = vld [vmem:[#allocation10 + $0x6f8] sm:$0xff]
    %v771 = vld [vmem:[#allocation10 + $0x700] sm:$0xff]
    %v772 = vld [vmem:[#allocation10 + $0x708] sm:$0xff]
    %v773 = vld [vmem:[#allocation10 + $0x710] sm:$0xff]
    %v774 = vld [vmem:[#allocation10 + $0x718] sm:$0xff]
    %v775 = vld [vmem:[#allocation10 + $0x720] sm:$0xff]
    %v776 = vld [vmem:[#allocation10 + $0x728] sm:$0xff]
    %v777 = vld [vmem:[#allocation10 + $0x730] sm:$0xff]
    %v778 = vld [vmem:[#allocation10 + $0x738] sm:$0xff]
    %v779 = vld [vmem:[#allocation10 + $0x740] sm:$0xff]
    %v780 = vld [vmem:[#allocation10 + $0x748] sm:$0xff]
    %v781 = vld [vmem:[#allocation10 + $0x750] sm:$0xff]
    %v782 = vld [vmem:[#allocation10 + $0x758] sm:$0xff]
    %v783 = vld [vmem:[#allocation10 + $0x760] sm:$0xff]
    %v784 = vld [vmem:[#allocation10 + $0x768] sm:$0xff]
    %v785 = vld [vmem:[#allocation10 + $0x770] sm:$0xff]
    %v786 = vld [vmem:[#allocation10 + $0x778] sm:$0xff]
    %v787 = vld [vmem:[#allocation10 + $0x780] sm:$0xff]
    %v788 = vld [vmem:[#allocation10 + $0x788] sm:$0xff]
    %v789 = vld [vmem:[#allocation10 + $0x790] sm:$0xff]
    %v790 = vld [vmem:[#allocation10 + $0x798] sm:$0xff]
    %v791 = vld [vmem:[#allocation10 + $0x7a0] sm:$0xff]
    %v792 = vld [vmem:[#allocation10 + $0x7a8] sm:$0xff]
    %v793 = vld [vmem:[#allocation10 + $0x7b0] sm:$0xff]
    %v794 = vld [vmem:[#allocation10 + $0x7b8] sm:$0xff]
    %v795 = vld [vmem:[#allocation10 + $0x7c0] sm:$0xff]
    %v796 = vld [vmem:[#allocation10 + $0x7c8] sm:$0xff]
    %v797 = vld [vmem:[#allocation10 + $0x7d0] sm:$0xff]
    %v798 = vld [vmem:[#allocation10 + $0x7d8] sm:$0xff]
    %v799 = vld [vmem:[#allocation10 + $0x7e0] sm:$0xff]
    %v800 = vld [vmem:[#allocation10 + $0x7e8] sm:$0xff]
    %v801 = vld [vmem:[#allocation10 + $0x7f0] sm:$0xff]
    %v802 = vld [vmem:[#allocation10 + $0x7f8] sm:$0xff]
    %v803 = vld [vmem:[#allocation10 + $0x800] sm:$0xff]
    %v804 = vld [vmem:[#allocation10 + $0x808] sm:$0xff]
    %v805 = vld [vmem:[#allocation10 + $0x810] sm:$0xff]
    %v806 = vld [vmem:[#allocation10 + $0x818] sm:$0xff]
    %v807 = vld [vmem:[#allocation10 + $0x820] sm:$0xff]
    %v808 = vld [vmem:[#allocation10 + $0x828] sm:$0xff]
    %v809 = vld [vmem:[#allocation10 + $0x830] sm:$0xff]
    %v810 = vld [vmem:[#allocation10 + $0x838] sm:$0xff]
    %v811 = vld [vmem:[#allocation10 + $0x840] sm:$0xff]
    %v812 = vld [vmem:[#allocation10 + $0x848] sm:$0xff]
    %v813 = vld [vmem:[#allocation10 + $0x850] sm:$0xff]
    %v814 = vld [vmem:[#allocation10 + $0x858] sm:$0xff]
    %v815 = vld [vmem:[#allocation10 + $0x860] sm:$0xff]
    %v816 = vld [vmem:[#allocation10 + $0x868] sm:$0xff]
    %v817 = vld [vmem:[#allocation10 + $0x870] sm:$0xff]
    %v818 = vld [vmem:[#allocation10 + $0x878] sm:$0xff]
    %v819 = vld [vmem:[#allocation10 + $0x880] sm:$0xff]
    %v820 = vld [vmem:[#allocation10 + $0x888] sm:$0xff]
    %v821 = vld [vmem:[#allocation10 + $0x890] sm:$0xff]
    %v822 = vld [vmem:[#allocation10 + $0x898] sm:$0xff]
    %v823 = vld [vmem:[#allocation10 + $0x8a0] sm:$0xff]
    %v824 = vld [vmem:[#allocation10 + $0x8a8] sm:$0xff]
    %v825 = vld [vmem:[#allocation10 + $0x8b0] sm:$0xff]
    %v826 = vld [vmem:[#allocation10 + $0x8b8] sm:$0xff]
    %v827 = vld [vmem:[#allocation10 + $0x8c0] sm:$0xff]
    %v828 = vld [vmem:[#allocation10 + $0x8c8] sm:$0xff]
    %v829 = vld [vmem:[#allocation10 + $0x8d0] sm:$0xff]
    %v830 = vld [vmem:[#allocation10 + $0x8d8] sm:$0xff]
    %v831 = vld [vmem:[#allocation10 + $0x8e0] sm:$0xff]
    %v832 = vld [vmem:[#allocation10 + $0x8e8] sm:$0xff]
    %v833 = vld [vmem:[#allocation10 + $0x8f0] sm:$0xff]
    %v834 = vld [vmem:[#allocation10 + $0x8f8] sm:$0xff]
    %v1123 = vunpack.c.l.b16 %v547
    %v1124 = vunpack.c.h.b16 %v547
    %v1125 = vunpack.c.l.b16 %v548
    %v1126 = vunpack.c.h.b16 %v548
    %v1127 = vunpack.c.l.b16 %v549
    %v1128 = vunpack.c.h.b16 %v549
    %v1129 = vunpack.c.l.b16 %v550
    %v1130 = vunpack.c.h.b16 %v550
    %v1131 = vunpack.c.l.b16 %v551
    %v1132 = vunpack.c.h.b16 %v551
    %v1133 = vunpack.c.l.b16 %v552
    %v1134 = vunpack.c.h.b16 %v552
    %v1135 = vunpack.c.l.b16 %v553
    %v1136 = vunpack.c.h.b16 %v553
    %v1137 = vunpack.c.l.b16 %v554
    %v1138 = vunpack.c.h.b16 %v554
    %v1139 = vunpack.c.l.b16 %v555
    %v1140 = vunpack.c.h.b16 %v555
    %v1141 = vunpack.c.l.b16 %v556
    %v1142 = vunpack.c.h.b16 %v556
    %v1143 = vunpack.c.l.b16 %v557
    %v1144 = vunpack.c.h.b16 %v557
    %v1145 = vunpack.c.l.b16 %v558
    %v1146 = vunpack.c.h.b16 %v558
    %v1147 = vunpack.c.l.b16 %v559
    %v1148 = vunpack.c.h.b16 %v559
    %v1149 = vunpack.c.l.b16 %v560
    %v1150 = vunpack.c.h.b16 %v560
    %v1151 = vunpack.c.l.b16 %v561
    %v1152 = vunpack.c.h.b16 %v561
    %v1153 = vunpack.c.l.b16 %v562
    %v1154 = vunpack.c.h.b16 %v562
    %v1155 = vunpack.c.l.b16 %v563
    %v1156 = vunpack.c.h.b16 %v563
    %v1157 = vunpack.c.l.b16 %v564
    %v1158 = vunpack.c.h.b16 %v564
    %v1159 = vunpack.c.l.b16 %v565
    %v1160 = vunpack.c.h.b16 %v565
    %v1161 = vunpack.c.l.b16 %v566
    %v1162 = vunpack.c.h.b16 %v566
    %v1163 = vunpack.c.l.b16 %v567
    %v1164 = vunpack.c.h.b16 %v567
    %v1165 = vunpack.c.l.b16 %v568
    %v1166 = vunpack.c.h.b16 %v568
    %v1167 = vunpack.c.l.b16 %v569
    %v1168 = vunpack.c.h.b16 %v569
    %v1169 = vunpack.c.l.b16 %v570
    %v1170 = vunpack.c.h.b16 %v570
    %v1171 = vunpack.c.l.b16 %v571
    %v1172 = vunpack.c.h.b16 %v571
    %v1173 = vunpack.c.l.b16 %v572
    %v1174 = vunpack.c.h.b16 %v572
    %v1175 = vunpack.c.l.b16 %v573
    %v1176 = vunpack.c.h.b16 %v573
    %v1177 = vunpack.c.l.b16 %v574
    %v1178 = vunpack.c.h.b16 %v574
    %v1179 = vunpack.c.l.b16 %v575
    %v1180 = vunpack.c.h.b16 %v575
    %v1181 = vunpack.c.l.b16 %v576
    %v1182 = vunpack.c.h.b16 %v576
    %v1183 = vunpack.c.l.b16 %v577
    %v1184 = vunpack.c.h.b16 %v577
    %v1185 = vunpack.c.l.b16 %v578
    %v1186 = vunpack.c.h.b16 %v578
    %v1187 = vunpack.c.l.b16 %v579
    %v1188 = vunpack.c.h.b16 %v579
    %v1189 = vunpack.c.l.b16 %v580
    %v1190 = vunpack.c.h.b16 %v580
    %v1191 = vunpack.c.l.b16 %v581
    %v1192 = vunpack.c.h.b16 %v581
    %v1193 = vunpack.c.l.b16 %v582
    %v1194 = vunpack.c.h.b16 %v582
    %v1195 = vunpack.c.l.b16 %v583
    %v1196 = vunpack.c.h.b16 %v583
    %v1197 = vunpack.c.l.b16 %v584
    %v1198 = vunpack.c.h.b16 %v584
    %v1199 = vunpack.c.l.b16 %v585
    %v1200 = vunpack.c.h.b16 %v585
    %v1201 = vunpack.c.l.b16 %v586
    %v1202 = vunpack.c.h.b16 %v586
    %v1203 = vunpack.c.l.b16 %v587
    %v1204 = vunpack.c.h.b16 %v587
    %v1205 = vunpack.c.l.b16 %v588
    %v1206 = vunpack.c.h.b16 %v588
    %v1207 = vunpack.c.l.b16 %v589
    %v1208 = vunpack.c.h.b16 %v589
    %v1209 = vunpack.c.l.b16 %v590
    %v1210 = vunpack.c.h.b16 %v590
    %v1211 = vunpack.c.l.b16 %v591
    %v1212 = vunpack.c.h.b16 %v591
    %v1213 = vunpack.c.l.b16 %v592
    %v1214 = vunpack.c.h.b16 %v592
    %v1215 = vunpack.c.l.b16 %v593
    %v1216 = vunpack.c.h.b16 %v593
    %v1217 = vunpack.c.l.b16 %v594
    %v1218 = vunpack.c.h.b16 %v594
    %v1219 = vunpack.c.l.b16 %v595
    %v1220 = vunpack.c.h.b16 %v595
    %v1221 = vunpack.c.l.b16 %v596
    %v1222 = vunpack.c.h.b16 %v596
    %v1223 = vunpack.c.l.b16 %v597
    %v1224 = vunpack.c.h.b16 %v597
    %v1225 = vunpack.c.l.b16 %v598
    %v1226 = vunpack.c.h.b16 %v598
    %v1227 = vunpack.c.l.b16 %v599
    %v1228 = vunpack.c.h.b16 %v599
    %v1229 = vunpack.c.l.b16 %v600
    %v1230 = vunpack.c.h.b16 %v600
    %v1231 = vunpack.c.l.b16 %v601
    %v1232 = vunpack.c.h.b16 %v601
    %v1233 = vunpack.c.l.b16 %v602
    %v1234 = vunpack.c.h.b16 %v602
    %v1235 = vunpack.c.l.b16 %v603
    %v1236 = vunpack.c.h.b16 %v603
    %v1237 = vunpack.c.l.b16 %v604
    %v1238 = vunpack.c.h.b16 %v604
    %v1239 = vunpack.c.l.b16 %v605
    %v1240 = vunpack.c.h.b16 %v605
    %v1241 = vunpack.c.l.b16 %v606
    %v1242 = vunpack.c.h.b16 %v606
    %v1243 = vunpack.c.l.b16 %v607
    %v1244 = vunpack.c.h.b16 %v607
    %v1245 = vunpack.c.l.b16 %v608
    %v1246 = vunpack.c.h.b16 %v608
    %v1247 = vunpack.c.l.b16 %v609
    %v1248 = vunpack.c.h.b16 %v609
    %v1249 = vunpack.c.l.b16 %v610
    %v1250 = vunpack.c.h.b16 %v610
    %v1251 = vunpack.c.l.b16 %v611
    %v1252 = vunpack.c.h.b16 %v611
    %v1253 = vunpack.c.l.b16 %v612
    %v1254 = vunpack.c.h.b16 %v612
    %v1255 = vunpack.c.l.b16 %v613
    %v1256 = vunpack.c.h.b16 %v613
    %v1257 = vunpack.c.l.b16 %v614
    %v1258 = vunpack.c.h.b16 %v614
    %v1259 = vunpack.c.l.b16 %v615
    %v1260 = vunpack.c.h.b16 %v615
    %v1261 = vunpack.c.l.b16 %v616
    %v1262 = vunpack.c.h.b16 %v616
    %v1263 = vunpack.c.l.b16 %v617
    %v1264 = vunpack.c.h.b16 %v617
    %v1265 = vunpack.c.l.b16 %v618
    %v1266 = vunpack.c.h.b16 %v618
    %v1267 = vunpack.c.l.b16 %v619
    %v1268 = vunpack.c.h.b16 %v619
    %v1269 = vunpack.c.l.b16 %v620
    %v1270 = vunpack.c.h.b16 %v620
    %v1271 = vunpack.c.l.b16 %v621
    %v1272 = vunpack.c.h.b16 %v621
    %v1273 = vunpack.c.l.b16 %v622
    %v1274 = vunpack.c.h.b16 %v622
    %v1275 = vunpack.c.l.b16 %v623
    %v1276 = vunpack.c.h.b16 %v623
    %v1277 = vunpack.c.l.b16 %v624
    %v1278 = vunpack.c.h.b16 %v624
    %v1279 = vunpack.c.l.b16 %v625
    %v1280 = vunpack.c.h.b16 %v625
    %v1281 = vunpack.c.l.b16 %v626
    %v1282 = vunpack.c.h.b16 %v626
    %v1283 = vunpack.c.l.b16 %v627
    %v1284 = vunpack.c.h.b16 %v627
    %v1285 = vunpack.c.l.b16 %v628
    %v1286 = vunpack.c.h.b16 %v628
    %v1287 = vunpack.c.l.b16 %v629
    %v1288 = vunpack.c.h.b16 %v629
    %v1289 = vunpack.c.l.b16 %v630
    %v1290 = vunpack.c.h.b16 %v630
    %v1291 = vunpack.c.l.b16 %v631
    %v1292 = vunpack.c.h.b16 %v631
    %v1293 = vunpack.c.l.b16 %v632
    %v1294 = vunpack.c.h.b16 %v632
    %v1295 = vunpack.c.l.b16 %v633
    %v1296 = vunpack.c.h.b16 %v633
    %v1297 = vunpack.c.l.b16 %v634
    %v1298 = vunpack.c.h.b16 %v634
    %v1299 = vunpack.c.l.b16 %v635
    %v1300 = vunpack.c.h.b16 %v635
    %v1301 = vunpack.c.l.b16 %v636
    %v1302 = vunpack.c.h.b16 %v636
    %v1303 = vunpack.c.l.b16 %v637
    %v1304 = vunpack.c.h.b16 %v637
    %v1305 = vunpack.c.l.b16 %v638
    %v1306 = vunpack.c.h.b16 %v638
    %v1307 = vunpack.c.l.b16 %v639
    %v1308 = vunpack.c.h.b16 %v639
    %v1309 = vunpack.c.l.b16 %v640
    %v1310 = vunpack.c.h.b16 %v640
    %v1311 = vunpack.c.l.b16 %v641
    %v1312 = vunpack.c.h.b16 %v641
    %v1313 = vunpack.c.l.b16 %v642
    %v1314 = vunpack.c.h.b16 %v642
    %v1315 = vunpack.c.l.b16 %v643
    %v1316 = vunpack.c.h.b16 %v643
    %v1317 = vunpack.c.l.b16 %v644
    %v1318 = vunpack.c.h.b16 %v644
    %v1319 = vunpack.c.l.b16 %v645
    %v1320 = vunpack.c.h.b16 %v645
    %v1321 = vunpack.c.l.b16 %v646
    %v1322 = vunpack.c.h.b16 %v646
    %v1323 = vunpack.c.l.b16 %v647
    %v1324 = vunpack.c.h.b16 %v647
    %v1325 = vunpack.c.l.b16 %v648
    %v1326 = vunpack.c.h.b16 %v648
    %v1327 = vunpack.c.l.b16 %v649
    %v1328 = vunpack.c.h.b16 %v649
    %v1329 = vunpack.c.l.b16 %v650
    %v1330 = vunpack.c.h.b16 %v650
    %v1331 = vunpack.c.l.b16 %v651
    %v1332 = vunpack.c.h.b16 %v651
    %v1333 = vunpack.c.l.b16 %v652
    %v1334 = vunpack.c.h.b16 %v652
    %v1335 = vunpack.c.l.b16 %v653
    %v1336 = vunpack.c.h.b16 %v653
    %v1337 = vunpack.c.l.b16 %v654
    %v1338 = vunpack.c.h.b16 %v654
    %v1339 = vunpack.c.l.b16 %v655
    %v1340 = vunpack.c.h.b16 %v655
    %v1341 = vunpack.c.l.b16 %v656
    %v1342 = vunpack.c.h.b16 %v656
    %v1343 = vunpack.c.l.b16 %v657
    %v1344 = vunpack.c.h.b16 %v657
    %v1345 = vunpack.c.l.b16 %v658
    %v1346 = vunpack.c.h.b16 %v658
    %v1347 = vunpack.c.l.b16 %v659
    %v1348 = vunpack.c.h.b16 %v659
    %v1349 = vunpack.c.l.b16 %v660
    %v1350 = vunpack.c.h.b16 %v660
    %v1351 = vunpack.c.l.b16 %v661
    %v1352 = vunpack.c.h.b16 %v661
    %v1353 = vunpack.c.l.b16 %v662
    %v1354 = vunpack.c.h.b16 %v662
    %v1355 = vunpack.c.l.b16 %v663
    %v1356 = vunpack.c.h.b16 %v663
    %v1357 = vunpack.c.l.b16 %v664
    %v1358 = vunpack.c.h.b16 %v664
    %v1359 = vunpack.c.l.b16 %v665
    %v1360 = vunpack.c.h.b16 %v665
    %v1361 = vunpack.c.l.b16 %v666
    %v1362 = vunpack.c.h.b16 %v666
    %v1363 = vunpack.c.l.b16 %v667
    %v1364 = vunpack.c.h.b16 %v667
    %v1365 = vunpack.c.l.b16 %v668
    %v1366 = vunpack.c.h.b16 %v668
    %v1367 = vunpack.c.l.b16 %v669
    %v1368 = vunpack.c.h.b16 %v669
    %v1369 = vunpack.c.l.b16 %v670
    %v1370 = vunpack.c.h.b16 %v670
    %v1371 = vunpack.c.l.b16 %v671
    %v1372 = vunpack.c.h.b16 %v671
    %v1373 = vunpack.c.l.b16 %v672
    %v1374 = vunpack.c.h.b16 %v672
    %v1375 = vunpack.c.l.b16 %v673
    %v1376 = vunpack.c.h.b16 %v673
    %v1377 = vunpack.c.l.b16 %v674
    %v1378 = vunpack.c.h.b16 %v674
    %v1379 = vunpack.c.l.b16 %v675
    %v1380 = vunpack.c.h.b16 %v675
    %v1381 = vunpack.c.l.b16 %v676
    %v1382 = vunpack.c.h.b16 %v676
    %v1383 = vunpack.c.l.b16 %v677
    %v1384 = vunpack.c.h.b16 %v677
    %v1385 = vunpack.c.l.b16 %v678
    %v1386 = vunpack.c.h.b16 %v678
    %v1387 = vunpack.c.l.b16 %v679
    %v1388 = vunpack.c.h.b16 %v679
    %v1389 = vunpack.c.l.b16 %v680
    %v1390 = vunpack.c.h.b16 %v680
    %v1391 = vunpack.c.l.b16 %v681
    %v1392 = vunpack.c.h.b16 %v681
    %v1393 = vunpack.c.l.b16 %v682
    %v1394 = vunpack.c.h.b16 %v682
    %v1395 = vunpack.c.l.b16 %v683
    %v1396 = vunpack.c.h.b16 %v683
    %v1397 = vunpack.c.l.b16 %v684
    %v1398 = vunpack.c.h.b16 %v684
    %v1399 = vunpack.c.l.b16 %v685
    %v1400 = vunpack.c.h.b16 %v685
    %v1401 = vunpack.c.l.b16 %v686
    %v1402 = vunpack.c.h.b16 %v686
    %v1403 = vunpack.c.l.b16 %v687
    %v1404 = vunpack.c.h.b16 %v687
    %v1405 = vunpack.c.l.b16 %v688
    %v1406 = vunpack.c.h.b16 %v688
    %v1407 = vunpack.c.l.b16 %v689
    %v1408 = vunpack.c.h.b16 %v689
    %v1409 = vunpack.c.l.b16 %v690
    %v1410 = vunpack.c.h.b16 %v690
    %v1411 = vunpack.c.l.b16 %v691
    %v1412 = vunpack.c.h.b16 %v691
    %v1413 = vunpack.c.l.b16 %v692
    %v1414 = vunpack.c.h.b16 %v692
    %v1415 = vunpack.c.l.b16 %v693
    %v1416 = vunpack.c.h.b16 %v693
    %v1417 = vunpack.c.l.b16 %v694
    %v1418 = vunpack.c.h.b16 %v694
    %v1419 = vunpack.c.l.b16 %v695
    %v1420 = vunpack.c.h.b16 %v695
    %v1421 = vunpack.c.l.b16 %v696
    %v1422 = vunpack.c.h.b16 %v696
    %v1423 = vunpack.c.l.b16 %v697
    %v1424 = vunpack.c.h.b16 %v697
    %v1425 = vunpack.c.l.b16 %v698
    %v1426 = vunpack.c.h.b16 %v698
    %v1427 = vunpack.c.l.b16 %v699
    %v1428 = vunpack.c.h.b16 %v699
    %v1429 = vunpack.c.l.b16 %v700
    %v1430 = vunpack.c.h.b16 %v700
    %v1431 = vunpack.c.l.b16 %v701
    %v1432 = vunpack.c.h.b16 %v701
    %v1433 = vunpack.c.l.b16 %v702
    %v1434 = vunpack.c.h.b16 %v702
    %v1435 = vunpack.c.l.b16 %v703
    %v1436 = vunpack.c.h.b16 %v703
    %v1437 = vunpack.c.l.b16 %v704
    %v1438 = vunpack.c.h.b16 %v704
    %v1439 = vunpack.c.l.b16 %v705
    %v1440 = vunpack.c.h.b16 %v705
    %v1441 = vunpack.c.l.b16 %v706
    %v1442 = vunpack.c.h.b16 %v706
    %v1443 = vunpack.c.l.b16 %v707
    %v1444 = vunpack.c.h.b16 %v707
    %v1445 = vunpack.c.l.b16 %v708
    %v1446 = vunpack.c.h.b16 %v708
    %v1447 = vunpack.c.l.b16 %v709
    %v1448 = vunpack.c.h.b16 %v709
    %v1449 = vunpack.c.l.b16 %v710
    %v1450 = vunpack.c.h.b16 %v710
    %v1451 = vunpack.c.l.b16 %v711
    %v1452 = vunpack.c.h.b16 %v711
    %v1453 = vunpack.c.l.b16 %v712
    %v1454 = vunpack.c.h.b16 %v712
    %v1455 = vunpack.c.l.b16 %v713
    %v1456 = vunpack.c.h.b16 %v713
    %v1457 = vunpack.c.l.b16 %v714
    %v1458 = vunpack.c.h.b16 %v714
    %v1459 = vunpack.c.l.b16 %v715
    %v1460 = vunpack.c.h.b16 %v715
    %v1461 = vunpack.c.l.b16 %v716
    %v1462 = vunpack.c.h.b16 %v716
    %v1463 = vunpack.c.l.b16 %v717
    %v1464 = vunpack.c.h.b16 %v717
    %v1465 = vunpack.c.l.b16 %v718
    %v1466 = vunpack.c.h.b16 %v718
    %v1467 = vunpack.c.l.b16 %v719
    %v1468 = vunpack.c.h.b16 %v719
    %v1469 = vunpack.c.l.b16 %v720
    %v1470 = vunpack.c.h.b16 %v720
    %v1471 = vunpack.c.l.b16 %v721
    %v1472 = vunpack.c.h.b16 %v721
    %v1473 = vunpack.c.l.b16 %v722
    %v1474 = vunpack.c.h.b16 %v722
    %v1475 = vunpack.c.l.b16 %v723
    %v1476 = vunpack.c.h.b16 %v723
    %v1477 = vunpack.c.l.b16 %v724
    %v1478 = vunpack.c.h.b16 %v724
    %v1479 = vunpack.c.l.b16 %v725
    %v1480 = vunpack.c.h.b16 %v725
    %v1481 = vunpack.c.l.b16 %v726
    %v1482 = vunpack.c.h.b16 %v726
    %v1483 = vunpack.c.l.b16 %v727
    %v1484 = vunpack.c.h.b16 %v727
    %v1485 = vunpack.c.l.b16 %v728
    %v1486 = vunpack.c.h.b16 %v728
    %v1487 = vunpack.c.l.b16 %v729
    %v1488 = vunpack.c.h.b16 %v729
    %v1489 = vunpack.c.l.b16 %v730
    %v1490 = vunpack.c.h.b16 %v730
    %v1491 = vunpack.c.l.b16 %v731
    %v1492 = vunpack.c.h.b16 %v731
    %v1493 = vunpack.c.l.b16 %v732
    %v1494 = vunpack.c.h.b16 %v732
    %v1495 = vunpack.c.l.b16 %v733
    %v1496 = vunpack.c.h.b16 %v733
    %v1497 = vunpack.c.l.b16 %v734
    %v1498 = vunpack.c.h.b16 %v734
    %v1499 = vunpack.c.l.b16 %v735
    %v1500 = vunpack.c.h.b16 %v735
    %v1501 = vunpack.c.l.b16 %v736
    %v1502 = vunpack.c.h.b16 %v736
    %v1503 = vunpack.c.l.b16 %v737
    %v1504 = vunpack.c.h.b16 %v737
    %v1505 = vunpack.c.l.b16 %v738
    %v1506 = vunpack.c.h.b16 %v738
    %v1507 = vunpack.c.l.b16 %v739
    %v1508 = vunpack.c.h.b16 %v739
    %v1509 = vunpack.c.l.b16 %v740
    %v1510 = vunpack.c.h.b16 %v740
    %v1511 = vunpack.c.l.b16 %v741
    %v1512 = vunpack.c.h.b16 %v741
    %v1513 = vunpack.c.l.b16 %v742
    %v1514 = vunpack.c.h.b16 %v742
    %v1515 = vunpack.c.l.b16 %v743
    %v1516 = vunpack.c.h.b16 %v743
    %v1517 = vunpack.c.l.b16 %v744
    %v1518 = vunpack.c.h.b16 %v744
    %v1519 = vunpack.c.l.b16 %v745
    %v1520 = vunpack.c.h.b16 %v745
    %v1521 = vunpack.c.l.b16 %v746
    %v1522 = vunpack.c.h.b16 %v746
    %v1523 = vunpack.c.l.b16 %v747
    %v1524 = vunpack.c.h.b16 %v747
    %v1525 = vunpack.c.l.b16 %v748
    %v1526 = vunpack.c.h.b16 %v748
    %v1527 = vunpack.c.l.b16 %v749
    %v1528 = vunpack.c.h.b16 %v749
    %v1529 = vunpack.c.l.b16 %v750
    %v1530 = vunpack.c.h.b16 %v750
    %v1531 = vunpack.c.l.b16 %v751
    %v1532 = vunpack.c.h.b16 %v751
    %v1533 = vunpack.c.l.b16 %v752
    %v1534 = vunpack.c.h.b16 %v752
    %v1535 = vunpack.c.l.b16 %v753
    %v1536 = vunpack.c.h.b16 %v753
    %v1537 = vunpack.c.l.b16 %v754
    %v1538 = vunpack.c.h.b16 %v754
    %v1539 = vunpack.c.l.b16 %v755
    %v1540 = vunpack.c.h.b16 %v755
    %v1541 = vunpack.c.l.b16 %v756
    %v1542 = vunpack.c.h.b16 %v756
    %v1543 = vunpack.c.l.b16 %v757
    %v1544 = vunpack.c.h.b16 %v757
    %v1545 = vunpack.c.l.b16 %v758
    %v1546 = vunpack.c.h.b16 %v758
    %v1547 = vunpack.c.l.b16 %v759
    %v1548 = vunpack.c.h.b16 %v759
    %v1549 = vunpack.c.l.b16 %v760
    %v1550 = vunpack.c.h.b16 %v760
    %v1551 = vunpack.c.l.b16 %v761
    %v1552 = vunpack.c.h.b16 %v761
    %v1553 = vunpack.c.l.b16 %v762
    %v1554 = vunpack.c.h.b16 %v762
    %v1555 = vunpack.c.l.b16 %v763
    %v1556 = vunpack.c.h.b16 %v763
    %v1557 = vunpack.c.l.b16 %v764
    %v1558 = vunpack.c.h.b16 %v764
    %v1559 = vunpack.c.l.b16 %v765
    %v1560 = vunpack.c.h.b16 %v765
    %v1561 = vunpack.c.l.b16 %v766
    %v1562 = vunpack.c.h.b16 %v766
    %v1563 = vunpack.c.l.b16 %v767
    %v1564 = vunpack.c.h.b16 %v767
    %v1565 = vunpack.c.l.b16 %v768
    %v1566 = vunpack.c.h.b16 %v768
    %v1567 = vunpack.c.l.b16 %v769
    %v1568 = vunpack.c.h.b16 %v769
    %v1569 = vunpack.c.l.b16 %v770
    %v1570 = vunpack.c.h.b16 %v770
    %v1571 = vunpack.c.l.b16 %v771
    %v1572 = vunpack.c.h.b16 %v771
    %v1573 = vunpack.c.l.b16 %v772
    %v1574 = vunpack.c.h.b16 %v772
    %v1575 = vunpack.c.l.b16 %v773
    %v1576 = vunpack.c.h.b16 %v773
    %v1577 = vunpack.c.l.b16 %v774
    %v1578 = vunpack.c.h.b16 %v774
    %v1579 = vunpack.c.l.b16 %v775
    %v1580 = vunpack.c.h.b16 %v775
    %v1581 = vunpack.c.l.b16 %v776
    %v1582 = vunpack.c.h.b16 %v776
    %v1583 = vunpack.c.l.b16 %v777
    %v1584 = vunpack.c.h.b16 %v777
    %v1585 = vunpack.c.l.b16 %v778
    %v1586 = vunpack.c.h.b16 %v778
    %v1587 = vunpack.c.l.b16 %v779
    %v1588 = vunpack.c.h.b16 %v779
    %v1589 = vunpack.c.l.b16 %v780
    %v1590 = vunpack.c.h.b16 %v780
    %v1591 = vunpack.c.l.b16 %v781
    %v1592 = vunpack.c.h.b16 %v781
    %v1593 = vunpack.c.l.b16 %v782
    %v1594 = vunpack.c.h.b16 %v782
    %v1595 = vunpack.c.l.b16 %v783
    %v1596 = vunpack.c.h.b16 %v783
    %v1597 = vunpack.c.l.b16 %v784
    %v1598 = vunpack.c.h.b16 %v784
    %v1599 = vunpack.c.l.b16 %v785
    %v1600 = vunpack.c.h.b16 %v785
    %v1601 = vunpack.c.l.b16 %v786
    %v1602 = vunpack.c.h.b16 %v786
    %v1603 = vunpack.c.l.b16 %v787
    %v1604 = vunpack.c.h.b16 %v787
    %v1605 = vunpack.c.l.b16 %v788
    %v1606 = vunpack.c.h.b16 %v788
    %v1607 = vunpack.c.l.b16 %v789
    %v1608 = vunpack.c.h.b16 %v789
    %v1609 = vunpack.c.l.b16 %v790
    %v1610 = vunpack.c.h.b16 %v790
    %v1611 = vunpack.c.l.b16 %v791
    %v1612 = vunpack.c.h.b16 %v791
    %v1613 = vunpack.c.l.b16 %v792
    %v1614 = vunpack.c.h.b16 %v792
    %v1615 = vunpack.c.l.b16 %v793
    %v1616 = vunpack.c.h.b16 %v793
    %v1617 = vunpack.c.l.b16 %v794
    %v1618 = vunpack.c.h.b16 %v794
    %v1619 = vunpack.c.l.b16 %v795
    %v1620 = vunpack.c.h.b16 %v795
    %v1621 = vunpack.c.l.b16 %v796
    %v1622 = vunpack.c.h.b16 %v796
    %v1623 = vunpack.c.l.b16 %v797
    %v1624 = vunpack.c.h.b16 %v797
    %v1625 = vunpack.c.l.b16 %v798
    %v1626 = vunpack.c.h.b16 %v798
    %v1627 = vunpack.c.l.b16 %v799
    %v1628 = vunpack.c.h.b16 %v799
    %v1629 = vunpack.c.l.b16 %v800
    %v1630 = vunpack.c.h.b16 %v800
    %v1631 = vunpack.c.l.b16 %v801
    %v1632 = vunpack.c.h.b16 %v801
    %v1633 = vunpack.c.l.b16 %v802
    %v1634 = vunpack.c.h.b16 %v802
    %v1635 = vunpack.c.l.b16 %v803
    %v1636 = vunpack.c.h.b16 %v803
    %v1637 = vunpack.c.l.b16 %v804
    %v1638 = vunpack.c.h.b16 %v804
    %v1639 = vunpack.c.l.b16 %v805
    %v1640 = vunpack.c.h.b16 %v805
    %v1641 = vunpack.c.l.b16 %v806
    %v1642 = vunpack.c.h.b16 %v806
    %v1643 = vunpack.c.l.b16 %v807
    %v1644 = vunpack.c.h.b16 %v807
    %v1645 = vunpack.c.l.b16 %v808
    %v1646 = vunpack.c.h.b16 %v808
    %v1647 = vunpack.c.l.b16 %v809
    %v1648 = vunpack.c.h.b16 %v809
    %v1649 = vunpack.c.l.b16 %v810
    %v1650 = vunpack.c.h.b16 %v810
    %v1651 = vunpack.c.l.b16 %v811
    %v1652 = vunpack.c.h.b16 %v811
    %v1653 = vunpack.c.l.b16 %v812
    %v1654 = vunpack.c.h.b16 %v812
    %v1655 = vunpack.c.l.b16 %v813
    %v1656 = vunpack.c.h.b16 %v813
    %v1657 = vunpack.c.l.b16 %v814
    %v1658 = vunpack.c.h.b16 %v814
    %v1659 = vunpack.c.l.b16 %v815
    %v1660 = vunpack.c.h.b16 %v815
    %v1661 = vunpack.c.l.b16 %v816
    %v1662 = vunpack.c.h.b16 %v816
    %v1663 = vunpack.c.l.b16 %v817
    %v1664 = vunpack.c.h.b16 %v817
    %v1665 = vunpack.c.l.b16 %v818
    %v1666 = vunpack.c.h.b16 %v818
    %v1667 = vunpack.c.l.b16 %v819
    %v1668 = vunpack.c.h.b16 %v819
    %v1669 = vunpack.c.l.b16 %v820
    %v1670 = vunpack.c.h.b16 %v820
    %v1671 = vunpack.c.l.b16 %v821
    %v1672 = vunpack.c.h.b16 %v821
    %v1673 = vunpack.c.l.b16 %v822
    %v1674 = vunpack.c.h.b16 %v822
    %v1675 = vunpack.c.l.b16 %v823
    %v1676 = vunpack.c.h.b16 %v823
    %v1677 = vunpack.c.l.b16 %v824
    %v1678 = vunpack.c.h.b16 %v824
    %v1679 = vunpack.c.l.b16 %v825
    %v1680 = vunpack.c.h.b16 %v825
    %v1681 = vunpack.c.l.b16 %v826
    %v1682 = vunpack.c.h.b16 %v826
    %v1683 = vunpack.c.l.b16 %v827
    %v1684 = vunpack.c.h.b16 %v827
    %v1685 = vunpack.c.l.b16 %v828
    %v1686 = vunpack.c.h.b16 %v828
    %v1687 = vunpack.c.l.b16 %v829
    %v1688 = vunpack.c.h.b16 %v829
    %v1689 = vunpack.c.l.b16 %v830
    %v1690 = vunpack.c.h.b16 %v830
    %v1691 = vunpack.c.l.b16 %v831
    %v1692 = vunpack.c.h.b16 %v831
    %v1693 = vunpack.c.l.b16 %v832
    %v1694 = vunpack.c.h.b16 %v832
    %v1695 = vunpack.c.l.b16 %v833
    %v1696 = vunpack.c.h.b16 %v833
    %v1697 = vunpack.c.l.b16 %v834
    %v1698 = vunpack.c.h.b16 %v834
    %v1699 = vpack.c.b16 %v1129, %v1123
    %v1700 = vpack.c.b16 %v1130, %v1124
    %v1701 = vpack.c.b16 %v1131, %v1125
    %v1702 = vpack.c.b16 %v1132, %v1126
    %v1703 = vpack.c.b16 %v1133, %v1127
    %v1704 = vpack.c.b16 %v1134, %v1128
    %v1705 = vpack.c.b16 %v1141, %v1135
    %v1706 = vpack.c.b16 %v1142, %v1136
    %v1707 = vpack.c.b16 %v1143, %v1137
    %v1708 = vpack.c.b16 %v1144, %v1138
    %v1709 = vpack.c.b16 %v1145, %v1139
    %v1710 = vpack.c.b16 %v1146, %v1140
    %v1711 = vpack.c.b16 %v1153, %v1147
    %v1712 = vpack.c.b16 %v1154, %v1148
    %v1713 = vpack.c.b16 %v1155, %v1149
    %v1714 = vpack.c.b16 %v1156, %v1150
    %v1715 = vpack.c.b16 %v1157, %v1151
    %v1716 = vpack.c.b16 %v1158, %v1152
    %v1717 = vpack.c.b16 %v1165, %v1159
    %v1718 = vpack.c.b16 %v1166, %v1160
    %v1719 = vpack.c.b16 %v1167, %v1161
    %v1720 = vpack.c.b16 %v1168, %v1162
    %v1721 = vpack.c.b16 %v1169, %v1163
    %v1722 = vpack.c.b16 %v1170, %v1164
    %v1723 = vpack.c.b16 %v1177, %v1171
    %v1724 = vpack.c.b16 %v1178, %v1172
    %v1725 = vpack.c.b16 %v1179, %v1173
    %v1726 = vpack.c.b16 %v1180, %v1174
    %v1727 = vpack.c.b16 %v1181, %v1175
    %v1728 = vpack.c.b16 %v1182, %v1176
    %v1729 = vpack.c.b16 %v1189, %v1183
    %v1730 = vpack.c.b16 %v1190, %v1184
    %v1731 = vpack.c.b16 %v1191, %v1185
    %v1732 = vpack.c.b16 %v1192, %v1186
    %v1733 = vpack.c.b16 %v1193, %v1187
    %v1734 = vpack.c.b16 %v1194, %v1188
    %v1735 = vpack.c.b16 %v1201, %v1195
    %v1736 = vpack.c.b16 %v1202, %v1196
    %v1737 = vpack.c.b16 %v1203, %v1197
    %v1738 = vpack.c.b16 %v1204, %v1198
    %v1739 = vpack.c.b16 %v1205, %v1199
    %v1740 = vpack.c.b16 %v1206, %v1200
    %v1741 = vpack.c.b16 %v1213, %v1207
    %v1742 = vpack.c.b16 %v1214, %v1208
    %v1743 = vpack.c.b16 %v1215, %v1209
    %v1744 = vpack.c.b16 %v1216, %v1210
    %v1745 = vpack.c.b16 %v1217, %v1211
    %v1746 = vpack.c.b16 %v1218, %v1212
    %v1747 = vpack.c.b16 %v1225, %v1219
    %v1748 = vpack.c.b16 %v1226, %v1220
    %v1749 = vpack.c.b16 %v1227, %v1221
    %v1750 = vpack.c.b16 %v1228, %v1222
    %v1751 = vpack.c.b16 %v1229, %v1223
    %v1752 = vpack.c.b16 %v1230, %v1224
    %v1753 = vpack.c.b16 %v1237, %v1231
    %v1754 = vpack.c.b16 %v1238, %v1232
    %v1755 = vpack.c.b16 %v1239, %v1233
    %v1756 = vpack.c.b16 %v1240, %v1234
    %v1757 = vpack.c.b16 %v1241, %v1235
    %v1758 = vpack.c.b16 %v1242, %v1236
    %v1759 = vpack.c.b16 %v1249, %v1243
    %v1760 = vpack.c.b16 %v1250, %v1244
    %v1761 = vpack.c.b16 %v1251, %v1245
    %v1762 = vpack.c.b16 %v1252, %v1246
    %v1763 = vpack.c.b16 %v1253, %v1247
    %v1764 = vpack.c.b16 %v1254, %v1248
    %v1765 = vpack.c.b16 %v1261, %v1255
    %v1766 = vpack.c.b16 %v1262, %v1256
    %v1767 = vpack.c.b16 %v1263, %v1257
    %v1768 = vpack.c.b16 %v1264, %v1258
    %v1769 = vpack.c.b16 %v1265, %v1259
    %v1770 = vpack.c.b16 %v1266, %v1260
    %v1771 = vpack.c.b16 %v1273, %v1267
    %v1772 = vpack.c.b16 %v1274, %v1268
    %v1773 = vpack.c.b16 %v1275, %v1269
    %v1774 = vpack.c.b16 %v1276, %v1270
    %v1775 = vpack.c.b16 %v1277, %v1271
    %v1776 = vpack.c.b16 %v1278, %v1272
    %v1777 = vpack.c.b16 %v1285, %v1279
    %v1778 = vpack.c.b16 %v1286, %v1280
    %v1779 = vpack.c.b16 %v1287, %v1281
    %v1780 = vpack.c.b16 %v1288, %v1282
    %v1781 = vpack.c.b16 %v1289, %v1283
    %v1782 = vpack.c.b16 %v1290, %v1284
    %v1783 = vpack.c.b16 %v1297, %v1291
    %v1784 = vpack.c.b16 %v1298, %v1292
    %v1785 = vpack.c.b16 %v1299, %v1293
    %v1786 = vpack.c.b16 %v1300, %v1294
    %v1787 = vpack.c.b16 %v1301, %v1295
    %v1788 = vpack.c.b16 %v1302, %v1296
    %v1789 = vpack.c.b16 %v1309, %v1303
    %v1790 = vpack.c.b16 %v1310, %v1304
    %v1791 = vpack.c.b16 %v1311, %v1305
    %v1792 = vpack.c.b16 %v1312, %v1306
    %v1793 = vpack.c.b16 %v1313, %v1307
    %v1794 = vpack.c.b16 %v1314, %v1308
    %v1795 = vpack.c.b16 %v1321, %v1315
    %v1796 = vpack.c.b16 %v1322, %v1316
    %v1797 = vpack.c.b16 %v1323, %v1317
    %v1798 = vpack.c.b16 %v1324, %v1318
    %v1799 = vpack.c.b16 %v1325, %v1319
    %v1800 = vpack.c.b16 %v1326, %v1320
    %v1801 = vpack.c.b16 %v1333, %v1327
    %v1802 = vpack.c.b16 %v1334, %v1328
    %v1803 = vpack.c.b16 %v1335, %v1329
    %v1804 = vpack.c.b16 %v1336, %v1330
    %v1805 = vpack.c.b16 %v1337, %v1331
    %v1806 = vpack.c.b16 %v1338, %v1332
    %v1807 = vpack.c.b16 %v1345, %v1339
    %v1808 = vpack.c.b16 %v1346, %v1340
    %v1809 = vpack.c.b16 %v1347, %v1341
    %v1810 = vpack.c.b16 %v1348, %v1342
    %v1811 = vpack.c.b16 %v1349, %v1343
    %v1812 = vpack.c.b16 %v1350, %v1344
    %v1813 = vpack.c.b16 %v1357, %v1351
    %v1814 = vpack.c.b16 %v1358, %v1352
    %v1815 = vpack.c.b16 %v1359, %v1353
    %v1816 = vpack.c.b16 %v1360, %v1354
    %v1817 = vpack.c.b16 %v1361, %v1355
    %v1818 = vpack.c.b16 %v1362, %v1356
    %v1819 = vpack.c.b16 %v1369, %v1363
    %v1820 = vpack.c.b16 %v1370, %v1364
    %v1821 = vpack.c.b16 %v1371, %v1365
    %v1822 = vpack.c.b16 %v1372, %v1366
    %v1823 = vpack.c.b16 %v1373, %v1367
    %v1824 = vpack.c.b16 %v1374, %v1368
    %v1825 = vpack.c.b16 %v1381, %v1375
    %v1826 = vpack.c.b16 %v1382, %v1376
    %v1827 = vpack.c.b16 %v1383, %v1377
    %v1828 = vpack.c.b16 %v1384, %v1378
    %v1829 = vpack.c.b16 %v1385, %v1379
    %v1830 = vpack.c.b16 %v1386, %v1380
    %v1831 = vpack.c.b16 %v1393, %v1387
    %v1832 = vpack.c.b16 %v1394, %v1388
    %v1833 = vpack.c.b16 %v1395, %v1389
    %v1834 = vpack.c.b16 %v1396, %v1390
    %v1835 = vpack.c.b16 %v1397, %v1391
    %v1836 = vpack.c.b16 %v1398, %v1392
    %v1837 = vpack.c.b16 %v1405, %v1399
    %v1838 = vpack.c.b16 %v1406, %v1400
    %v1839 = vpack.c.b16 %v1407, %v1401
    %v1840 = vpack.c.b16 %v1408, %v1402
    %v1841 = vpack.c.b16 %v1409, %v1403
    %v1842 = vpack.c.b16 %v1410, %v1404
    %v1843 = vpack.c.b16 %v1417, %v1411
    %v1844 = vpack.c.b16 %v1418, %v1412
    %v1845 = vpack.c.b16 %v1419, %v1413
    %v1846 = vpack.c.b16 %v1420, %v1414
    %v1847 = vpack.c.b16 %v1421, %v1415
    %v1848 = vpack.c.b16 %v1422, %v1416
    %v1849 = vpack.c.b16 %v1429, %v1423
    %v1850 = vpack.c.b16 %v1430, %v1424
    %v1851 = vpack.c.b16 %v1431, %v1425
    %v1852 = vpack.c.b16 %v1432, %v1426
    %v1853 = vpack.c.b16 %v1433, %v1427
    %v1854 = vpack.c.b16 %v1434, %v1428
    %v1855 = vpack.c.b16 %v1441, %v1435
    %v1856 = vpack.c.b16 %v1442, %v1436
    %v1857 = vpack.c.b16 %v1443, %v1437
    %v1858 = vpack.c.b16 %v1444, %v1438
    %v1859 = vpack.c.b16 %v1445, %v1439
    %v1860 = vpack.c.b16 %v1446, %v1440
    %v1861 = vpack.c.b16 %v1453, %v1447
    %v1862 = vpack.c.b16 %v1454, %v1448
    %v1863 = vpack.c.b16 %v1455, %v1449
    %v1864 = vpack.c.b16 %v1456, %v1450
    %v1865 = vpack.c.b16 %v1457, %v1451
    %v1866 = vpack.c.b16 %v1458, %v1452
    %v1867 = vpack.c.b16 %v1465, %v1459
    %v1868 = vpack.c.b16 %v1466, %v1460
    %v1869 = vpack.c.b16 %v1467, %v1461
    %v1870 = vpack.c.b16 %v1468, %v1462
    %v1871 = vpack.c.b16 %v1469, %v1463
    %v1872 = vpack.c.b16 %v1470, %v1464
    %v1873 = vpack.c.b16 %v1477, %v1471
    %v1874 = vpack.c.b16 %v1478, %v1472
    %v1875 = vpack.c.b16 %v1479, %v1473
    %v1876 = vpack.c.b16 %v1480, %v1474
    %v1877 = vpack.c.b16 %v1481, %v1475
    %v1878 = vpack.c.b16 %v1482, %v1476
    %v1879 = vpack.c.b16 %v1489, %v1483
    %v1880 = vpack.c.b16 %v1490, %v1484
    %v1881 = vpack.c.b16 %v1491, %v1485
    %v1882 = vpack.c.b16 %v1492, %v1486
    %v1883 = vpack.c.b16 %v1493, %v1487
    %v1884 = vpack.c.b16 %v1494, %v1488
    %v1885 = vpack.c.b16 %v1501, %v1495
    %v1886 = vpack.c.b16 %v1502, %v1496
    %v1887 = vpack.c.b16 %v1503, %v1497
    %v1888 = vpack.c.b16 %v1504, %v1498
    %v1889 = vpack.c.b16 %v1505, %v1499
    %v1890 = vpack.c.b16 %v1506, %v1500
    %v1891 = vpack.c.b16 %v1513, %v1507
    %v1892 = vpack.c.b16 %v1514, %v1508
    %v1893 = vpack.c.b16 %v1515, %v1509
    %v1894 = vpack.c.b16 %v1516, %v1510
    %v1895 = vpack.c.b16 %v1517, %v1511
    %v1896 = vpack.c.b16 %v1518, %v1512
    %v1897 = vpack.c.b16 %v1525, %v1519
    %v1898 = vpack.c.b16 %v1526, %v1520
    %v1899 = vpack.c.b16 %v1527, %v1521
    %v1900 = vpack.c.b16 %v1528, %v1522
    %v1901 = vpack.c.b16 %v1529, %v1523
    %v1902 = vpack.c.b16 %v1530, %v1524
    %v1903 = vpack.c.b16 %v1537, %v1531
    %v1904 = vpack.c.b16 %v1538, %v1532
    %v1905 = vpack.c.b16 %v1539, %v1533
    %v1906 = vpack.c.b16 %v1540, %v1534
    %v1907 = vpack.c.b16 %v1541, %v1535
    %v1908 = vpack.c.b16 %v1542, %v1536
    %v1909 = vpack.c.b16 %v1549, %v1543
    %v1910 = vpack.c.b16 %v1550, %v1544
    %v1911 = vpack.c.b16 %v1551, %v1545
    %v1912 = vpack.c.b16 %v1552, %v1546
    %v1913 = vpack.c.b16 %v1553, %v1547
    %v1914 = vpack.c.b16 %v1554, %v1548
    %v1915 = vpack.c.b16 %v1561, %v1555
    %v1916 = vpack.c.b16 %v1562, %v1556
    %v1917 = vpack.c.b16 %v1563, %v1557
    %v1918 = vpack.c.b16 %v1564, %v1558
    %v1919 = vpack.c.b16 %v1565, %v1559
    %v1920 = vpack.c.b16 %v1566, %v1560
    %v1921 = vpack.c.b16 %v1573, %v1567
    %v1922 = vpack.c.b16 %v1574, %v1568
    %v1923 = vpack.c.b16 %v1575, %v1569
    %v1924 = vpack.c.b16 %v1576, %v1570
    %v1925 = vpack.c.b16 %v1577, %v1571
    %v1926 = vpack.c.b16 %v1578, %v1572
    %v1927 = vpack.c.b16 %v1585, %v1579
    %v1928 = vpack.c.b16 %v1586, %v1580
    %v1929 = vpack.c.b16 %v1587, %v1581
    %v1930 = vpack.c.b16 %v1588, %v1582
    %v1931 = vpack.c.b16 %v1589, %v1583
    %v1932 = vpack.c.b16 %v1590, %v1584
    %v1933 = vpack.c.b16 %v1597, %v1591
    %v1934 = vpack.c.b16 %v1598, %v1592
    %v1935 = vpack.c.b16 %v1599, %v1593
    %v1936 = vpack.c.b16 %v1600, %v1594
    %v1937 = vpack.c.b16 %v1601, %v1595
    %v1938 = vpack.c.b16 %v1602, %v1596
    %v1939 = vpack.c.b16 %v1609, %v1603
    %v1940 = vpack.c.b16 %v1610, %v1604
    %v1941 = vpack.c.b16 %v1611, %v1605
    %v1942 = vpack.c.b16 %v1612, %v1606
    %v1943 = vpack.c.b16 %v1613, %v1607
    %v1944 = vpack.c.b16 %v1614, %v1608
    %v1945 = vpack.c.b16 %v1621, %v1615
    %v1946 = vpack.c.b16 %v1622, %v1616
    %v1947 = vpack.c.b16 %v1623, %v1617
    %v1948 = vpack.c.b16 %v1624, %v1618
    %v1949 = vpack.c.b16 %v1625, %v1619
    %v1950 = vpack.c.b16 %v1626, %v1620
    %v1951 = vpack.c.b16 %v1633, %v1627
    %v1952 = vpack.c.b16 %v1634, %v1628
    %v1953 = vpack.c.b16 %v1635, %v1629
    %v1954 = vpack.c.b16 %v1636, %v1630
    %v1955 = vpack.c.b16 %v1637, %v1631
    %v1956 = vpack.c.b16 %v1638, %v1632
    %v1957 = vpack.c.b16 %v1645, %v1639
    %v1958 = vpack.c.b16 %v1646, %v1640
    %v1959 = vpack.c.b16 %v1647, %v1641
    %v1960 = vpack.c.b16 %v1648, %v1642
    %v1961 = vpack.c.b16 %v1649, %v1643
    %v1962 = vpack.c.b16 %v1650, %v1644
    %v1963 = vpack.c.b16 %v1657, %v1651
    %v1964 = vpack.c.b16 %v1658, %v1652
    %v1965 = vpack.c.b16 %v1659, %v1653
    %v1966 = vpack.c.b16 %v1660, %v1654
    %v1967 = vpack.c.b16 %v1661, %v1655
    %v1968 = vpack.c.b16 %v1662, %v1656
    %v1969 = vpack.c.b16 %v1669, %v1663
    %v1970 = vpack.c.b16 %v1670, %v1664
    %v1971 = vpack.c.b16 %v1671, %v1665
    %v1972 = vpack.c.b16 %v1672, %v1666
    %v1973 = vpack.c.b16 %v1673, %v1667
    %v1974 = vpack.c.b16 %v1674, %v1668
    %v1975 = vpack.c.b16 %v1681, %v1675
    %v1976 = vpack.c.b16 %v1682, %v1676
    %v1977 = vpack.c.b16 %v1683, %v1677
    %v1978 = vpack.c.b16 %v1684, %v1678
    %v1979 = vpack.c.b16 %v1685, %v1679
    %v1980 = vpack.c.b16 %v1686, %v1680
    %v1981 = vpack.c.b16 %v1693, %v1687
    %v1982 = vpack.c.b16 %v1694, %v1688
    %v1983 = vpack.c.b16 %v1695, %v1689
    %v1984 = vpack.c.b16 %v1696, %v1690
    %v1985 = vpack.c.b16 %v1697, %v1691
    %v1986 = vpack.c.b16 %v1698, %v1692
    %2275 = vmatprep.subr.bf16.mxu0 %v1700
    %2276 = vmatpush1.bf16.msra.mxu0 %v1699
    %2277 = vmatprep.subr.bf16.mxu0 %v1706
    %2278 = vmatpush1.bf16.msra.mxu0 %v1705
    %2279 = vmatprep.subr.bf16.mxu0 %v1712
    %2280 = vmatpush1.bf16.msra.mxu0 %v1711
    %2281 = vmatprep.subr.bf16.mxu0 %v1718
    %2282 = vmatpush1.bf16.msra.mxu0 %v1717
    %2283 = vmatprep.subr.bf16.mxu0 %v1724
    %2284 = vmatpush1.bf16.msra.mxu0 %v1723
    %2285 = vmatprep.subr.bf16.mxu0 %v1730
    %2286 = vmatpush1.bf16.msra.mxu0 %v1729
    %2287 = vmatprep.subr.bf16.mxu0 %v1736
    %2288 = vmatpush1.bf16.msra.mxu0 %v1735
    %2289 = vmatprep.subr.bf16.mxu0 %v1742
    %2290 = vmatpush1.bf16.msra.mxu0 %v1741
    %2291 = vmatprep.subr.bf16.mxu0 %v1748
    %2292 = vmatpush1.bf16.msra.mxu0 %v1747
    %2293 = vmatprep.subr.bf16.mxu0 %v1754
    %2294 = vmatpush1.bf16.msra.mxu0 %v1753
    %2295 = vmatprep.subr.bf16.mxu0 %v1760
    %2296 = vmatpush1.bf16.msra.mxu0 %v1759
    %2297 = vmatprep.subr.bf16.mxu0 %v1766
    %2298 = vmatpush1.bf16.msra.mxu0 %v1765
    %2299 = vmatprep.subr.bf16.mxu0 %v1772
    %2300 = vmatpush1.bf16.msra.mxu0 %v1771
    %2301 = vmatprep.subr.bf16.mxu0 %v1778
    %2302 = vmatpush1.bf16.msra.mxu0 %v1777
    %2303 = vmatprep.subr.bf16.mxu0 %v1784
    %2304 = vmatpush1.bf16.msra.mxu0 %v1783
    %2305 = vmatprep.subr.bf16.mxu0 %v1790
    %2306 = vmatpush1.bf16.msra.mxu0 %v1789
    %2307 = vmatprep.mubr.bf16.mxu0 %v542
    %2308 = vmatmul.mubr.bf16.gmra.mrb[0].mxu0 %v541
    %v2309 = vpop.f32.mrb[0].mxu0
    %v2310 = vadd.f32 0.0, %v2309
    %v2311 = vpop.f32.mrb[0].mxu0
    %v2312 = vadd.f32 0.0, %v2311
    %v2313 = vpop.f32.mrb[0].mxu0
    %v2314 = vpop.f32.mrb[0].mxu0
    %2315 = vdwg.mxu0
    %2316 = vmatprep.subr.bf16.mxu0 %v1796
    %2317 = vmatpush1.bf16.msra.mxu0 %v1795
    %2318 = vmatprep.subr.bf16.mxu0 %v1802
    %2319 = vmatpush1.bf16.msra.mxu0 %v1801
    %2320 = vmatprep.subr.bf16.mxu0 %v1808
    %2321 = vmatpush1.bf16.msra.mxu0 %v1807
    %2322 = vmatprep.subr.bf16.mxu0 %v1814
    %2323 = vmatpush1.bf16.msra.mxu0 %v1813
    %2324 = vmatprep.subr.bf16.mxu0 %v1820
    %2325 = vmatpush1.bf16.msra.mxu0 %v1819
    %2326 = vmatprep.subr.bf16.mxu0 %v1826
    %2327 = vmatpush1.bf16.msra.mxu0 %v1825
    %2328 = vmatprep.subr.bf16.mxu0 %v1832
    %2329 = vmatpush1.bf16.msra.mxu0 %v1831
    %2330 = vmatprep.subr.bf16.mxu0 %v1838
    %2331 = vmatpush1.bf16.msra.mxu0 %v1837
    %2332 = vmatprep.subr.bf16.mxu0 %v1844
    %2333 = vmatpush1.bf16.msra.mxu0 %v1843
    %2334 = vmatprep.subr.bf16.mxu0 %v1850
    %2335 = vmatpush1.bf16.msra.mxu0 %v1849
    %2336 = vmatprep.subr.bf16.mxu0 %v1856
    %2337 = vmatpush1.bf16.msra.mxu0 %v1855
    %2338 = vmatprep.subr.bf16.mxu0 %v1862
    %2339 = vmatpush1.bf16.msra.mxu0 %v1861
    %2340 = vmatprep.subr.bf16.mxu0 %v1868
    %2341 = vmatpush1.bf16.msra.mxu0 %v1867
    %2342 = vmatprep.subr.bf16.mxu0 %v1874
    %2343 = vmatpush1.bf16.msra.mxu0 %v1873
    %2344 = vmatprep.subr.bf16.mxu0 %v1880
    %2345 = vmatpush1.bf16.msra.mxu0 %v1879
    %2346 = vmatprep.subr.bf16.mxu0 %v1886
    %2347 = vmatpush1.bf16.msra.mxu0 %v1885
    %2348 = vmatprep.mubr.bf16.mxu0 %v544
    %2349 = vmatmul.mubr.bf16.gmra.mrb[0].mxu0 %v543
    %v2350 = vpop.f32.mrb[0].mxu0
    %v2351 = vadd.f32 %v2310, %v2350
    %v2352 = vpop.f32.mrb[0].mxu0
    %v2353 = vadd.f32 %v2312, %v2352
    %v2354 = vpop.f32.mrb[0].mxu0
    %v2355 = vpop.f32.mrb[0].mxu0
    %2356 = vdwg.mxu0
    %2357 = vmatprep.subr.bf16.mxu0 %v1892
    %2358 = vmatpush1.bf16.msra.mxu0 %v1891
    %2359 = vmatprep.subr.bf16.mxu0 %v1898
    %2360 = vmatpush1.bf16.msra.mxu0 %v1897
    %2361 = vmatprep.subr.bf16.mxu0 %v1904
    %2362 = vmatpush1.bf16.msra.mxu0 %v1903
    %2363 = vmatprep.subr.bf16.mxu0 %v1910
    %2364 = vmatpush1.bf16.msra.mxu0 %v1909
    %2365 = vmatprep.subr.bf16.mxu0 %v1916
    %2366 = vmatpush1.bf16.msra.mxu0 %v1915
    %2367 = vmatprep.subr.bf16.mxu0 %v1922
    %2368 = vmatpush1.bf16.msra.mxu0 %v1921
    %2369 = vmatprep.subr.bf16.mxu0 %v1928
    %2370 = vmatpush1.bf16.msra.mxu0 %v1927
    %2371 = vmatprep.subr.bf16.mxu0 %v1934
    %2372 = vmatpush1.bf16.msra.mxu0 %v1933
    %2373 = vmatprep.subr.bf16.mxu0 %v1940
    %2374 = vmatpush1.bf16.msra.mxu0 %v1939
    %2375 = vmatprep.subr.bf16.mxu0 %v1946
    %2376 = vmatpush1.bf16.msra.mxu0 %v1945
    %2377 = vmatprep.subr.bf16.mxu0 %v1952
    %2378 = vmatpush1.bf16.msra.mxu0 %v1951
    %2379 = vmatprep.subr.bf16.mxu0 %v1958
    %2380 = vmatpush1.bf16.msra.mxu0 %v1957
    %2381 = vmatprep.subr.bf16.mxu0 %v1964
    %2382 = vmatpush1.bf16.msra.mxu0 %v1963
    %2383 = vmatprep.subr.bf16.mxu0 %v1970
    %2384 = vmatpush1.bf16.msra.mxu0 %v1969
    %2385 = vmatprep.subr.bf16.mxu0 %v1976
    %2386 = vmatpush1.bf16.msra.mxu0 %v1975
    %2387 = vmatprep.subr.bf16.mxu0 %v1982
    %2388 = vmatpush1.bf16.msra.mxu0 %v1981
    %2389 = vmatprep.mubr.bf16.mxu0 %v546
    %2390 = vmatmul.mubr.bf16.gmra.mrb[0].mxu0 %v545
    %v2391 = vpop.f32.mrb[0].mxu0
    %v2392 = vadd.f32 %v2351, %v2391
    %v2393 = vpop.f32.mrb[0].mxu0
    %v2394 = vadd.f32 %v2353, %v2393
    %v2395 = vpop.f32.mrb[0].mxu0
    %v2396 = vpop.f32.mrb[0].mxu0
    %2397 = vdwg.mxu0
    %2398 = vmatprep.subr.bf16.mxu0 %v1702
    %2399 = vmatpush1.bf16.msra.mxu0 %v1701
    %2400 = vmatprep.subr.bf16.mxu0 %v1708
    %2401 = vmatpush1.bf16.msra.mxu0 %v1707
    %2402 = vmatprep.subr.bf16.mxu0 %v1714
    %2403 = vmatpush1.bf16.msra.mxu0 %v1713
    %2404 = vmatprep.subr.bf16.mxu0 %v1720
    %2405 = vmatpush1.bf16.msra.mxu0 %v1719
    %2406 = vmatprep.subr.bf16.mxu0 %v1726
    %2407 = vmatpush1.bf16.msra.mxu0 %v1725
    %2408 = vmatprep.subr.bf16.mxu0 %v1732
    %2409 = vmatpush1.bf16.msra.mxu0 %v1731
    %2410 = vmatprep.subr.bf16.mxu0 %v1738
    %2411 = vmatpush1.bf16.msra.mxu0 %v1737
    %2412 = vmatprep.subr.bf16.mxu0 %v1744
    %2413 = vmatpush1.bf16.msra.mxu0 %v1743
    %2414 = vmatprep.subr.bf16.mxu0 %v1750
    %2415 = vmatpush1.bf16.msra.mxu0 %v1749
    %2416 = vmatprep.subr.bf16.mxu0 %v1756
    %2417 = vmatpush1.bf16.msra.mxu0 %v1755
    %2418 = vmatprep.subr.bf16.mxu0 %v1762
    %2419 = vmatpush1.bf16.msra.mxu0 %v1761
    %2420 = vmatprep.subr.bf16.mxu0 %v1768
    %2421 = vmatpush1.bf16.msra.mxu0 %v1767
    %2422 = vmatprep.subr.bf16.mxu0 %v1774
    %2423 = vmatpush1.bf16.msra.mxu0 %v1773
    %2424 = vmatprep.subr.bf16.mxu0 %v1780
    %2425 = vmatpush1.bf16.msra.mxu0 %v1779
    %2426 = vmatprep.subr.bf16.mxu0 %v1786
    %2427 = vmatpush1.bf16.msra.mxu0 %v1785
    %2428 = vmatprep.subr.bf16.mxu0 %v1792
    %2429 = vmatpush1.bf16.msra.mxu0 %v1791
    %2430 = vmatprep.mubr.bf16.mxu0 %v542
    %2431 = vmatmul.mubr.bf16.gmra.mrb[0].mxu0 %v541
    %v2432 = vpop.f32.mrb[0].mxu0
    %v2433 = vadd.f32 0.0, %v2432
    %v2434 = vpop.f32.mrb[0].mxu0
    %v2435 = vadd.f32 0.0, %v2434
    %v2436 = vpop.f32.mrb[0].mxu0
    %v2437 = vpop.f32.mrb[0].mxu0
    %2438 = vdwg.mxu0
    %2439 = vmatprep.subr.bf16.mxu0 %v1798
    %2440 = vmatpush1.bf16.msra.mxu0 %v1797
    %2441 = vmatprep.subr.bf16.mxu0 %v1804
    %2442 = vmatpush1.bf16.msra.mxu0 %v1803
    %2443 = vmatprep.subr.bf16.mxu0 %v1810
    %2444 = vmatpush1.bf16.msra.mxu0 %v1809
    %2445 = vmatprep.subr.bf16.mxu0 %v1816
    %2446 = vmatpush1.bf16.msra.mxu0 %v1815
    %2447 = vmatprep.subr.bf16.mxu0 %v1822
    %2448 = vmatpush1.bf16.msra.mxu0 %v1821
    %2449 = vmatprep.subr.bf16.mxu0 %v1828
    %2450 = vmatpush1.bf16.msra.mxu0 %v1827
    %2451 = vmatprep.subr.bf16.mxu0 %v1834
    %2452 = vmatpush1.bf16.msra.mxu0 %v1833
    %2453 = vmatprep.subr.bf16.mxu0 %v1840
    %2454 = vmatpush1.bf16.msra.mxu0 %v1839
    %2455 = vmatprep.subr.bf16.mxu0 %v1846
    %2456 = vmatpush1.bf16.msra.mxu0 %v1845
    %2457 = vmatprep.subr.bf16.mxu0 %v1852
    %2458 = vmatpush1.bf16.msra.mxu0 %v1851
    %2459 = vmatprep.subr.bf16.mxu0 %v1858
    %2460 = vmatpush1.bf16.msra.mxu0 %v1857
    %2461 = vmatprep.subr.bf16.mxu0 %v1864
    %2462 = vmatpush1.bf16.msra.mxu0 %v1863
    %2463 = vmatprep.subr.bf16.mxu0 %v1870
    %2464 = vmatpush1.bf16.msra.mxu0 %v1869
    %2465 = vmatprep.subr.bf16.mxu0 %v1876
    %2466 = vmatpush1.bf16.msra.mxu0 %v1875
    %2467 = vmatprep.subr.bf16.mxu0 %v1882
    %2468 = vmatpush1.bf16.msra.mxu0 %v1881
    %2469 = vmatprep.subr.bf16.mxu0 %v1888
    %2470 = vmatpush1.bf16.msra.mxu0 %v1887
    %2471 = vmatprep.mubr.bf16.mxu0 %v544
    %2472 = vmatmul.mubr.bf16.gmra.mrb[0].mxu0 %v543
    %v2473 = vpop.f32.mrb[0].mxu0
    %v2474 = vadd.f32 %v2433, %v2473
    %v2475 = vpop.f32.mrb[0].mxu0
    %v2476 = vadd.f32 %v2435, %v2475
    %v2477 = vpop.f32.mrb[0].mxu0
    %v2478 = vpop.f32.mrb[0].mxu0
    %2479 = vdwg.mxu0
    %2480 = vmatprep.subr.bf16.mxu0 %v1894
    %2481 = vmatpush1.bf16.msra.mxu0 %v1893
    %2482 = vmatprep.subr.bf16.mxu0 %v1900
    %2483 = vmatpush1.bf16.msra.mxu0 %v1899
    %2484 = vmatprep.subr.bf16.mxu0 %v1906
    %2485 = vmatpush1.bf16.msra.mxu0 %v1905
    %2486 = vmatprep.subr.bf16.mxu0 %v1912
    %2487 = vmatpush1.bf16.msra.mxu0 %v1911
    %2488 = vmatprep.subr.bf16.mxu0 %v1918
    %2489 = vmatpush1.bf16.msra.mxu0 %v1917
    %2490 = vmatprep.subr.bf16.mxu0 %v1924
    %2491 = vmatpush1.bf16.msra.mxu0 %v1923
    %2492 = vmatprep.subr.bf16.mxu0 %v1930
    %2493 = vmatpush1.bf16.msra.mxu0 %v1929
    %2494 = vmatprep.subr.bf16.mxu0 %v1936
    %2495 = vmatpush1.bf16.msra.mxu0 %v1935
    %2496 = vmatprep.subr.bf16.mxu0 %v1942
    %2497 = vmatpush1.bf16.msra.mxu0 %v1941
    %2498 = vmatprep.subr.bf16.mxu0 %v1948
    %2499 = vmatpush1.bf16.msra.mxu0 %v1947
    %2500 = vmatprep.subr.bf16.mxu0 %v1954
    %2501 = vmatpush1.bf16.msra.mxu0 %v1953
    %2502 = vmatprep.subr.bf16.mxu0 %v1960
    %2503 = vmatpush1.bf16.msra.mxu0 %v1959
    %2504 = vmatprep.subr.bf16.mxu0 %v1966
    %2505 = vmatpush1.bf16.msra.mxu0 %v1965
    %2506 = vmatprep.subr.bf16.mxu0 %v1972
    %2507 = vmatpush1.bf16.msra.mxu0 %v1971
    %2508 = vmatprep.subr.bf16.mxu0 %v1978
    %2509 = vmatpush1.bf16.msra.mxu0 %v1977
    %2510 = vmatprep.subr.bf16.mxu0 %v1984
    %2511 = vmatpush1.bf16.msra.mxu0 %v1983
    %2512 = vmatprep.mubr.bf16.mxu0 %v546
    %2513 = vmatmul.mubr.bf16.gmra.mrb[0].mxu0 %v545
    %v2514 = vpop.f32.mrb[0].mxu0
    %v2515 = vadd.f32 %v2474, %v2514
    %v2516 = vpop.f32.mrb[0].mxu0
    %v2517 = vadd.f32 %v2476, %v2516
    %v2518 = vpop.f32.mrb[0].mxu0
    %v2519 = vpop.f32.mrb[0].mxu0
    %2520 = vdwg.mxu0
    %2521 = vmatprep.subr.bf16.mxu0 %v1704
    %2522 = vmatpush1.bf16.msra.mxu0 %v1703
    %2523 = vmatprep.subr.bf16.mxu0 %v1710
    %2524 = vmatpush1.bf16.msra.mxu0 %v1709
    %2525 = vmatprep.subr.bf16.mxu0 %v1716
    %2526 = vmatpush1.bf16.msra.mxu0 %v1715
    %2527 = vmatprep.subr.bf16.mxu0 %v1722
    %2528 = vmatpush1.bf16.msra.mxu0 %v1721
    %2529 = vmatprep.subr.bf16.mxu0 %v1728
    %2530 = vmatpush1.bf16.msra.mxu0 %v1727
    %2531 = vmatprep.subr.bf16.mxu0 %v1734
    %2532 = vmatpush1.bf16.msra.mxu0 %v1733
    %2533 = vmatprep.subr.bf16.mxu0 %v1740
    %2534 = vmatpush1.bf16.msra.mxu0 %v1739
    %2535 = vmatprep.subr.bf16.mxu0 %v1746
    %2536 = vmatpush1.bf16.msra.mxu0 %v1745
    %2537 = vmatprep.subr.bf16.mxu0 %v1752
    %2538 = vmatpush1.bf16.msra.mxu0 %v1751
    %2539 = vmatprep.subr.bf16.mxu0 %v1758
    %2540 = vmatpush1.bf16.msra.mxu0 %v1757
    %2541 = vmatprep.subr.bf16.mxu0 %v1764
    %2542 = vmatpush1.bf16.msra.mxu0 %v1763
    %2543 = vmatprep.subr.bf16.mxu0 %v1770
    %2544 = vmatpush1.bf16.msra.mxu0 %v1769
    %2545 = vmatprep.subr.bf16.mxu0 %v1776
    %2546 = vmatpush1.bf16.msra.mxu0 %v1775
    %2547 = vmatprep.subr.bf16.mxu0 %v1782
    %2548 = vmatpush1.bf16.msra.mxu0 %v1781
    %2549 = vmatprep.subr.bf16.mxu0 %v1788
    %2550 = vmatpush1.bf16.msra.mxu0 %v1787
    %2551 = vmatprep.subr.bf16.mxu0 %v1794
    %2552 = vmatpush1.bf16.msra.mxu0 %v1793
    %2553 = vmatprep.mubr.bf16.mxu0 %v542
    %2554 = vmatmul.mubr.bf16.gmra.mrb[0].mxu0 %v541
    %v2555 = vpop.f32.mrb[0].mxu0
    %v2556 = vadd.f32 0.0, %v2555
    %v2557 = vpop.f32.mrb[0].mxu0
    %v2558 = vadd.f32 0.0, %v2557
    %v2559 = vpop.f32.mrb[0].mxu0
    %v2560 = vpop.f32.mrb[0].mxu0
    %2561 = vdwg.mxu0
    %2562 = vmatprep.subr.bf16.mxu0 %v1800
    %2563 = vmatpush1.bf16.msra.mxu0 %v1799
    %2564 = vmatprep.subr.bf16.mxu0 %v1806
    %2565 = vmatpush1.bf16.msra.mxu0 %v1805
    %2566 = vmatprep.subr.bf16.mxu0 %v1812
    %2567 = vmatpush1.bf16.msra.mxu0 %v1811
    %2568 = vmatprep.subr.bf16.mxu0 %v1818
    %2569 = vmatpush1.bf16.msra.mxu0 %v1817
    %2570 = vmatprep.subr.bf16.mxu0 %v1824
    %2571 = vmatpush1.bf16.msra.mxu0 %v1823
    %2572 = vmatprep.subr.bf16.mxu0 %v1830
    %2573 = vmatpush1.bf16.msra.mxu0 %v1829
    %2574 = vmatprep.subr.bf16.mxu0 %v1836
    %2575 = vmatpush1.bf16.msra.mxu0 %v1835
    %2576 = vmatprep.subr.bf16.mxu0 %v1842
    %2577 = vmatpush1.bf16.msra.mxu0 %v1841
    %2578 = vmatprep.subr.bf16.mxu0 %v1848
    %2579 = vmatpush1.bf16.msra.mxu0 %v1847
    %2580 = vmatprep.subr.bf16.mxu0 %v1854
    %2581 = vmatpush1.bf16.msra.mxu0 %v1853
    %2582 = vmatprep.subr.bf16.mxu0 %v1860
    %2583 = vmatpush1.bf16.msra.mxu0 %v1859
    %2584 = vmatprep.subr.bf16.mxu0 %v1866
    %2585 = vmatpush1.bf16.msra.mxu0 %v1865
    %2586 = vmatprep.subr.bf16.mxu0 %v1872
    %2587 = vmatpush1.bf16.msra.mxu0 %v1871
    %2588 = vmatprep.subr.bf16.mxu0 %v1878
    %2589 = vmatpush1.bf16.msra.mxu0 %v1877
    %2590 = vmatprep.subr.bf16.mxu0 %v1884
    %2591 = vmatpush1.bf16.msra.mxu0 %v1883
    %2592 = vmatprep.subr.bf16.mxu0 %v1890
    %2593 = vmatpush1.bf16.msra.mxu0 %v1889
    %2594 = vmatprep.mubr.bf16.mxu0 %v544
    %2595 = vmatmul.mubr.bf16.gmra.mrb[0].mxu0 %v543
    %v2596 = vpop.f32.mrb[0].mxu0
    %v2597 = vadd.f32 %v2556, %v2596
    %v2598 = vpop.f32.mrb[0].mxu0
    %v2599 = vadd.f32 %v2558, %v2598
    %v2600 = vpop.f32.mrb[0].mxu0
    %v2601 = vpop.f32.mrb[0].mxu0
    %2602 = vdwg.mxu0
    %2603 = vmatprep.subr.bf16.mxu0 %v1896
    %2604 = vmatpush1.bf16.msra.mxu0 %v1895
    %2605 = vmatprep.subr.bf16.mxu0 %v1902
    %2606 = vmatpush1.bf16.msra.mxu0 %v1901
    %2607 = vmatprep.subr.bf16.mxu0 %v1908
    %2608 = vmatpush1.bf16.msra.mxu0 %v1907
    %2609 = vmatprep.subr.bf16.mxu0 %v1914
    %2610 = vmatpush1.bf16.msra.mxu0 %v1913
    %2611 = vmatprep.subr.bf16.mxu0 %v1920
    %2612 = vmatpush1.bf16.msra.mxu0 %v1919
    %2613 = vmatprep.subr.bf16.mxu0 %v1926
    %2614 = vmatpush1.bf16.msra.mxu0 %v1925
    %2615 = vmatprep.subr.bf16.mxu0 %v1932
    %2616 = vmatpush1.bf16.msra.mxu0 %v1931
    %2617 = vmatprep.subr.bf16.mxu0 %v1938
    %2618 = vmatpush1.bf16.msra.mxu0 %v1937
    %2619 = vmatprep.subr.bf16.mxu0 %v1944
    %2620 = vmatpush1.bf16.msra.mxu0 %v1943
    %2621 = vmatprep.subr.bf16.mxu0 %v1950
    %2622 = vmatpush1.bf16.msra.mxu0 %v1949
    %2623 = vmatprep.subr.bf16.mxu0 %v1956
    %2624 = vmatpush1.bf16.msra.mxu0 %v1955
    %2625 = vmatprep.subr.bf16.mxu0 %v1962
    %2626 = vmatpush1.bf16.msra.mxu0 %v1961
    %2627 = vmatprep.subr.bf16.mxu0 %v1968
    %2628 = vmatpush1.bf16.msra.mxu0 %v1967
    %2629 = vmatprep.subr.bf16.mxu0 %v1974
    %2630 = vmatpush1.bf16.msra.mxu0 %v1973
    %2631 = vmatprep.subr.bf16.mxu0 %v1980
    %2632 = vmatpush1.bf16.msra.mxu0 %v1979
    %2633 = vmatprep.subr.bf16.mxu0 %v1986
    %2634 = vmatpush1.bf16.msra.mxu0 %v1985
    %2635 = vmatprep.mubr.bf16.mxu0 %v546
    %2636 = vmatmul.mubr.bf16.gmra.mrb[0].mxu0 %v545
    %v2637 = vpop.f32.mrb[0].mxu0
    %v2638 = vadd.f32 %v2597, %v2637
    %v2639 = vpop.f32.mrb[0].mxu0
    %v2640 = vadd.f32 %v2599, %v2639
    %v2641 = vpop.f32.mrb[0].mxu0
    %v2642 = vpop.f32.mrb[0].mxu0
    %2643 = vdwg.mxu0
    %v2932 = vunpack.c.l.b16 %v218
    %v2933 = vunpack.c.h.b16 %v218
    %v2934 = vunpack.c.l.b16 %v219
    %v2935 = vunpack.c.h.b16 %v219
    %v2936 = vunpack.c.l.b16 %v220
    %v2937 = vunpack.c.h.b16 %v220
    %v2938 = vunpack.c.l.b16 %v221
    %v2939 = vunpack.c.h.b16 %v221
    %v2940 = vunpack.c.l.b16 %v222
    %v2941 = vunpack.c.h.b16 %v222
    %v2942 = vunpack.c.l.b16 %v223
    %v2943 = vunpack.c.h.b16 %v223
    %v2944 = vunpack.c.l.b16 %v224
    %v2945 = vunpack.c.h.b16 %v224
    %v2946 = vunpack.c.l.b16 %v225
    %v2947 = vunpack.c.h.b16 %v225
    %v2948 = vunpack.c.l.b16 %v226
    %v2949 = vunpack.c.h.b16 %v226
    %v2950 = vunpack.c.l.b16 %v227
    %v2951 = vunpack.c.h.b16 %v227
    %v2952 = vunpack.c.l.b16 %v228
    %v2953 = vunpack.c.h.b16 %v228
    %v2954 = vunpack.c.l.b16 %v229
    %v2955 = vunpack.c.h.b16 %v229
    %v2956 = vunpack.c.l.b16 %v230
    %v2957 = vunpack.c.h.b16 %v230
    %v2958 = vunpack.c.l.b16 %v231
    %v2959 = vunpack.c.h.b16 %v231
    %v2960 = vunpack.c.l.b16 %v232
    %v2961 = vunpack.c.h.b16 %v232
    %v2962 = vunpack.c.l.b16 %v233
    %v2963 = vunpack.c.h.b16 %v233
    %v2964 = vunpack.c.l.b16 %v234
    %v2965 = vunpack.c.h.b16 %v234
    %v2966 = vunpack.c.l.b16 %v235
    %v2967 = vunpack.c.h.b16 %v235
    %v2968 = vunpack.c.l.b16 %v236
    %v2969 = vunpack.c.h.b16 %v236
    %v2970 = vunpack.c.l.b16 %v237
    %v2971 = vunpack.c.h.b16 %v237
    %v2972 = vunpack.c.l.b16 %v238
    %v2973 = vunpack.c.h.b16 %v238
    %v2974 = vunpack.c.l.b16 %v239
    %v2975 = vunpack.c.h.b16 %v239
    %v2976 = vunpack.c.l.b16 %v240
    %v2977 = vunpack.c.h.b16 %v240
    %v2978 = vunpack.c.l.b16 %v241
    %v2979 = vunpack.c.h.b16 %v241
    %v2980 = vunpack.c.l.b16 %v242
    %v2981 = vunpack.c.h.b16 %v242
    %v2982 = vunpack.c.l.b16 %v243
    %v2983 = vunpack.c.h.b16 %v243
    %v2984 = vunpack.c.l.b16 %v244
    %v2985 = vunpack.c.h.b16 %v244
    %v2986 = vunpack.c.l.b16 %v245
    %v2987 = vunpack.c.h.b16 %v245
    %v2988 = vunpack.c.l.b16 %v246
    %v2989 = vunpack.c.h.b16 %v246
    %v2990 = vunpack.c.l.b16 %v247
    %v2991 = vunpack.c.h.b16 %v247
    %v2992 = vunpack.c.l.b16 %v248
    %v2993 = vunpack.c.h.b16 %v248
    %v2994 = vunpack.c.l.b16 %v249
    %v2995 = vunpack.c.h.b16 %v249
    %v2996 = vunpack.c.l.b16 %v250
    %v2997 = vunpack.c.h.b16 %v250
    %v2998 = vunpack.c.l.b16 %v251
    %v2999 = vunpack.c.h.b16 %v251
    %v3000 = vunpack.c.l.b16 %v252
    %v3001 = vunpack.c.h.b16 %v252
    %v3002 = vunpack.c.l.b16 %v253
    %v3003 = vunpack.c.h.b16 %v253
    %v3004 = vunpack.c.l.b16 %v254
    %v3005 = vunpack.c.h.b16 %v254
    %v3006 = vunpack.c.l.b16 %v255
    %v3007 = vunpack.c.h.b16 %v255
    %v3008 = vunpack.c.l.b16 %v256
    %v3009 = vunpack.c.h.b16 %v256
    %v3010 = vunpack.c.l.b16 %v257
    %v3011 = vunpack.c.h.b16 %v257
    %v3012 = vunpack.c.l.b16 %v258
    %v3013 = vunpack.c.h.b16 %v258
    %v3014 = vunpack.c.l.b16 %v259
    %v3015 = vunpack.c.h.b16 %v259
    %v3016 = vunpack.c.l.b16 %v260
    %v3017 = vunpack.c.h.b16 %v260
    %v3018 = vunpack.c.l.b16 %v261
    %v3019 = vunpack.c.h.b16 %v261
    %v3020 = vunpack.c.l.b16 %v262
    %v3021 = vunpack.c.h.b16 %v262
    %v3022 = vunpack.c.l.b16 %v263
    %v3023 = vunpack.c.h.b16 %v263
    %v3024 = vunpack.c.l.b16 %v264
    %v3025 = vunpack.c.h.b16 %v264
    %v3026 = vunpack.c.l.b16 %v265
    %v3027 = vunpack.c.h.b16 %v265
    %v3028 = vunpack.c.l.b16 %v266
    %v3029 = vunpack.c.h.b16 %v266
    %v3030 = vunpack.c.l.b16 %v267
    %v3031 = vunpack.c.h.b16 %v267
    %v3032 = vunpack.c.l.b16 %v268
    %v3033 = vunpack.c.h.b16 %v268
    %v3034 = vunpack.c.l.b16 %v269
    %v3035 = vunpack.c.h.b16 %v269
    %v3036 = vunpack.c.l.b16 %v270
    %v3037 = vunpack.c.h.b16 %v270
    %v3038 = vunpack.c.l.b16 %v271
    %v3039 = vunpack.c.h.b16 %v271
    %v3040 = vunpack.c.l.b16 %v272
    %v3041 = vunpack.c.h.b16 %v272
    %v3042 = vunpack.c.l.b16 %v273
    %v3043 = vunpack.c.h.b16 %v273
    %v3044 = vunpack.c.l.b16 %v274
    %v3045 = vunpack.c.h.b16 %v274
    %v3046 = vunpack.c.l.b16 %v275
    %v3047 = vunpack.c.h.b16 %v275
    %v3048 = vunpack.c.l.b16 %v276
    %v3049 = vunpack.c.h.b16 %v276
    %v3050 = vunpack.c.l.b16 %v277
    %v3051 = vunpack.c.h.b16 %v277
    %v3052 = vunpack.c.l.b16 %v278
    %v3053 = vunpack.c.h.b16 %v278
    %v3054 = vunpack.c.l.b16 %v279
    %v3055 = vunpack.c.h.b16 %v279
    %v3056 = vunpack.c.l.b16 %v280
    %v3057 = vunpack.c.h.b16 %v280
    %v3058 = vunpack.c.l.b16 %v281
    %v3059 = vunpack.c.h.b16 %v281
    %v3060 = vunpack.c.l.b16 %v282
    %v3061 = vunpack.c.h.b16 %v282
    %v3062 = vunpack.c.l.b16 %v283
    %v3063 = vunpack.c.h.b16 %v283
    %v3064 = vunpack.c.l.b16 %v284
    %v3065 = vunpack.c.h.b16 %v284
    %v3066 = vunpack.c.l.b16 %v285
    %v3067 = vunpack.c.h.b16 %v285
    %v3068 = vunpack.c.l.b16 %v286
    %v3069 = vunpack.c.h.b16 %v286
    %v3070 = vunpack.c.l.b16 %v287
    %v3071 = vunpack.c.h.b16 %v287
    %v3072 = vunpack.c.l.b16 %v288
    %v3073 = vunpack.c.h.b16 %v288
    %v3074 = vunpack.c.l.b16 %v289
    %v3075 = vunpack.c.h.b16 %v289
    %v3076 = vunpack.c.l.b16 %v290
    %v3077 = vunpack.c.h.b16 %v290
    %v3078 = vunpack.c.l.b16 %v291
    %v3079 = vunpack.c.h.b16 %v291
    %v3080 = vunpack.c.l.b16 %v292
    %v3081 = vunpack.c.h.b16 %v292
    %v3082 = vunpack.c.l.b16 %v293
    %v3083 = vunpack.c.h.b16 %v293
    %v3084 = vunpack.c.l.b16 %v294
    %v3085 = vunpack.c.h.b16 %v294
    %v3086 = vunpack.c.l.b16 %v295
    %v3087 = vunpack.c.h.b16 %v295
    %v3088 = vunpack.c.l.b16 %v296
    %v3089 = vunpack.c.h.b16 %v296
    %v3090 = vunpack.c.l.b16 %v297
    %v3091 = vunpack.c.h.b16 %v297
    %v3092 = vunpack.c.l.b16 %v298
    %v3093 = vunpack.c.h.b16 %v298
    %v3094 = vunpack.c.l.b16 %v299
    %v3095 = vunpack.c.h.b16 %v299
    %v3096 = vunpack.c.l.b16 %v300
    %v3097 = vunpack.c.h.b16 %v300
    %v3098 = vunpack.c.l.b16 %v301
    %v3099 = vunpack.c.h.b16 %v301
    %v3100 = vunpack.c.l.b16 %v302
    %v3101 = vunpack.c.h.b16 %v302
    %v3102 = vunpack.c.l.b16 %v303
    %v3103 = vunpack.c.h.b16 %v303
    %v3104 = vunpack.c.l.b16 %v304
    %v3105 = vunpack.c.h.b16 %v304
    %v3106 = vunpack.c.l.b16 %v305
    %v3107 = vunpack.c.h.b16 %v305
    %v3108 = vunpack.c.l.b16 %v306
    %v3109 = vunpack.c.h.b16 %v306
    %v3110 = vunpack.c.l.b16 %v307
    %v3111 = vunpack.c.h.b16 %v307
    %v3112 = vunpack.c.l.b16 %v308
    %v3113 = vunpack.c.h.b16 %v308
    %v3114 = vunpack.c.l.b16 %v309
    %v3115 = vunpack.c.h.b16 %v309
    %v3116 = vunpack.c.l.b16 %v310
    %v3117 = vunpack.c.h.b16 %v310
    %v3118 = vunpack.c.l.b16 %v311
    %v3119 = vunpack.c.h.b16 %v311
    %v3120 = vunpack.c.l.b16 %v312
    %v3121 = vunpack.c.h.b16 %v312
    %v3122 = vunpack.c.l.b16 %v313
    %v3123 = vunpack.c.h.b16 %v313
    %v3124 = vunpack.c.l.b16 %v314
    %v3125 = vunpack.c.h.b16 %v314
    %v3126 = vunpack.c.l.b16 %v315
    %v3127 = vunpack.c.h.b16 %v315
    %v3128 = vunpack.c.l.b16 %v316
    %v3129 = vunpack.c.h.b16 %v316
    %v3130 = vunpack.c.l.b16 %v317
    %v3131 = vunpack.c.h.b16 %v317
    %v3132 = vunpack.c.l.b16 %v318
    %v3133 = vunpack.c.h.b16 %v318
    %v3134 = vunpack.c.l.b16 %v319
    %v3135 = vunpack.c.h.b16 %v319
    %v3136 = vunpack.c.l.b16 %v320
    %v3137 = vunpack.c.h.b16 %v320
    %v3138 = vunpack.c.l.b16 %v321
    %v3139 = vunpack.c.h.b16 %v321
    %v3140 = vunpack.c.l.b16 %v322
    %v3141 = vunpack.c.h.b16 %v322
    %v3142 = vunpack.c.l.b16 %v323
    %v3143 = vunpack.c.h.b16 %v323
    %v3144 = vunpack.c.l.b16 %v324
    %v3145 = vunpack.c.h.b16 %v324
    %v3146 = vunpack.c.l.b16 %v325
    %v3147 = vunpack.c.h.b16 %v325
    %v3148 = vunpack.c.l.b16 %v326
    %v3149 = vunpack.c.h.b16 %v326
    %v3150 = vunpack.c.l.b16 %v327
    %v3151 = vunpack.c.h.b16 %v327
    %v3152 = vunpack.c.l.b16 %v328
    %v3153 = vunpack.c.h.b16 %v328
    %v3154 = vunpack.c.l.b16 %v329
    %v3155 = vunpack.c.h.b16 %v329
    %v3156 = vunpack.c.l.b16 %v330
    %v3157 = vunpack.c.h.b16 %v330
    %v3158 = vunpack.c.l.b16 %v331
    %v3159 = vunpack.c.h.b16 %v331
    %v3160 = vunpack.c.l.b16 %v332
    %v3161 = vunpack.c.h.b16 %v332
    %v3162 = vunpack.c.l.b16 %v333
    %v3163 = vunpack.c.h.b16 %v333
    %v3164 = vunpack.c.l.b16 %v334
    %v3165 = vunpack.c.h.b16 %v334
    %v3166 = vunpack.c.l.b16 %v335
    %v3167 = vunpack.c.h.b16 %v335
    %v3168 = vunpack.c.l.b16 %v336
    %v3169 = vunpack.c.h.b16 %v336
    %v3170 = vunpack.c.l.b16 %v337
    %v3171 = vunpack.c.h.b16 %v337
    %v3172 = vunpack.c.l.b16 %v338
    %v3173 = vunpack.c.h.b16 %v338
    %v3174 = vunpack.c.l.b16 %v339
    %v3175 = vunpack.c.h.b16 %v339
    %v3176 = vunpack.c.l.b16 %v340
    %v3177 = vunpack.c.h.b16 %v340
    %v3178 = vunpack.c.l.b16 %v341
    %v3179 = vunpack.c.h.b16 %v341
    %v3180 = vunpack.c.l.b16 %v342
    %v3181 = vunpack.c.h.b16 %v342
    %v3182 = vunpack.c.l.b16 %v343
    %v3183 = vunpack.c.h.b16 %v343
    %v3184 = vunpack.c.l.b16 %v344
    %v3185 = vunpack.c.h.b16 %v344
    %v3186 = vunpack.c.l.b16 %v345
    %v3187 = vunpack.c.h.b16 %v345
    %v3188 = vunpack.c.l.b16 %v346
    %v3189 = vunpack.c.h.b16 %v346
    %v3190 = vunpack.c.l.b16 %v347
    %v3191 = vunpack.c.h.b16 %v347
    %v3192 = vunpack.c.l.b16 %v348
    %v3193 = vunpack.c.h.b16 %v348
    %v3194 = vunpack.c.l.b16 %v349
    %v3195 = vunpack.c.h.b16 %v349
    %v3196 = vunpack.c.l.b16 %v350
    %v3197 = vunpack.c.h.b16 %v350
    %v3198 = vunpack.c.l.b16 %v351
    %v3199 = vunpack.c.h.b16 %v351
    %v3200 = vunpack.c.l.b16 %v352
    %v3201 = vunpack.c.h.b16 %v352
    %v3202 = vunpack.c.l.b16 %v353
    %v3203 = vunpack.c.h.b16 %v353
    %v3204 = vunpack.c.l.b16 %v354
    %v3205 = vunpack.c.h.b16 %v354
    %v3206 = vunpack.c.l.b16 %v355
    %v3207 = vunpack.c.h.b16 %v355
    %v3208 = vunpack.c.l.b16 %v356
    %v3209 = vunpack.c.h.b16 %v356
    %v3210 = vunpack.c.l.b16 %v357
    %v3211 = vunpack.c.h.b16 %v357
    %v3212 = vunpack.c.l.b16 %v358
    %v3213 = vunpack.c.h.b16 %v358
    %v3214 = vunpack.c.l.b16 %v359
    %v3215 = vunpack.c.h.b16 %v359
    %v3216 = vunpack.c.l.b16 %v360
    %v3217 = vunpack.c.h.b16 %v360
    %v3218 = vunpack.c.l.b16 %v361
    %v3219 = vunpack.c.h.b16 %v361
    %v3220 = vunpack.c.l.b16 %v362
    %v3221 = vunpack.c.h.b16 %v362
    %v3222 = vunpack.c.l.b16 %v363
    %v3223 = vunpack.c.h.b16 %v363
    %v3224 = vunpack.c.l.b16 %v364
    %v3225 = vunpack.c.h.b16 %v364
    %v3226 = vunpack.c.l.b16 %v365
    %v3227 = vunpack.c.h.b16 %v365
    %v3228 = vunpack.c.l.b16 %v366
    %v3229 = vunpack.c.h.b16 %v366
    %v3230 = vunpack.c.l.b16 %v367
    %v3231 = vunpack.c.h.b16 %v367
    %v3232 = vunpack.c.l.b16 %v368
    %v3233 = vunpack.c.h.b16 %v368
    %v3234 = vunpack.c.l.b16 %v369
    %v3235 = vunpack.c.h.b16 %v369
    %v3236 = vunpack.c.l.b16 %v370
    %v3237 = vunpack.c.h.b16 %v370
    %v3238 = vunpack.c.l.b16 %v371
    %v3239 = vunpack.c.h.b16 %v371
    %v3240 = vunpack.c.l.b16 %v372
    %v3241 = vunpack.c.h.b16 %v372
    %v3242 = vunpack.c.l.b16 %v373
    %v3243 = vunpack.c.h.b16 %v373
    %v3244 = vunpack.c.l.b16 %v374
    %v3245 = vunpack.c.h.b16 %v374
    %v3246 = vunpack.c.l.b16 %v375
    %v3247 = vunpack.c.h.b16 %v375
    %v3248 = vunpack.c.l.b16 %v376
    %v3249 = vunpack.c.h.b16 %v376
    %v3250 = vunpack.c.l.b16 %v377
    %v3251 = vunpack.c.h.b16 %v377
    %v3252 = vunpack.c.l.b16 %v378
    %v3253 = vunpack.c.h.b16 %v378
    %v3254 = vunpack.c.l.b16 %v379
    %v3255 = vunpack.c.h.b16 %v379
    %v3256 = vunpack.c.l.b16 %v380
    %v3257 = vunpack.c.h.b16 %v380
    %v3258 = vunpack.c.l.b16 %v381
    %v3259 = vunpack.c.h.b16 %v381
    %v3260 = vunpack.c.l.b16 %v382
    %v3261 = vunpack.c.h.b16 %v382
    %v3262 = vunpack.c.l.b16 %v383
    %v3263 = vunpack.c.h.b16 %v383
    %v3264 = vunpack.c.l.b16 %v384
    %v3265 = vunpack.c.h.b16 %v384
    %v3266 = vunpack.c.l.b16 %v385
    %v3267 = vunpack.c.h.b16 %v385
    %v3268 = vunpack.c.l.b16 %v386
    %v3269 = vunpack.c.h.b16 %v386
    %v3270 = vunpack.c.l.b16 %v387
    %v3271 = vunpack.c.h.b16 %v387
    %v3272 = vunpack.c.l.b16 %v388
    %v3273 = vunpack.c.h.b16 %v388
    %v3274 = vunpack.c.l.b16 %v389
    %v3275 = vunpack.c.h.b16 %v389
    %v3276 = vunpack.c.l.b16 %v390
    %v3277 = vunpack.c.h.b16 %v390
    %v3278 = vunpack.c.l.b16 %v391
    %v3279 = vunpack.c.h.b16 %v391
    %v3280 = vunpack.c.l.b16 %v392
    %v3281 = vunpack.c.h.b16 %v392
    %v3282 = vunpack.c.l.b16 %v393
    %v3283 = vunpack.c.h.b16 %v393
    %v3284 = vunpack.c.l.b16 %v394
    %v3285 = vunpack.c.h.b16 %v394
    %v3286 = vunpack.c.l.b16 %v395
    %v3287 = vunpack.c.h.b16 %v395
    %v3288 = vunpack.c.l.b16 %v396
    %v3289 = vunpack.c.h.b16 %v396
    %v3290 = vunpack.c.l.b16 %v397
    %v3291 = vunpack.c.h.b16 %v397
    %v3292 = vunpack.c.l.b16 %v398
    %v3293 = vunpack.c.h.b16 %v398
    %v3294 = vunpack.c.l.b16 %v399
    %v3295 = vunpack.c.h.b16 %v399
    %v3296 = vunpack.c.l.b16 %v400
    %v3297 = vunpack.c.h.b16 %v400
    %v3298 = vunpack.c.l.b16 %v401
    %v3299 = vunpack.c.h.b16 %v401
    %v3300 = vunpack.c.l.b16 %v402
    %v3301 = vunpack.c.h.b16 %v402
    %v3302 = vunpack.c.l.b16 %v403
    %v3303 = vunpack.c.h.b16 %v403
    %v3304 = vunpack.c.l.b16 %v404
    %v3305 = vunpack.c.h.b16 %v404
    %v3306 = vunpack.c.l.b16 %v405
    %v3307 = vunpack.c.h.b16 %v405
    %v3308 = vunpack.c.l.b16 %v406
    %v3309 = vunpack.c.h.b16 %v406
    %v3310 = vunpack.c.l.b16 %v407
    %v3311 = vunpack.c.h.b16 %v407
    %v3312 = vunpack.c.l.b16 %v408
    %v3313 = vunpack.c.h.b16 %v408
    %v3314 = vunpack.c.l.b16 %v409
    %v3315 = vunpack.c.h.b16 %v409
    %v3316 = vunpack.c.l.b16 %v410
    %v3317 = vunpack.c.h.b16 %v410
    %v3318 = vunpack.c.l.b16 %v411
    %v3319 = vunpack.c.h.b16 %v411
    %v3320 = vunpack.c.l.b16 %v412
    %v3321 = vunpack.c.h.b16 %v412
    %v3322 = vunpack.c.l.b16 %v413
    %v3323 = vunpack.c.h.b16 %v413
    %v3324 = vunpack.c.l.b16 %v414
    %v3325 = vunpack.c.h.b16 %v414
    %v3326 = vunpack.c.l.b16 %v415
    %v3327 = vunpack.c.h.b16 %v415
    %v3328 = vunpack.c.l.b16 %v416
    %v3329 = vunpack.c.h.b16 %v416
    %v3330 = vunpack.c.l.b16 %v417
    %v3331 = vunpack.c.h.b16 %v417
    %v3332 = vunpack.c.l.b16 %v418
    %v3333 = vunpack.c.h.b16 %v418
    %v3334 = vunpack.c.l.b16 %v419
    %v3335 = vunpack.c.h.b16 %v419
    %v3336 = vunpack.c.l.b16 %v420
    %v3337 = vunpack.c.h.b16 %v420
    %v3338 = vunpack.c.l.b16 %v421
    %v3339 = vunpack.c.h.b16 %v421
    %v3340 = vunpack.c.l.b16 %v422
    %v3341 = vunpack.c.h.b16 %v422
    %v3342 = vunpack.c.l.b16 %v423
    %v3343 = vunpack.c.h.b16 %v423
    %v3344 = vunpack.c.l.b16 %v424
    %v3345 = vunpack.c.h.b16 %v424
    %v3346 = vunpack.c.l.b16 %v425
    %v3347 = vunpack.c.h.b16 %v425
    %v3348 = vunpack.c.l.b16 %v426
    %v3349 = vunpack.c.h.b16 %v426
    %v3350 = vunpack.c.l.b16 %v427
    %v3351 = vunpack.c.h.b16 %v427
    %v3352 = vunpack.c.l.b16 %v428
    %v3353 = vunpack.c.h.b16 %v428
    %v3354 = vunpack.c.l.b16 %v429
    %v3355 = vunpack.c.h.b16 %v429
    %v3356 = vunpack.c.l.b16 %v430
    %v3357 = vunpack.c.h.b16 %v430
    %v3358 = vunpack.c.l.b16 %v431
    %v3359 = vunpack.c.h.b16 %v431
    %v3360 = vunpack.c.l.b16 %v432
    %v3361 = vunpack.c.h.b16 %v432
    %v3362 = vunpack.c.l.b16 %v433
    %v3363 = vunpack.c.h.b16 %v433
    %v3364 = vunpack.c.l.b16 %v434
    %v3365 = vunpack.c.h.b16 %v434
    %v3366 = vunpack.c.l.b16 %v435
    %v3367 = vunpack.c.h.b16 %v435
    %v3368 = vunpack.c.l.b16 %v436
    %v3369 = vunpack.c.h.b16 %v436
    %v3370 = vunpack.c.l.b16 %v437
    %v3371 = vunpack.c.h.b16 %v437
    %v3372 = vunpack.c.l.b16 %v438
    %v3373 = vunpack.c.h.b16 %v438
    %v3374 = vunpack.c.l.b16 %v439
    %v3375 = vunpack.c.h.b16 %v439
    %v3376 = vunpack.c.l.b16 %v440
    %v3377 = vunpack.c.h.b16 %v440
    %v3378 = vunpack.c.l.b16 %v441
    %v3379 = vunpack.c.h.b16 %v441
    %v3380 = vunpack.c.l.b16 %v442
    %v3381 = vunpack.c.h.b16 %v442
    %v3382 = vunpack.c.l.b16 %v443
    %v3383 = vunpack.c.h.b16 %v443
    %v3384 = vunpack.c.l.b16 %v444
    %v3385 = vunpack.c.h.b16 %v444
    %v3386 = vunpack.c.l.b16 %v445
    %v3387 = vunpack.c.h.b16 %v445
    %v3388 = vunpack.c.l.b16 %v446
    %v3389 = vunpack.c.h.b16 %v446
    %v3390 = vunpack.c.l.b16 %v447
    %v3391 = vunpack.c.h.b16 %v447
    %v3392 = vunpack.c.l.b16 %v448
    %v3393 = vunpack.c.h.b16 %v448
    %v3394 = vunpack.c.l.b16 %v449
    %v3395 = vunpack.c.h.b16 %v449
    %v3396 = vunpack.c.l.b16 %v450
    %v3397 = vunpack.c.h.b16 %v450
    %v3398 = vunpack.c.l.b16 %v451
    %v3399 = vunpack.c.h.b16 %v451
    %v3400 = vunpack.c.l.b16 %v452
    %v3401 = vunpack.c.h.b16 %v452
    %v3402 = vunpack.c.l.b16 %v453
    %v3403 = vunpack.c.h.b16 %v453
    %v3404 = vunpack.c.l.b16 %v454
    %v3405 = vunpack.c.h.b16 %v454
    %v3406 = vunpack.c.l.b16 %v455
    %v3407 = vunpack.c.h.b16 %v455
    %v3408 = vunpack.c.l.b16 %v456
    %v3409 = vunpack.c.h.b16 %v456
    %v3410 = vunpack.c.l.b16 %v457
    %v3411 = vunpack.c.h.b16 %v457
    %v3412 = vunpack.c.l.b16 %v458
    %v3413 = vunpack.c.h.b16 %v458
    %v3414 = vunpack.c.l.b16 %v459
    %v3415 = vunpack.c.h.b16 %v459
    %v3416 = vunpack.c.l.b16 %v460
    %v3417 = vunpack.c.h.b16 %v460
    %v3418 = vunpack.c.l.b16 %v461
    %v3419 = vunpack.c.h.b16 %v461
    %v3420 = vunpack.c.l.b16 %v462
    %v3421 = vunpack.c.h.b16 %v462
    %v3422 = vunpack.c.l.b16 %v463
    %v3423 = vunpack.c.h.b16 %v463
    %v3424 = vunpack.c.l.b16 %v464
    %v3425 = vunpack.c.h.b16 %v464
    %v3426 = vunpack.c.l.b16 %v465
    %v3427 = vunpack.c.h.b16 %v465
    %v3428 = vunpack.c.l.b16 %v466
    %v3429 = vunpack.c.h.b16 %v466
    %v3430 = vunpack.c.l.b16 %v467
    %v3431 = vunpack.c.h.b16 %v467
    %v3432 = vunpack.c.l.b16 %v468
    %v3433 = vunpack.c.h.b16 %v468
    %v3434 = vunpack.c.l.b16 %v469
    %v3435 = vunpack.c.h.b16 %v469
    %v3436 = vunpack.c.l.b16 %v470
    %v3437 = vunpack.c.h.b16 %v470
    %v3438 = vunpack.c.l.b16 %v471
    %v3439 = vunpack.c.h.b16 %v471
    %v3440 = vunpack.c.l.b16 %v472
    %v3441 = vunpack.c.h.b16 %v472
    %v3442 = vunpack.c.l.b16 %v473
    %v3443 = vunpack.c.h.b16 %v473
    %v3444 = vunpack.c.l.b16 %v474
    %v3445 = vunpack.c.h.b16 %v474
    %v3446 = vunpack.c.l.b16 %v475
    %v3447 = vunpack.c.h.b16 %v475
    %v3448 = vunpack.c.l.b16 %v476
    %v3449 = vunpack.c.h.b16 %v476
    %v3450 = vunpack.c.l.b16 %v477
    %v3451 = vunpack.c.h.b16 %v477
    %v3452 = vunpack.c.l.b16 %v478
    %v3453 = vunpack.c.h.b16 %v478
    %v3454 = vunpack.c.l.b16 %v479
    %v3455 = vunpack.c.h.b16 %v479
    %v3456 = vunpack.c.l.b16 %v480
    %v3457 = vunpack.c.h.b16 %v480
    %v3458 = vunpack.c.l.b16 %v481
    %v3459 = vunpack.c.h.b16 %v481
    %v3460 = vunpack.c.l.b16 %v482
    %v3461 = vunpack.c.h.b16 %v482
    %v3462 = vunpack.c.l.b16 %v483
    %v3463 = vunpack.c.h.b16 %v483
    %v3464 = vunpack.c.l.b16 %v484
    %v3465 = vunpack.c.h.b16 %v484
    %v3466 = vunpack.c.l.b16 %v485
    %v3467 = vunpack.c.h.b16 %v485
    %v3468 = vunpack.c.l.b16 %v486
    %v3469 = vunpack.c.h.b16 %v486
    %v3470 = vunpack.c.l.b16 %v487
    %v3471 = vunpack.c.h.b16 %v487
    %v3472 = vunpack.c.l.b16 %v488
    %v3473 = vunpack.c.h.b16 %v488
    %v3474 = vunpack.c.l.b16 %v489
    %v3475 = vunpack.c.h.b16 %v489
    %v3476 = vunpack.c.l.b16 %v490
    %v3477 = vunpack.c.h.b16 %v490
    %v3478 = vunpack.c.l.b16 %v491
    %v3479 = vunpack.c.h.b16 %v491
    %v3480 = vunpack.c.l.b16 %v492
    %v3481 = vunpack.c.h.b16 %v492
    %v3482 = vunpack.c.l.b16 %v493
    %v3483 = vunpack.c.h.b16 %v493
    %v3484 = vunpack.c.l.b16 %v494
    %v3485 = vunpack.c.h.b16 %v494
    %v3486 = vunpack.c.l.b16 %v495
    %v3487 = vunpack.c.h.b16 %v495
    %v3488 = vunpack.c.l.b16 %v496
    %v3489 = vunpack.c.h.b16 %v496
    %v3490 = vunpack.c.l.b16 %v497
    %v3491 = vunpack.c.h.b16 %v497
    %v3492 = vunpack.c.l.b16 %v498
    %v3493 = vunpack.c.h.b16 %v498
    %v3494 = vunpack.c.l.b16 %v499
    %v3495 = vunpack.c.h.b16 %v499
    %v3496 = vunpack.c.l.b16 %v500
    %v3497 = vunpack.c.h.b16 %v500
    %v3498 = vunpack.c.l.b16 %v501
    %v3499 = vunpack.c.h.b16 %v501
    %v3500 = vunpack.c.l.b16 %v502
    %v3501 = vunpack.c.h.b16 %v502
    %v3502 = vunpack.c.l.b16 %v503
    %v3503 = vunpack.c.h.b16 %v503
    %v3504 = vunpack.c.l.b16 %v504
    %v3505 = vunpack.c.h.b16 %v504
    %v3506 = vunpack.c.l.b16 %v505
    %v3507 = vunpack.c.h.b16 %v505
    %v3508 = vpack.c.b16 %v2938, %v2932
    %v3509 = vpack.c.b16 %v2939, %v2933
    %v3510 = vpack.c.b16 %v2940, %v2934
    %v3511 = vpack.c.b16 %v2941, %v2935
    %v3512 = vpack.c.b16 %v2942, %v2936
    %v3513 = vpack.c.b16 %v2943, %v2937
    %v3514 = vpack.c.b16 %v2950, %v2944
    %v3515 = vpack.c.b16 %v2951, %v2945
    %v3516 = vpack.c.b16 %v2952, %v2946
    %v3517 = vpack.c.b16 %v2953, %v2947
    %v3518 = vpack.c.b16 %v2954, %v2948
    %v3519 = vpack.c.b16 %v2955, %v2949
    %v3520 = vpack.c.b16 %v2962, %v2956
    %v3521 = vpack.c.b16 %v2963, %v2957
    %v3522 = vpack.c.b16 %v2964, %v2958
    %v3523 = vpack.c.b16 %v2965, %v2959
    %v3524 = vpack.c.b16 %v2966, %v2960
    %v3525 = vpack.c.b16 %v2967, %v2961
    %v3526 = vpack.c.b16 %v2974, %v2968
    %v3527 = vpack.c.b16 %v2975, %v2969
    %v3528 = vpack.c.b16 %v2976, %v2970
    %v3529 = vpack.c.b16 %v2977, %v2971
    %v3530 = vpack.c.b16 %v2978, %v2972
    %v3531 = vpack.c.b16 %v2979, %v2973
    %v3532 = vpack.c.b16 %v2986, %v2980
    %v3533 = vpack.c.b16 %v2987, %v2981
    %v3534 = vpack.c.b16 %v2988, %v2982
    %v3535 = vpack.c.b16 %v2989, %v2983
    %v3536 = vpack.c.b16 %v2990, %v2984
    %v3537 = vpack.c.b16 %v2991, %v2985
    %v3538 = vpack.c.b16 %v2998, %v2992
    %v3539 = vpack.c.b16 %v2999, %v2993
    %v3540 = vpack.c.b16 %v3000, %v2994
    %v3541 = vpack.c.b16 %v3001, %v2995
    %v3542 = vpack.c.b16 %v3002, %v2996
    %v3543 = vpack.c.b16 %v3003, %v2997
    %v3544 = vpack.c.b16 %v3010, %v3004
    %v3545 = vpack.c.b16 %v3011, %v3005
    %v3546 = vpack.c.b16 %v3012, %v3006
    %v3547 = vpack.c.b16 %v3013, %v3007
    %v3548 = vpack.c.b16 %v3014, %v3008
    %v3549 = vpack.c.b16 %v3015, %v3009
    %v3550 = vpack.c.b16 %v3022, %v3016
    %v3551 = vpack.c.b16 %v3023, %v3017
    %v3552 = vpack.c.b16 %v3024, %v3018
    %v3553 = vpack.c.b16 %v3025, %v3019
    %v3554 = vpack.c.b16 %v3026, %v3020
    %v3555 = vpack.c.b16 %v3027, %v3021
    %v3556 = vpack.c.b16 %v3034, %v3028
    %v3557 = vpack.c.b16 %v3035, %v3029
    %v3558 = vpack.c.b16 %v3036, %v3030
    %v3559 = vpack.c.b16 %v3037, %v3031
    %v3560 = vpack.c.b16 %v3038, %v3032
    %v3561 = vpack.c.b16 %v3039, %v3033
    %v3562 = vpack.c.b16 %v3046, %v3040
    %v3563 = vpack.c.b16 %v3047, %v3041
    %v3564 = vpack.c.b16 %v3048, %v3042
    %v3565 = vpack.c.b16 %v3049, %v3043
    %v3566 = vpack.c.b16 %v3050, %v3044
    %v3567 = vpack.c.b16 %v3051, %v3045
    %v3568 = vpack.c.b16 %v3058, %v3052
    %v3569 = vpack.c.b16 %v3059, %v3053
    %v3570 = vpack.c.b16 %v3060, %v3054
    %v3571 = vpack.c.b16 %v3061, %v3055
    %v3572 = vpack.c.b16 %v3062, %v3056
    %v3573 = vpack.c.b16 %v3063, %v3057
    %v3574 = vpack.c.b16 %v3070, %v3064
    %v3575 = vpack.c.b16 %v3071, %v3065
    %v3576 = vpack.c.b16 %v3072, %v3066
    %v3577 = vpack.c.b16 %v3073, %v3067
    %v3578 = vpack.c.b16 %v3074, %v3068
    %v3579 = vpack.c.b16 %v3075, %v3069
    %v3580 = vpack.c.b16 %v3082, %v3076
    %v3581 = vpack.c.b16 %v3083, %v3077
    %v3582 = vpack.c.b16 %v3084, %v3078
    %v3583 = vpack.c.b16 %v3085, %v3079
    %v3584 = vpack.c.b16 %v3086, %v3080
    %v3585 = vpack.c.b16 %v3087, %v3081
    %v3586 = vpack.c.b16 %v3094, %v3088
    %v3587 = vpack.c.b16 %v3095, %v3089
    %v3588 = vpack.c.b16 %v3096, %v3090
    %v3589 = vpack.c.b16 %v3097, %v3091
    %v3590 = vpack.c.b16 %v3098, %v3092
    %v3591 = vpack.c.b16 %v3099, %v3093
    %v3592 = vpack.c.b16 %v3106, %v3100
    %v3593 = vpack.c.b16 %v3107, %v3101
    %v3594 = vpack.c.b16 %v3108, %v3102
    %v3595 = vpack.c.b16 %v3109, %v3103
    %v3596 = vpack.c.b16 %v3110, %v3104
    %v3597 = vpack.c.b16 %v3111, %v3105
    %v3598 = vpack.c.b16 %v3118, %v3112
    %v3599 = vpack.c.b16 %v3119, %v3113
    %v3600 = vpack.c.b16 %v3120, %v3114
    %v3601 = vpack.c.b16 %v3121, %v3115
    %v3602 = vpack.c.b16 %v3122, %v3116
    %v3603 = vpack.c.b16 %v3123, %v3117
    %v3604 = vpack.c.b16 %v3130, %v3124
    %v3605 = vpack.c.b16 %v3131, %v3125
    %v3606 = vpack.c.b16 %v3132, %v3126
    %v3607 = vpack.c.b16 %v3133, %v3127
    %v3608 = vpack.c.b16 %v3134, %v3128
    %v3609 = vpack.c.b16 %v3135, %v3129
    %v3610 = vpack.c.b16 %v3142, %v3136
    %v3611 = vpack.c.b16 %v3143, %v3137
    %v3612 = vpack.c.b16 %v3144, %v3138
    %v3613 = vpack.c.b16 %v3145, %v3139
    %v3614 = vpack.c.b16 %v3146, %v3140
    %v3615 = vpack.c.b16 %v3147, %v3141
    %v3616 = vpack.c.b16 %v3154, %v3148
    %v3617 = vpack.c.b16 %v3155, %v3149
    %v3618 = vpack.c.b16 %v3156, %v3150
    %v3619 = vpack.c.b16 %v3157, %v3151
    %v3620 = vpack.c.b16 %v3158, %v3152
    %v3621 = vpack.c.b16 %v3159, %v3153
    %v3622 = vpack.c.b16 %v3166, %v3160
    %v3623 = vpack.c.b16 %v3167, %v3161
    %v3624 = vpack.c.b16 %v3168, %v3162
    %v3625 = vpack.c.b16 %v3169, %v3163
    %v3626 = vpack.c.b16 %v3170, %v3164
    %v3627 = vpack.c.b16 %v3171, %v3165
    %v3628 = vpack.c.b16 %v3178, %v3172
    %v3629 = vpack.c.b16 %v3179, %v3173
    %v3630 = vpack.c.b16 %v3180, %v3174
    %v3631 = vpack.c.b16 %v3181, %v3175
    %v3632 = vpack.c.b16 %v3182, %v3176
    %v3633 = vpack.c.b16 %v3183, %v3177
    %v3634 = vpack.c.b16 %v3190, %v3184
    %v3635 = vpack.c.b16 %v3191, %v3185
    %v3636 = vpack.c.b16 %v3192, %v3186
    %v3637 = vpack.c.b16 %v3193, %v3187
    %v3638 = vpack.c.b16 %v3194, %v3188
    %v3639 = vpack.c.b16 %v3195, %v3189
    %v3640 = vpack.c.b16 %v3202, %v3196
    %v3641 = vpack.c.b16 %v3203, %v3197
    %v3642 = vpack.c.b16 %v3204, %v3198
    %v3643 = vpack.c.b16 %v3205, %v3199
    %v3644 = vpack.c.b16 %v3206, %v3200
    %v3645 = vpack.c.b16 %v3207, %v3201
    %v3646 = vpack.c.b16 %v3214, %v3208
    %v3647 = vpack.c.b16 %v3215, %v3209
    %v3648 = vpack.c.b16 %v3216, %v3210
    %v3649 = vpack.c.b16 %v3217, %v3211
    %v3650 = vpack.c.b16 %v3218, %v3212
    %v3651 = vpack.c.b16 %v3219, %v3213
    %v3652 = vpack.c.b16 %v3226, %v3220
    %v3653 = vpack.c.b16 %v3227, %v3221
    %v3654 = vpack.c.b16 %v3228, %v3222
    %v3655 = vpack.c.b16 %v3229, %v3223
    %v3656 = vpack.c.b16 %v3230, %v3224
    %v3657 = vpack.c.b16 %v3231, %v3225
    %v3658 = vpack.c.b16 %v3238, %v3232
    %v3659 = vpack.c.b16 %v3239, %v3233
    %v3660 = vpack.c.b16 %v3240, %v3234
    %v3661 = vpack.c.b16 %v3241, %v3235
    %v3662 = vpack.c.b16 %v3242, %v3236
    %v3663 = vpack.c.b16 %v3243, %v3237
    %v3664 = vpack.c.b16 %v3250, %v3244
    %v3665 = vpack.c.b16 %v3251, %v3245
    %v3666 = vpack.c.b16 %v3252, %v3246
    %v3667 = vpack.c.b16 %v3253, %v3247
    %v3668 = vpack.c.b16 %v3254, %v3248
    %v3669 = vpack.c.b16 %v3255, %v3249
    %v3670 = vpack.c.b16 %v3262, %v3256
    %v3671 = vpack.c.b16 %v3263, %v3257
    %v3672 = vpack.c.b16 %v3264, %v3258
    %v3673 = vpack.c.b16 %v3265, %v3259
    %v3674 = vpack.c.b16 %v3266, %v3260
    %v3675 = vpack.c.b16 %v3267, %v3261
    %v3676 = vpack.c.b16 %v3274, %v3268
    %v3677 = vpack.c.b16 %v3275, %v3269
    %v3678 = vpack.c.b16 %v3276, %v3270
    %v3679 = vpack.c.b16 %v3277, %v3271
    %v3680 = vpack.c.b16 %v3278, %v3272
    %v3681 = vpack.c.b16 %v3279, %v3273
    %v3682 = vpack.c.b16 %v3286, %v3280
    %v3683 = vpack.c.b16 %v3287, %v3281
    %v3684 = vpack.c.b16 %v3288, %v3282
    %v3685 = vpack.c.b16 %v3289, %v3283
    %v3686 = vpack.c.b16 %v3290, %v3284
    %v3687 = vpack.c.b16 %v3291, %v3285
    %v3688 = vpack.c.b16 %v3298, %v3292
    %v3689 = vpack.c.b16 %v3299, %v3293
    %v3690 = vpack.c.b16 %v3300, %v3294
    %v3691 = vpack.c.b16 %v3301, %v3295
    %v3692 = vpack.c.b16 %v3302, %v3296
    %v3693 = vpack.c.b16 %v3303, %v3297
    %v3694 = vpack.c.b16 %v3310, %v3304
    %v3695 = vpack.c.b16 %v3311, %v3305
    %v3696 = vpack.c.b16 %v3312, %v3306
    %v3697 = vpack.c.b16 %v3313, %v3307
    %v3698 = vpack.c.b16 %v3314, %v3308
    %v3699 = vpack.c.b16 %v3315, %v3309
    %v3700 = vpack.c.b16 %v3322, %v3316
    %v3701 = vpack.c.b16 %v3323, %v3317
    %v3702 = vpack.c.b16 %v3324, %v3318
    %v3703 = vpack.c.b16 %v3325, %v3319
    %v3704 = vpack.c.b16 %v3326, %v3320
    %v3705 = vpack.c.b16 %v3327, %v3321
    %v3706 = vpack.c.b16 %v3334, %v3328
    %v3707 = vpack.c.b16 %v3335, %v3329
    %v3708 = vpack.c.b16 %v3336, %v3330
    %v3709 = vpack.c.b16 %v3337, %v3331
    %v3710 = vpack.c.b16 %v3338, %v3332
    %v3711 = vpack.c.b16 %v3339, %v3333
    %v3712 = vpack.c.b16 %v3346, %v3340
    %v3713 = vpack.c.b16 %v3347, %v3341
    %v3714 = vpack.c.b16 %v3348, %v3342
    %v3715 = vpack.c.b16 %v3349, %v3343
    %v3716 = vpack.c.b16 %v3350, %v3344
    %v3717 = vpack.c.b16 %v3351, %v3345
    %v3718 = vpack.c.b16 %v3358, %v3352
    %v3719 = vpack.c.b16 %v3359, %v3353
    %v3720 = vpack.c.b16 %v3360, %v3354
    %v3721 = vpack.c.b16 %v3361, %v3355
    %v3722 = vpack.c.b16 %v3362, %v3356
    %v3723 = vpack.c.b16 %v3363, %v3357
    %v3724 = vpack.c.b16 %v3370, %v3364
    %v3725 = vpack.c.b16 %v3371, %v3365
    %v3726 = vpack.c.b16 %v3372, %v3366
    %v3727 = vpack.c.b16 %v3373, %v3367
    %v3728 = vpack.c.b16 %v3374, %v3368
    %v3729 = vpack.c.b16 %v3375, %v3369
    %v3730 = vpack.c.b16 %v3382, %v3376
    %v3731 = vpack.c.b16 %v3383, %v3377
    %v3732 = vpack.c.b16 %v3384, %v3378
    %v3733 = vpack.c.b16 %v3385, %v3379
    %v3734 = vpack.c.b16 %v3386, %v3380
    %v3735 = vpack.c.b16 %v3387, %v3381
    %v3736 = vpack.c.b16 %v3394, %v3388
    %v3737 = vpack.c.b16 %v3395, %v3389
    %v3738 = vpack.c.b16 %v3396, %v3390
    %v3739 = vpack.c.b16 %v3397, %v3391
    %v3740 = vpack.c.b16 %v3398, %v3392
    %v3741 = vpack.c.b16 %v3399, %v3393
    %v3742 = vpack.c.b16 %v3406, %v3400
    %v3743 = vpack.c.b16 %v3407, %v3401
    %v3744 = vpack.c.b16 %v3408, %v3402
    %v3745 = vpack.c.b16 %v3409, %v3403
    %v3746 = vpack.c.b16 %v3410, %v3404
    %v3747 = vpack.c.b16 %v3411, %v3405
    %v3748 = vpack.c.b16 %v3418, %v3412
    %v3749 = vpack.c.b16 %v3419, %v3413
    %v3750 = vpack.c.b16 %v3420, %v3414
    %v3751 = vpack.c.b16 %v3421, %v3415
    %v3752 = vpack.c.b16 %v3422, %v3416
    %v3753 = vpack.c.b16 %v3423, %v3417
    %v3754 = vpack.c.b16 %v3430, %v3424
    %v3755 = vpack.c.b16 %v3431, %v3425
    %v3756 = vpack.c.b16 %v3432, %v3426
    %v3757 = vpack.c.b16 %v3433, %v3427
    %v3758 = vpack.c.b16 %v3434, %v3428
    %v3759 = vpack.c.b16 %v3435, %v3429
    %v3760 = vpack.c.b16 %v3442, %v3436
    %v3761 = vpack.c.b16 %v3443, %v3437
    %v3762 = vpack.c.b16 %v3444, %v3438
    %v3763 = vpack.c.b16 %v3445, %v3439
    %v3764 = vpack.c.b16 %v3446, %v3440
    %v3765 = vpack.c.b16 %v3447, %v3441
    %v3766 = vpack.c.b16 %v3454, %v3448
    %v3767 = vpack.c.b16 %v3455, %v3449
    %v3768 = vpack.c.b16 %v3456, %v3450
    %v3769 = vpack.c.b16 %v3457, %v3451
    %v3770 = vpack.c.b16 %v3458, %v3452
    %v3771 = vpack.c.b16 %v3459, %v3453
    %v3772 = vpack.c.b16 %v3466, %v3460
    %v3773 = vpack.c.b16 %v3467, %v3461
    %v3774 = vpack.c.b16 %v3468, %v3462
    %v3775 = vpack.c.b16 %v3469, %v3463
    %v3776 = vpack.c.b16 %v3470, %v3464
    %v3777 = vpack.c.b16 %v3471, %v3465
    %v3778 = vpack.c.b16 %v3478, %v3472
    %v3779 = vpack.c.b16 %v3479, %v3473
    %v3780 = vpack.c.b16 %v3480, %v3474
    %v3781 = vpack.c.b16 %v3481, %v3475
    %v3782 = vpack.c.b16 %v3482, %v3476
    %v3783 = vpack.c.b16 %v3483, %v3477
    %v3784 = vpack.c.b16 %v3490, %v3484
    %v3785 = vpack.c.b16 %v3491, %v3485
    %v3786 = vpack.c.b16 %v3492, %v3486
    %v3787 = vpack.c.b16 %v3493, %v3487
    %v3788 = vpack.c.b16 %v3494, %v3488
    %v3789 = vpack.c.b16 %v3495, %v3489
    %v3790 = vpack.c.b16 %v3502, %v3496
    %v3791 = vpack.c.b16 %v3503, %v3497
    %v3792 = vpack.c.b16 %v3504, %v3498
    %v3793 = vpack.c.b16 %v3505, %v3499
    %v3794 = vpack.c.b16 %v3506, %v3500
    %v3795 = vpack.c.b16 %v3507, %v3501
    %4084 = vmatprep.subr.bf16.mxu0 %v3509
    %4085 = vmatpush1.bf16.msra.mxu0 %v3508
    %4086 = vmatprep.subr.bf16.mxu0 %v3515
    %4087 = vmatpush1.bf16.msra.mxu0 %v3514
    %4088 = vmatprep.subr.bf16.mxu0 %v3521
    %4089 = vmatpush1.bf16.msra.mxu0 %v3520
    %4090 = vmatprep.subr.bf16.mxu0 %v3527
    %4091 = vmatpush1.bf16.msra.mxu0 %v3526
    %4092 = vmatprep.subr.bf16.mxu0 %v3533
    %4093 = vmatpush1.bf16.msra.mxu0 %v3532
    %4094 = vmatprep.subr.bf16.mxu0 %v3539
    %4095 = vmatpush1.bf16.msra.mxu0 %v3538
    %4096 = vmatprep.subr.bf16.mxu0 %v3545
    %4097 = vmatpush1.bf16.msra.mxu0 %v3544
    %4098 = vmatprep.subr.bf16.mxu0 %v3551
    %4099 = vmatpush1.bf16.msra.mxu0 %v3550
    %4100 = vmatprep.subr.bf16.mxu0 %v3557
    %4101 = vmatpush1.bf16.msra.mxu0 %v3556
    %4102 = vmatprep.subr.bf16.mxu0 %v3563
    %4103 = vmatpush1.bf16.msra.mxu0 %v3562
    %4104 = vmatprep.subr.bf16.mxu0 %v3569
    %4105 = vmatpush1.bf16.msra.mxu0 %v3568
    %4106 = vmatprep.subr.bf16.mxu0 %v3575
    %4107 = vmatpush1.bf16.msra.mxu0 %v3574
    %4108 = vmatprep.subr.bf16.mxu0 %v3581
    %4109 = vmatpush1.bf16.msra.mxu0 %v3580
    %4110 = vmatprep.subr.bf16.mxu0 %v3587
    %4111 = vmatpush1.bf16.msra.mxu0 %v3586
    %4112 = vmatprep.subr.bf16.mxu0 %v3593
    %4113 = vmatpush1.bf16.msra.mxu0 %v3592
    %4114 = vmatprep.subr.bf16.mxu0 %v3599
    %4115 = vmatpush1.bf16.msra.mxu0 %v3598
    %4116 = vmatprep.mubr.bf16.mxu0 %v213
    %4117 = vmatmul.mubr.bf16.gmra.mrb[0].mxu0 %v212
    %v4118 = vpop.f32.mrb[0].mxu0
    %v4119 = vadd.f32 %v2392, %v4118
    %v4120 = vpop.f32.mrb[0].mxu0
    %v4121 = vadd.f32 %v2394, %v4120
    %v4122 = vpop.f32.mrb[0].mxu0
    %v4123 = vpop.f32.mrb[0].mxu0
    %4124 = vdwg.mxu0
    %4125 = vmatprep.subr.bf16.mxu0 %v3605
    %4126 = vmatpush1.bf16.msra.mxu0 %v3604
    %4127 = vmatprep.subr.bf16.mxu0 %v3611
    %4128 = vmatpush1.bf16.msra.mxu0 %v3610
    %4129 = vmatprep.subr.bf16.mxu0 %v3617
    %4130 = vmatpush1.bf16.msra.mxu0 %v3616
    %4131 = vmatprep.subr.bf16.mxu0 %v3623
    %4132 = vmatpush1.bf16.msra.mxu0 %v3622
    %4133 = vmatprep.subr.bf16.mxu0 %v3629
    %4134 = vmatpush1.bf16.msra.mxu0 %v3628
    %4135 = vmatprep.subr.bf16.mxu0 %v3635
    %4136 = vmatpush1.bf16.msra.mxu0 %v3634
    %4137 = vmatprep.subr.bf16.mxu0 %v3641
    %4138 = vmatpush1.bf16.msra.mxu0 %v3640
    %4139 = vmatprep.subr.bf16.mxu0 %v3647
    %4140 = vmatpush1.bf16.msra.mxu0 %v3646
    %4141 = vmatprep.subr.bf16.mxu0 %v3653
    %4142 = vmatpush1.bf16.msra.mxu0 %v3652
    %4143 = vmatprep.subr.bf16.mxu0 %v3659
    %4144 = vmatpush1.bf16.msra.mxu0 %v3658
    %4145 = vmatprep.subr.bf16.mxu0 %v3665
    %4146 = vmatpush1.bf16.msra.mxu0 %v3664
    %4147 = vmatprep.subr.bf16.mxu0 %v3671
    %4148 = vmatpush1.bf16.msra.mxu0 %v3670
    %4149 = vmatprep.subr.bf16.mxu0 %v3677
    %4150 = vmatpush1.bf16.msra.mxu0 %v3676
    %4151 = vmatprep.subr.bf16.mxu0 %v3683
    %4152 = vmatpush1.bf16.msra.mxu0 %v3682
    %4153 = vmatprep.subr.bf16.mxu0 %v3689
    %4154 = vmatpush1.bf16.msra.mxu0 %v3688
    %4155 = vmatprep.subr.bf16.mxu0 %v3695
    %4156 = vmatpush1.bf16.msra.mxu0 %v3694
    %4157 = vmatprep.mubr.bf16.mxu0 %v215
    %4158 = vmatmul.mubr.bf16.gmra.mrb[0].mxu0 %v214
    %v4159 = vpop.f32.mrb[0].mxu0
    %v4160 = vadd.f32 %v4119, %v4159
    %v4161 = vpop.f32.mrb[0].mxu0
    %v4162 = vadd.f32 %v4121, %v4161
    %v4163 = vpop.f32.mrb[0].mxu0
    %v4164 = vpop.f32.mrb[0].mxu0
    %4165 = vdwg.mxu0
    %4166 = vmatprep.subr.bf16.mxu0 %v3701
    %4167 = vmatpush1.bf16.msra.mxu0 %v3700
    %4168 = vmatprep.subr.bf16.mxu0 %v3707
    %4169 = vmatpush1.bf16.msra.mxu0 %v3706
    %4170 = vmatprep.subr.bf16.mxu0 %v3713
    %4171 = vmatpush1.bf16.msra.mxu0 %v3712
    %4172 = vmatprep.subr.bf16.mxu0 %v3719
    %4173 = vmatpush1.bf16.msra.mxu0 %v3718
    %4174 = vmatprep.subr.bf16.mxu0 %v3725
    %4175 = vmatpush1.bf16.msra.mxu0 %v3724
    %4176 = vmatprep.subr.bf16.mxu0 %v3731
    %4177 = vmatpush1.bf16.msra.mxu0 %v3730
    %4178 = vmatprep.subr.bf16.mxu0 %v3737
    %4179 = vmatpush1.bf16.msra.mxu0 %v3736
    %4180 = vmatprep.subr.bf16.mxu0 %v3743
    %4181 = vmatpush1.bf16.msra.mxu0 %v3742
    %4182 = vmatprep.subr.bf16.mxu0 %v3749
    %4183 = vmatpush1.bf16.msra.mxu0 %v3748
    %4184 = vmatprep.subr.bf16.mxu0 %v3755
    %4185 = vmatpush1.bf16.msra.mxu0 %v3754
    %4186 = vmatprep.subr.bf16.mxu0 %v3761
    %4187 = vmatpush1.bf16.msra.mxu0 %v3760
    %4188 = vmatprep.subr.bf16.mxu0 %v3767
    %4189 = vmatpush1.bf16.msra.mxu0 %v3766
    %4190 = vmatprep.subr.bf16.mxu0 %v3773
    %4191 = vmatpush1.bf16.msra.mxu0 %v3772
    %4192 = vmatprep.subr.bf16.mxu0 %v3779
    %4193 = vmatpush1.bf16.msra.mxu0 %v3778
    %4194 = vmatprep.subr.bf16.mxu0 %v3785
    %4195 = vmatpush1.bf16.msra.mxu0 %v3784
    %4196 = vmatprep.subr.bf16.mxu0 %v3791
    %4197 = vmatpush1.bf16.msra.mxu0 %v3790
    %4198 = vmatprep.mubr.bf16.mxu0 %v217
    %4199 = vmatmul.mubr.bf16.gmra.mrb[0].mxu0 %v216
    %v4200 = vpop.f32.mrb[0].mxu0
    %v4201 = vadd.f32 %v4160, %v4200
    %v4202 = vpop.f32.mrb[0].mxu0
    %v4203 = vadd.f32 %v4162, %v4202
    %v4204 = vpop.f32.mrb[0].mxu0
    %v4205 = vpop.f32.mrb[0].mxu0
    %4206 = vdwg.mxu0
    %4207 = vmatprep.subr.bf16.mxu0 %v3511
    %4208 = vmatpush1.bf16.msra.mxu0 %v3510
    %4209 = vmatprep.subr.bf16.mxu0 %v3517
    %4210 = vmatpush1.bf16.msra.mxu0 %v3516
    %4211 = vmatprep.subr.bf16.mxu0 %v3523
    %4212 = vmatpush1.bf16.msra.mxu0 %v3522
    %4213 = vmatprep.subr.bf16.mxu0 %v3529
    %4214 = vmatpush1.bf16.msra.mxu0 %v3528
    %4215 = vmatprep.subr.bf16.mxu0 %v3535
    %4216 = vmatpush1.bf16.msra.mxu0 %v3534
    %4217 = vmatprep.subr.bf16.mxu0 %v3541
    %4218 = vmatpush1.bf16.msra.mxu0 %v3540
    %4219 = vmatprep.subr.bf16.mxu0 %v3547
    %4220 = vmatpush1.bf16.msra.mxu0 %v3546
    %4221 = vmatprep.subr.bf16.mxu0 %v3553
    %4222 = vmatpush1.bf16.msra.mxu0 %v3552
    %4223 = vmatprep.subr.bf16.mxu0 %v3559
    %4224 = vmatpush1.bf16.msra.mxu0 %v3558
    %4225 = vmatprep.subr.bf16.mxu0 %v3565
    %4226 = vmatpush1.bf16.msra.mxu0 %v3564
    %4227 = vmatprep.subr.bf16.mxu0 %v3571
    %4228 = vmatpush1.bf16.msra.mxu0 %v3570
    %4229 = vmatprep.subr.bf16.mxu0 %v3577
    %4230 = vmatpush1.bf16.msra.mxu0 %v3576
    %4231 = vmatprep.subr.bf16.mxu0 %v3583
    %4232 = vmatpush1.bf16.msra.mxu0 %v3582
    %4233 = vmatprep.subr.bf16.mxu0 %v3589
    %4234 = vmatpush1.bf16.msra.mxu0 %v3588
    %4235 = vmatprep.subr.bf16.mxu0 %v3595
    %4236 = vmatpush1.bf16.msra.mxu0 %v3594
    %4237 = vmatprep.subr.bf16.mxu0 %v3601
    %4238 = vmatpush1.bf16.msra.mxu0 %v3600
    %4239 = vmatprep.mubr.bf16.mxu0 %v213
    %4240 = vmatmul.mubr.bf16.gmra.mrb[0].mxu0 %v212
    %v4241 = vpop.f32.mrb[0].mxu0
    %v4242 = vadd.f32 %v2515, %v4241
    %v4243 = vpop.f32.mrb[0].mxu0
    %v4244 = vadd.f32 %v2517, %v4243
    %v4245 = vpop.f32.mrb[0].mxu0
    %v4246 = vpop.f32.mrb[0].mxu0
    %4247 = vdwg.mxu0
    %4248 = vmatprep.subr.bf16.mxu0 %v3607
    %4249 = vmatpush1.bf16.msra.mxu0 %v3606
    %4250 = vmatprep.subr.bf16.mxu0 %v3613
    %4251 = vmatpush1.bf16.msra.mxu0 %v3612
    %4252 = vmatprep.subr.bf16.mxu0 %v3619
    %4253 = vmatpush1.bf16.msra.mxu0 %v3618
    %4254 = vmatprep.subr.bf16.mxu0 %v3625
    %4255 = vmatpush1.bf16.msra.mxu0 %v3624
    %4256 = vmatprep.subr.bf16.mxu0 %v3631
    %4257 = vmatpush1.bf16.msra.mxu0 %v3630
    %4258 = vmatprep.subr.bf16.mxu0 %v3637
    %4259 = vmatpush1.bf16.msra.mxu0 %v3636
    %4260 = vmatprep.subr.bf16.mxu0 %v3643
    %4261 = vmatpush1.bf16.msra.mxu0 %v3642
    %4262 = vmatprep.subr.bf16.mxu0 %v3649
    %4263 = vmatpush1.bf16.msra.mxu0 %v3648
    %4264 = vmatprep.subr.bf16.mxu0 %v3655
    %4265 = vmatpush1.bf16.msra.mxu0 %v3654
    %4266 = vmatprep.subr.bf16.mxu0 %v3661
    %4267 = vmatpush1.bf16.msra.mxu0 %v3660
    %4268 = vmatprep.subr.bf16.mxu0 %v3667
    %4269 = vmatpush1.bf16.msra.mxu0 %v3666
    %4270 = vmatprep.subr.bf16.mxu0 %v3673
    %4271 = vmatpush1.bf16.msra.mxu0 %v3672
    %4272 = vmatprep.subr.bf16.mxu0 %v3679
    %4273 = vmatpush1.bf16.msra.mxu0 %v3678
    %4274 = vmatprep.subr.bf16.mxu0 %v3685
    %4275 = vmatpush1.bf16.msra.mxu0 %v3684
    %4276 = vmatprep.subr.bf16.mxu0 %v3691
    %4277 = vmatpush1.bf16.msra.mxu0 %v3690
    %4278 = vmatprep.subr.bf16.mxu0 %v3697
    %4279 = vmatpush1.bf16.msra.mxu0 %v3696
    %4280 = vmatprep.mubr.bf16.mxu0 %v215
    %4281 = vmatmul.mubr.bf16.gmra.mrb[0].mxu0 %v214
    %v4282 = vpop.f32.mrb[0].mxu0
    %v4283 = vadd.f32 %v4242, %v4282
    %v4284 = vpop.f32.mrb[0].mxu0
    %v4285 = vadd.f32 %v4244, %v4284
    %v4286 = vpop.f32.mrb[0].mxu0
    %v4287 = vpop.f32.mrb[0].mxu0
    %4288 = vdwg.mxu0
    %4289 = vmatprep.subr.bf16.mxu0 %v3703
    %4290 = vmatpush1.bf16.msra.mxu0 %v3702
    %4291 = vmatprep.subr.bf16.mxu0 %v3709
    %4292 = vmatpush1.bf16.msra.mxu0 %v3708
    %4293 = vmatprep.subr.bf16.mxu0 %v3715
    %4294 = vmatpush1.bf16.msra.mxu0 %v3714
    %4295 = vmatprep.subr.bf16.mxu0 %v3721
    %4296 = vmatpush1.bf16.msra.mxu0 %v3720
    %4297 = vmatprep.subr.bf16.mxu0 %v3727
    %4298 = vmatpush1.bf16.msra.mxu0 %v3726
    %4299 = vmatprep.subr.bf16.mxu0 %v3733
    %4300 = vmatpush1.bf16.msra.mxu0 %v3732
    %4301 = vmatprep.subr.bf16.mxu0 %v3739
    %4302 = vmatpush1.bf16.msra.mxu0 %v3738
    %4303 = vmatprep.subr.bf16.mxu0 %v3745
    %4304 = vmatpush1.bf16.msra.mxu0 %v3744
    %4305 = vmatprep.subr.bf16.mxu0 %v3751
    %4306 = vmatpush1.bf16.msra.mxu0 %v3750
    %4307 = vmatprep.subr.bf16.mxu0 %v3757
    %4308 = vmatpush1.bf16.msra.mxu0 %v3756
    %4309 = vmatprep.subr.bf16.mxu0 %v3763
    %4310 = vmatpush1.bf16.msra.mxu0 %v3762
    %4311 = vmatprep.subr.bf16.mxu0 %v3769
    %4312 = vmatpush1.bf16.msra.mxu0 %v3768
    %4313 = vmatprep.subr.bf16.mxu0 %v3775
    %4314 = vmatpush1.bf16.msra.mxu0 %v3774
    %4315 = vmatprep.subr.bf16.mxu0 %v3781
    %4316 = vmatpush1.bf16.msra.mxu0 %v3780
    %4317 = vmatprep.subr.bf16.mxu0 %v3787
    %4318 = vmatpush1.bf16.msra.mxu0 %v3786
    %4319 = vmatprep.subr.bf16.mxu0 %v3793
    %4320 = vmatpush1.bf16.msra.mxu0 %v3792
    %4321 = vmatprep.mubr.bf16.mxu0 %v217
    %4322 = vmatmul.mubr.bf16.gmra.mrb[0].mxu0 %v216
    %v4323 = vpop.f32.mrb[0].mxu0
    %v4324 = vadd.f32 %v4283, %v4323
    %v4325 = vpop.f32.mrb[0].mxu0
    %v4326 = vadd.f32 %v4285, %v4325
    %v4327 = vpop.f32.mrb[0].mxu0
    %v4328 = vpop.f32.mrb[0].mxu0
    %4329 = vdwg.mxu0
    %4330 = vmatprep.subr.bf16.mxu0 %v3513
    %4331 = vmatpush1.bf16.msra.mxu0 %v3512
    %4332 = vmatprep.subr.bf16.mxu0 %v3519
    %4333 = vmatpush1.bf16.msra.mxu0 %v3518
    %4334 = vmatprep.subr.bf16.mxu0 %v3525
    %4335 = vmatpush1.bf16.msra.mxu0 %v3524
    %4336 = vmatprep.subr.bf16.mxu0 %v3531
    %4337 = vmatpush1.bf16.msra.mxu0 %v3530
    %4338 = vmatprep.subr.bf16.mxu0 %v3537
    %4339 = vmatpush1.bf16.msra.mxu0 %v3536
    %4340 = vmatprep.subr.bf16.mxu0 %v3543
    %4341 = vmatpush1.bf16.msra.mxu0 %v3542
    %4342 = vmatprep.subr.bf16.mxu0 %v3549
    %4343 = vmatpush1.bf16.msra.mxu0 %v3548
    %4344 = vmatprep.subr.bf16.mxu0 %v3555
    %4345 = vmatpush1.bf16.msra.mxu0 %v3554
    %4346 = vmatprep.subr.bf16.mxu0 %v3561
    %4347 = vmatpush1.bf16.msra.mxu0 %v3560
    %4348 = vmatprep.subr.bf16.mxu0 %v3567
    %4349 = vmatpush1.bf16.msra.mxu0 %v3566
    %4350 = vmatprep.subr.bf16.mxu0 %v3573
    %4351 = vmatpush1.bf16.msra.mxu0 %v3572
    %4352 = vmatprep.subr.bf16.mxu0 %v3579
    %4353 = vmatpush1.bf16.msra.mxu0 %v3578
    %4354 = vmatprep.subr.bf16.mxu0 %v3585
    %4355 = vmatpush1.bf16.msra.mxu0 %v3584
    %4356 = vmatprep.subr.bf16.mxu0 %v3591
    %4357 = vmatpush1.bf16.msra.mxu0 %v3590
    %4358 = vmatprep.subr.bf16.mxu0 %v3597
    %4359 = vmatpush1.bf16.msra.mxu0 %v3596
    %4360 = vmatprep.subr.bf16.mxu0 %v3603
    %4361 = vmatpush1.bf16.msra.mxu0 %v3602
    %4362 = vmatprep.mubr.bf16.mxu0 %v213
    %4363 = vmatmul.mubr.bf16.gmra.mrb[0].mxu0 %v212
    %v4364 = vpop.f32.mrb[0].mxu0
    %v4365 = vadd.f32 %v2638, %v4364
    %v4366 = vpop.f32.mrb[0].mxu0
    %v4367 = vadd.f32 %v2640, %v4366
    %v4368 = vpop.f32.mrb[0].mxu0
    %v4369 = vpop.f32.mrb[0].mxu0
    %4370 = vdwg.mxu0
    %4371 = vmatprep.subr.bf16.mxu0 %v3609
    %4372 = vmatpush1.bf16.msra.mxu0 %v3608
    %4373 = vmatprep.subr.bf16.mxu0 %v3615
    %4374 = vmatpush1.bf16.msra.mxu0 %v3614
    %4375 = vmatprep.subr.bf16.mxu0 %v3621
    %4376 = vmatpush1.bf16.msra.mxu0 %v3620
    %4377 = vmatprep.subr.bf16.mxu0 %v3627
    %4378 = vmatpush1.bf16.msra.mxu0 %v3626
    %4379 = vmatprep.subr.bf16.mxu0 %v3633
    %4380 = vmatpush1.bf16.msra.mxu0 %v3632
    %4381 = vmatprep.subr.bf16.mxu0 %v3639
    %4382 = vmatpush1.bf16.msra.mxu0 %v3638
    %4383 = vmatprep.subr.bf16.mxu0 %v3645
    %4384 = vmatpush1.bf16.msra.mxu0 %v3644
    %4385 = vmatprep.subr.bf16.mxu0 %v3651
    %4386 = vmatpush1.bf16.msra.mxu0 %v3650
    %4387 = vmatprep.subr.bf16.mxu0 %v3657
    %4388 = vmatpush1.bf16.msra.mxu0 %v3656
    %4389 = vmatprep.subr.bf16.mxu0 %v3663
    %4390 = vmatpush1.bf16.msra.mxu0 %v3662
    %4391 = vmatprep.subr.bf16.mxu0 %v3669
    %4392 = vmatpush1.bf16.msra.mxu0 %v3668
    %4393 = vmatprep.subr.bf16.mxu0 %v3675
    %4394 = vmatpush1.bf16.msra.mxu0 %v3674
    %4395 = vmatprep.subr.bf16.mxu0 %v3681
    %4396 = vmatpush1.bf16.msra.mxu0 %v3680
    %4397 = vmatprep.subr.bf16.mxu0 %v3687
    %4398 = vmatpush1.bf16.msra.mxu0 %v3686
    %4399 = vmatprep.subr.bf16.mxu0 %v3693
    %4400 = vmatpush1.bf16.msra.mxu0 %v3692
    %4401 = vmatprep.subr.bf16.mxu0 %v3699
    %4402 = vmatpush1.bf16.msra.mxu0 %v3698
    %4403 = vmatprep.mubr.bf16.mxu0 %v215
    %4404 = vmatmul.mubr.bf16.gmra.mrb[0].mxu0 %v214
    %v4405 = vpop.f32.mrb[0].mxu0
    %v4406 = vadd.f32 %v4365, %v4405
    %v4407 = vpop.f32.mrb[0].mxu0
    %v4408 = vadd.f32 %v4367, %v4407
    %v4409 = vpop.f32.mrb[0].mxu0
    %v4410 = vpop.f32.mrb[0].mxu0
    %4411 = vdwg.mxu0
    %4412 = vmatprep.subr.bf16.mxu0 %v3705
    %4413 = vmatpush1.bf16.msra.mxu0 %v3704
    %4414 = vmatprep.subr.bf16.mxu0 %v3711
    %4415 = vmatpush1.bf16.msra.mxu0 %v3710
    %4416 = vmatprep.subr.bf16.mxu0 %v3717
    %4417 = vmatpush1.bf16.msra.mxu0 %v3716
    %4418 = vmatprep.subr.bf16.mxu0 %v3723
    %4419 = vmatpush1.bf16.msra.mxu0 %v3722
    %4420 = vmatprep.subr.bf16.mxu0 %v3729
    %4421 = vmatpush1.bf16.msra.mxu0 %v3728
    %4422 = vmatprep.subr.bf16.mxu0 %v3735
    %4423 = vmatpush1.bf16.msra.mxu0 %v3734
    %4424 = vmatprep.subr.bf16.mxu0 %v3741
    %4425 = vmatpush1.bf16.msra.mxu0 %v3740
    %4426 = vmatprep.subr.bf16.mxu0 %v3747
    %4427 = vmatpush1.bf16.msra.mxu0 %v3746
    %4428 = vmatprep.subr.bf16.mxu0 %v3753
    %4429 = vmatpush1.bf16.msra.mxu0 %v3752
    %4430 = vmatprep.subr.bf16.mxu0 %v3759
    %4431 = vmatpush1.bf16.msra.mxu0 %v3758
    %4432 = vmatprep.subr.bf16.mxu0 %v3765
    %4433 = vmatpush1.bf16.msra.mxu0 %v3764
    %4434 = vmatprep.subr.bf16.mxu0 %v3771
    %4435 = vmatpush1.bf16.msra.mxu0 %v3770
    %4436 = vmatprep.subr.bf16.mxu0 %v3777
    %4437 = vmatpush1.bf16.msra.mxu0 %v3776
    %4438 = vmatprep.subr.bf16.mxu0 %v3783
    %4439 = vmatpush1.bf16.msra.mxu0 %v3782
    %4440 = vmatprep.subr.bf16.mxu0 %v3789
    %4441 = vmatpush1.bf16.msra.mxu0 %v3788
    %4442 = vmatprep.subr.bf16.mxu0 %v3795
    %4443 = vmatpush1.bf16.msra.mxu0 %v3794
    %4444 = vmatprep.mubr.bf16.mxu0 %v217
    %4445 = vmatmul.mubr.bf16.gmra.mrb[0].mxu0 %v216
    %v4446 = vpop.f32.mrb[0].mxu0
    %v4447 = vadd.f32 %v4406, %v4446
    %v4448 = vpop.f32.mrb[0].mxu0
    %v4449 = vadd.f32 %v4408, %v4448
    %v4450 = vpop.f32.mrb[0].mxu0
    %v4451 = vpop.f32.mrb[0].mxu0
    %4452 = vdwg.mxu0
    %v4453 = vld [vmem:[#allocation7] sm:$0xff]
    %v4454 = vld [vmem:[#allocation7 + $0x8] sm:$0xf]
    %v4457 = vcombine.high %v4453, %v4453
    %v4459 = vunpack.c.l.s4 1983009808
    %v4460 = vunpack.c.0.s8 %v4459
    %v4461 = vlaneseq
    %v4462 = vshrl.u32 %v4461, 7
    %v4463 = vsub.s32 %v4460, %v4462
    %v4464 = vrot.slane %v4453, %v4463
    %v4466 = vunpack.c.l.s4 1983009808
    %v4467 = vunpack.c.0.s8 %v4466
    %v4468 = vlaneseq
    %v4469 = vshrl.u32 %v4468, 7
    %v4470 = vsub.s32 %v4467, %v4469
    %v4471 = vrot.slane %v4457, %v4470
    %v4472 = vcombine.high %v4464, %v4464
    %v4473 = vcombine.high %v4471, %v4471
    %v4475 = vunpack.c.l.s4 1983009808
    %v4476 = vunpack.c.0.s8 %v4475
    %v4477 = vlaneseq
    %v4478 = vshrl.u32 %v4477, 7
    %v4479 = vsub.s32 %v4476, %v4478
    %v4480 = vrot.slane %v4454, %v4479
    %v4481 = vcombine.high %v4480, %v4480
    %v4488 = vpack.c.bf16 %v4464, %v4464
    %v4489 = vpack.c.bf16 %v4472, %v4472
    %v4490 = vpack.c.bf16 %v4471, %v4471
    %v4491 = vpack.c.bf16 %v4473, %v4473
    %v4492 = vpack.c.bf16 %v4480, %v4480
    %v4493 = vpack.c.bf16 %v4481, %v4481
    %v4494 = vld [vmem:[#allocation11] sm:$0xff]
    %v4495 = vld [vmem:[#allocation11 + $0x8] sm:$0xff]
    %v4496 = vld [vmem:[#allocation11 + $0x10] sm:$0xff]
    %v4497 = vld [vmem:[#allocation11 + $0x18] sm:$0xff]
    %v4498 = vld [vmem:[#allocation11 + $0x20] sm:$0xff]
    %v4499 = vld [vmem:[#allocation11 + $0x28] sm:$0xff]
    %v4500 = vld [vmem:[#allocation11 + $0x30] sm:$0xff]
    %v4501 = vld [vmem:[#allocation11 + $0x38] sm:$0xff]
    %v4502 = vld [vmem:[#allocation11 + $0x40] sm:$0xff]
    %v4503 = vld [vmem:[#allocation11 + $0x48] sm:$0xff]
    %v4504 = vld [vmem:[#allocation11 + $0x50] sm:$0xff]
    %v4505 = vld [vmem:[#allocation11 + $0x58] sm:$0xff]
    %v4506 = vld [vmem:[#allocation11 + $0x60] sm:$0xff]
    %v4507 = vld [vmem:[#allocation11 + $0x68] sm:$0xff]
    %v4508 = vld [vmem:[#allocation11 + $0x70] sm:$0xff]
    %v4509 = vld [vmem:[#allocation11 + $0x78] sm:$0xff]
    %v4510 = vld [vmem:[#allocation11 + $0x80] sm:$0xff]
    %v4511 = vld [vmem:[#allocation11 + $0x88] sm:$0xff]
    %v4512 = vld [vmem:[#allocation11 + $0x90] sm:$0xff]
    %v4513 = vld [vmem:[#allocation11 + $0x98] sm:$0xff]
    %v4514 = vld [vmem:[#allocation11 + $0xa0] sm:$0xff]
    %v4515 = vld [vmem:[#allocation11 + $0xa8] sm:$0xff]
    %v4516 = vld [vmem:[#allocation11 + $0xb0] sm:$0xff]
    %v4517 = vld [vmem:[#allocation11 + $0xb8] sm:$0xff]
    %v4518 = vld [vmem:[#allocation11 + $0xc0] sm:$0xff]
    %v4519 = vld [vmem:[#allocation11 + $0xc8] sm:$0xff]
    %v4520 = vld [vmem:[#allocation11 + $0xd0] sm:$0xff]
    %v4521 = vld [vmem:[#allocation11 + $0xd8] sm:$0xff]
    %v4522 = vld [vmem:[#allocation11 + $0xe0] sm:$0xff]
    %v4523 = vld [vmem:[#allocation11 + $0xe8] sm:$0xff]
    %v4524 = vld [vmem:[#allocation11 + $0xf0] sm:$0xff]
    %v4525 = vld [vmem:[#allocation11 + $0xf8] sm:$0xff]
    %v4526 = vld [vmem:[#allocation11 + $0x100] sm:$0xff]
    %v4527 = vld [vmem:[#allocation11 + $0x108] sm:$0xff]
    %v4528 = vld [vmem:[#allocation11 + $0x110] sm:$0xff]
    %v4529 = vld [vmem:[#allocation11 + $0x118] sm:$0xff]
    %v4530 = vld [vmem:[#allocation11 + $0x120] sm:$0xff]
    %v4531 = vld [vmem:[#allocation11 + $0x128] sm:$0xff]
    %v4532 = vld [vmem:[#allocation11 + $0x130] sm:$0xff]
    %v4533 = vld [vmem:[#allocation11 + $0x138] sm:$0xff]
    %v4534 = vld [vmem:[#allocation11 + $0x140] sm:$0xff]
    %v4535 = vld [vmem:[#allocation11 + $0x148] sm:$0xff]
    %v4536 = vld [vmem:[#allocation11 + $0x150] sm:$0xff]
    %v4537 = vld [vmem:[#allocation11 + $0x158] sm:$0xff]
    %v4538 = vld [vmem:[#allocation11 + $0x160] sm:$0xff]
    %v4539 = vld [vmem:[#allocation11 + $0x168] sm:$0xff]
    %v4540 = vld [vmem:[#allocation11 + $0x170] sm:$0xff]
    %v4541 = vld [vmem:[#allocation11 + $0x178] sm:$0xff]
    %v4542 = vld [vmem:[#allocation11 + $0x180] sm:$0xff]
    %v4543 = vld [vmem:[#allocation11 + $0x188] sm:$0xff]
    %v4544 = vld [vmem:[#allocation11 + $0x190] sm:$0xff]
    %v4545 = vld [vmem:[#allocation11 + $0x198] sm:$0xff]
    %v4546 = vld [vmem:[#allocation11 + $0x1a0] sm:$0xff]
    %v4547 = vld [vmem:[#allocation11 + $0x1a8] sm:$0xff]
    %v4548 = vld [vmem:[#allocation11 + $0x1b0] sm:$0xff]
    %v4549 = vld [vmem:[#allocation11 + $0x1b8] sm:$0xff]
    %v4550 = vld [vmem:[#allocation11 + $0x1c0] sm:$0xff]
    %v4551 = vld [vmem:[#allocation11 + $0x1c8] sm:$0xff]
    %v4552 = vld [vmem:[#allocation11 + $0x1d0] sm:$0xff]
    %v4553 = vld [vmem:[#allocation11 + $0x1d8] sm:$0xff]
    %v4554 = vld [vmem:[#allocation11 + $0x1e0] sm:$0xff]
    %v4555 = vld [vmem:[#allocation11 + $0x1e8] sm:$0xff]
    %v4556 = vld [vmem:[#allocation11 + $0x1f0] sm:$0xff]
    %v4557 = vld [vmem:[#allocation11 + $0x1f8] sm:$0xff]
    %v4558 = vld [vmem:[#allocation11 + $0x200] sm:$0xff]
    %v4559 = vld [vmem:[#allocation11 + $0x208] sm:$0xff]
    %v4560 = vld [vmem:[#allocation11 + $0x210] sm:$0xff]
    %v4561 = vld [vmem:[#allocation11 + $0x218] sm:$0xff]
    %v4562 = vld [vmem:[#allocation11 + $0x220] sm:$0xff]
    %v4563 = vld [vmem:[#allocation11 + $0x228] sm:$0xff]
    %v4564 = vld [vmem:[#allocation11 + $0x230] sm:$0xff]
    %v4565 = vld [vmem:[#allocation11 + $0x238] sm:$0xff]
    %v4566 = vld [vmem:[#allocation11 + $0x240] sm:$0xff]
    %v4567 = vld [vmem:[#allocation11 + $0x248] sm:$0xff]
    %v4568 = vld [vmem:[#allocation11 + $0x250] sm:$0xff]
    %v4569 = vld [vmem:[#allocation11 + $0x258] sm:$0xff]
    %v4570 = vld [vmem:[#allocation11 + $0x260] sm:$0xff]
    %v4571 = vld [vmem:[#allocation11 + $0x268] sm:$0xff]
    %v4572 = vld [vmem:[#allocation11 + $0x270] sm:$0xff]
    %v4573 = vld [vmem:[#allocation11 + $0x278] sm:$0xff]
    %v4574 = vld [vmem:[#allocation11 + $0x280] sm:$0xff]
    %v4575 = vld [vmem:[#allocation11 + $0x288] sm:$0xff]
    %v4576 = vld [vmem:[#allocation11 + $0x290] sm:$0xff]
    %v4577 = vld [vmem:[#allocation11 + $0x298] sm:$0xff]
    %v4578 = vld [vmem:[#allocation11 + $0x2a0] sm:$0xff]
    %v4579 = vld [vmem:[#allocation11 + $0x2a8] sm:$0xff]
    %v4580 = vld [vmem:[#allocation11 + $0x2b0] sm:$0xff]
    %v4581 = vld [vmem:[#allocation11 + $0x2b8] sm:$0xff]
    %v4582 = vld [vmem:[#allocation11 + $0x2c0] sm:$0xff]
    %v4583 = vld [vmem:[#allocation11 + $0x2c8] sm:$0xff]
    %v4584 = vld [vmem:[#allocation11 + $0x2d0] sm:$0xff]
    %v4585 = vld [vmem:[#allocation11 + $0x2d8] sm:$0xff]
    %v4586 = vld [vmem:[#allocation11 + $0x2e0] sm:$0xff]
    %v4587 = vld [vmem:[#allocation11 + $0x2e8] sm:$0xff]
    %v4588 = vld [vmem:[#allocation11 + $0x2f0] sm:$0xff]
    %v4589 = vld [vmem:[#allocation11 + $0x2f8] sm:$0xff]
    %v4590 = vld [vmem:[#allocation11 + $0x300] sm:$0xff]
    %v4591 = vld [vmem:[#allocation11 + $0x308] sm:$0xff]
    %v4592 = vld [vmem:[#allocation11 + $0x310] sm:$0xff]
    %v4593 = vld [vmem:[#allocation11 + $0x318] sm:$0xff]
    %v4594 = vld [vmem:[#allocation11 + $0x320] sm:$0xff]
    %v4595 = vld [vmem:[#allocation11 + $0x328] sm:$0xff]
    %v4596 = vld [vmem:[#allocation11 + $0x330] sm:$0xff]
    %v4597 = vld [vmem:[#allocation11 + $0x338] sm:$0xff]
    %v4598 = vld [vmem:[#allocation11 + $0x340] sm:$0xff]
    %v4599 = vld [vmem:[#allocation11 + $0x348] sm:$0xff]
    %v4600 = vld [vmem:[#allocation11 + $0x350] sm:$0xff]
    %v4601 = vld [vmem:[#allocation11 + $0x358] sm:$0xff]
    %v4602 = vld [vmem:[#allocation11 + $0x360] sm:$0xff]
    %v4603 = vld [vmem:[#allocation11 + $0x368] sm:$0xff]
    %v4604 = vld [vmem:[#allocation11 + $0x370] sm:$0xff]
    %v4605 = vld [vmem:[#allocation11 + $0x378] sm:$0xff]
    %v4606 = vld [vmem:[#allocation11 + $0x380] sm:$0xff]
    %v4607 = vld [vmem:[#allocation11 + $0x388] sm:$0xff]
    %v4608 = vld [vmem:[#allocation11 + $0x390] sm:$0xff]
    %v4609 = vld [vmem:[#allocation11 + $0x398] sm:$0xff]
    %v4610 = vld [vmem:[#allocation11 + $0x3a0] sm:$0xff]
    %v4611 = vld [vmem:[#allocation11 + $0x3a8] sm:$0xff]
    %v4612 = vld [vmem:[#allocation11 + $0x3b0] sm:$0xff]
    %v4613 = vld [vmem:[#allocation11 + $0x3b8] sm:$0xff]
    %v4614 = vld [vmem:[#allocation11 + $0x3c0] sm:$0xff]
    %v4615 = vld [vmem:[#allocation11 + $0x3c8] sm:$0xff]
    %v4616 = vld [vmem:[#allocation11 + $0x3d0] sm:$0xff]
    %v4617 = vld [vmem:[#allocation11 + $0x3d8] sm:$0xff]
    %v4618 = vld [vmem:[#allocation11 + $0x3e0] sm:$0xff]
    %v4619 = vld [vmem:[#allocation11 + $0x3e8] sm:$0xff]
    %v4620 = vld [vmem:[#allocation11 + $0x3f0] sm:$0xff]
    %v4621 = vld [vmem:[#allocation11 + $0x3f8] sm:$0xff]
    %v4622 = vld [vmem:[#allocation11 + $0x400] sm:$0xff]
    %v4623 = vld [vmem:[#allocation11 + $0x408] sm:$0xff]
    %v4624 = vld [vmem:[#allocation11 + $0x410] sm:$0xff]
    %v4625 = vld [vmem:[#allocation11 + $0x418] sm:$0xff]
    %v4626 = vld [vmem:[#allocation11 + $0x420] sm:$0xff]
    %v4627 = vld [vmem:[#allocation11 + $0x428] sm:$0xff]
    %v4628 = vld [vmem:[#allocation11 + $0x430] sm:$0xff]
    %v4629 = vld [vmem:[#allocation11 + $0x438] sm:$0xff]
    %v4630 = vld [vmem:[#allocation11 + $0x440] sm:$0xff]
    %v4631 = vld [vmem:[#allocation11 + $0x448] sm:$0xff]
    %v4632 = vld [vmem:[#allocation11 + $0x450] sm:$0xff]
    %v4633 = vld [vmem:[#allocation11 + $0x458] sm:$0xff]
    %v4634 = vld [vmem:[#allocation11 + $0x460] sm:$0xff]
    %v4635 = vld [vmem:[#allocation11 + $0x468] sm:$0xff]
    %v4636 = vld [vmem:[#allocation11 + $0x470] sm:$0xff]
    %v4637 = vld [vmem:[#allocation11 + $0x478] sm:$0xff]
    %v4638 = vld [vmem:[#allocation11 + $0x480] sm:$0xff]
    %v4639 = vld [vmem:[#allocation11 + $0x488] sm:$0xff]
    %v4640 = vld [vmem:[#allocation11 + $0x490] sm:$0xff]
    %v4641 = vld [vmem:[#allocation11 + $0x498] sm:$0xff]
    %v4642 = vld [vmem:[#allocation11 + $0x4a0] sm:$0xff]
    %v4643 = vld [vmem:[#allocation11 + $0x4a8] sm:$0xff]
    %v4644 = vld [vmem:[#allocation11 + $0x4b0] sm:$0xff]
    %v4645 = vld [vmem:[#allocation11 + $0x4b8] sm:$0xff]
    %v4646 = vld [vmem:[#allocation11 + $0x4c0] sm:$0xff]
    %v4647 = vld [vmem:[#allocation11 + $0x4c8] sm:$0xff]
    %v4648 = vld [vmem:[#allocation11 + $0x4d0] sm:$0xff]
    %v4649 = vld [vmem:[#allocation11 + $0x4d8] sm:$0xff]
    %v4650 = vld [vmem:[#allocation11 + $0x4e0] sm:$0xff]
    %v4651 = vld [vmem:[#allocation11 + $0x4e8] sm:$0xff]
    %v4652 = vld [vmem:[#allocation11 + $0x4f0] sm:$0xff]
    %v4653 = vld [vmem:[#allocation11 + $0x4f8] sm:$0xff]
    %v4654 = vld [vmem:[#allocation11 + $0x500] sm:$0xff]
    %v4655 = vld [vmem:[#allocation11 + $0x508] sm:$0xff]
    %v4656 = vld [vmem:[#allocation11 + $0x510] sm:$0xff]
    %v4657 = vld [vmem:[#allocation11 + $0x518] sm:$0xff]
    %v4658 = vld [vmem:[#allocation11 + $0x520] sm:$0xff]
    %v4659 = vld [vmem:[#allocation11 + $0x528] sm:$0xff]
    %v4660 = vld [vmem:[#allocation11 + $0x530] sm:$0xff]
    %v4661 = vld [vmem:[#allocation11 + $0x538] sm:$0xff]
    %v4662 = vld [vmem:[#allocation11 + $0x540] sm:$0xff]
    %v4663 = vld [vmem:[#allocation11 + $0x548] sm:$0xff]
    %v4664 = vld [vmem:[#allocation11 + $0x550] sm:$0xff]
    %v4665 = vld [vmem:[#allocation11 + $0x558] sm:$0xff]
    %v4666 = vld [vmem:[#allocation11 + $0x560] sm:$0xff]
    %v4667 = vld [vmem:[#allocation11 + $0x568] sm:$0xff]
    %v4668 = vld [vmem:[#allocation11 + $0x570] sm:$0xff]
    %v4669 = vld [vmem:[#allocation11 + $0x578] sm:$0xff]
    %v4670 = vld [vmem:[#allocation11 + $0x580] sm:$0xff]
    %v4671 = vld [vmem:[#allocation11 + $0x588] sm:$0xff]
    %v4672 = vld [vmem:[#allocation11 + $0x590] sm:$0xff]
    %v4673 = vld [vmem:[#allocation11 + $0x598] sm:$0xff]
    %v4674 = vld [vmem:[#allocation11 + $0x5a0] sm:$0xff]
    %v4675 = vld [vmem:[#allocation11 + $0x5a8] sm:$0xff]
    %v4676 = vld [vmem:[#allocation11 + $0x5b0] sm:$0xff]
    %v4677 = vld [vmem:[#allocation11 + $0x5b8] sm:$0xff]
    %v4678 = vld [vmem:[#allocation11 + $0x5c0] sm:$0xff]
    %v4679 = vld [vmem:[#allocation11 + $0x5c8] sm:$0xff]
    %v4680 = vld [vmem:[#allocation11 + $0x5d0] sm:$0xff]
    %v4681 = vld [vmem:[#allocation11 + $0x5d8] sm:$0xff]
    %v4682 = vld [vmem:[#allocation11 + $0x5e0] sm:$0xff]
    %v4683 = vld [vmem:[#allocation11 + $0x5e8] sm:$0xff]
    %v4684 = vld [vmem:[#allocation11 + $0x5f0] sm:$0xff]
    %v4685 = vld [vmem:[#allocation11 + $0x5f8] sm:$0xff]
    %v4686 = vld [vmem:[#allocation11 + $0x600] sm:$0xff]
    %v4687 = vld [vmem:[#allocation11 + $0x608] sm:$0xff]
    %v4688 = vld [vmem:[#allocation11 + $0x610] sm:$0xff]
    %v4689 = vld [vmem:[#allocation11 + $0x618] sm:$0xff]
    %v4690 = vld [vmem:[#allocation11 + $0x620] sm:$0xff]
    %v4691 = vld [vmem:[#allocation11 + $0x628] sm:$0xff]
    %v4692 = vld [vmem:[#allocation11 + $0x630] sm:$0xff]
    %v4693 = vld [vmem:[#allocation11 + $0x638] sm:$0xff]
    %v4694 = vld [vmem:[#allocation11 + $0x640] sm:$0xff]
    %v4695 = vld [vmem:[#allocation11 + $0x648] sm:$0xff]
    %v4696 = vld [vmem:[#allocation11 + $0x650] sm:$0xff]
    %v4697 = vld [vmem:[#allocation11 + $0x658] sm:$0xff]
    %v4698 = vld [vmem:[#allocation11 + $0x660] sm:$0xff]
    %v4699 = vld [vmem:[#allocation11 + $0x668] sm:$0xff]
    %v4700 = vld [vmem:[#allocation11 + $0x670] sm:$0xff]
    %v4701 = vld [vmem:[#allocation11 + $0x678] sm:$0xff]
    %v4702 = vld [vmem:[#allocation11 + $0x680] sm:$0xff]
    %v4703 = vld [vmem:[#allocation11 + $0x688] sm:$0xff]
    %v4704 = vld [vmem:[#allocation11 + $0x690] sm:$0xff]
    %v4705 = vld [vmem:[#allocation11 + $0x698] sm:$0xff]
    %v4706 = vld [vmem:[#allocation11 + $0x6a0] sm:$0xff]
    %v4707 = vld [vmem:[#allocation11 + $0x6a8] sm:$0xff]
    %v4708 = vld [vmem:[#allocation11 + $0x6b0] sm:$0xff]
    %v4709 = vld [vmem:[#allocation11 + $0x6b8] sm:$0xff]
    %v4710 = vld [vmem:[#allocation11 + $0x6c0] sm:$0xff]
    %v4711 = vld [vmem:[#allocation11 + $0x6c8] sm:$0xff]
    %v4712 = vld [vmem:[#allocation11 + $0x6d0] sm:$0xff]
    %v4713 = vld [vmem:[#allocation11 + $0x6d8] sm:$0xff]
    %v4714 = vld [vmem:[#allocation11 + $0x6e0] sm:$0xff]
    %v4715 = vld [vmem:[#allocation11 + $0x6e8] sm:$0xff]
    %v4716 = vld [vmem:[#allocation11 + $0x6f0] sm:$0xff]
    %v4717 = vld [vmem:[#allocation11 + $0x6f8] sm:$0xff]
    %v4718 = vld [vmem:[#allocation11 + $0x700] sm:$0xff]
    %v4719 = vld [vmem:[#allocation11 + $0x708] sm:$0xff]
    %v4720 = vld [vmem:[#allocation11 + $0x710] sm:$0xff]
    %v4721 = vld [vmem:[#allocation11 + $0x718] sm:$0xff]
    %v4722 = vld [vmem:[#allocation11 + $0x720] sm:$0xff]
    %v4723 = vld [vmem:[#allocation11 + $0x728] sm:$0xff]
    %v4724 = vld [vmem:[#allocation11 + $0x730] sm:$0xff]
    %v4725 = vld [vmem:[#allocation11 + $0x738] sm:$0xff]
    %v4726 = vld [vmem:[#allocation11 + $0x740] sm:$0xff]
    %v4727 = vld [vmem:[#allocation11 + $0x748] sm:$0xff]
    %v4728 = vld [vmem:[#allocation11 + $0x750] sm:$0xff]
    %v4729 = vld [vmem:[#allocation11 + $0x758] sm:$0xff]
    %v4730 = vld [vmem:[#allocation11 + $0x760] sm:$0xff]
    %v4731 = vld [vmem:[#allocation11 + $0x768] sm:$0xff]
    %v4732 = vld [vmem:[#allocation11 + $0x770] sm:$0xff]
    %v4733 = vld [vmem:[#allocation11 + $0x778] sm:$0xff]
    %v4734 = vld [vmem:[#allocation11 + $0x780] sm:$0xff]
    %v4735 = vld [vmem:[#allocation11 + $0x788] sm:$0xff]
    %v4736 = vld [vmem:[#allocation11 + $0x790] sm:$0xff]
    %v4737 = vld [vmem:[#allocation11 + $0x798] sm:$0xff]
    %v4738 = vld [vmem:[#allocation11 + $0x7a0] sm:$0xff]
    %v4739 = vld [vmem:[#allocation11 + $0x7a8] sm:$0xff]
    %v4740 = vld [vmem:[#allocation11 + $0x7b0] sm:$0xff]
    %v4741 = vld [vmem:[#allocation11 + $0x7b8] sm:$0xff]
    %v4742 = vld [vmem:[#allocation11 + $0x7c0] sm:$0xff]
    %v4743 = vld [vmem:[#allocation11 + $0x7c8] sm:$0xff]
    %v4744 = vld [vmem:[#allocation11 + $0x7d0] sm:$0xff]
    %v4745 = vld [vmem:[#allocation11 + $0x7d8] sm:$0xff]
    %v4746 = vld [vmem:[#allocation11 + $0x7e0] sm:$0xff]
    %v4747 = vld [vmem:[#allocation11 + $0x7e8] sm:$0xff]
    %v4748 = vld [vmem:[#allocation11 + $0x7f0] sm:$0xff]
    %v4749 = vld [vmem:[#allocation11 + $0x7f8] sm:$0xff]
    %v4750 = vld [vmem:[#allocation11 + $0x800] sm:$0xff]
    %v4751 = vld [vmem:[#allocation11 + $0x808] sm:$0xff]
    %v4752 = vld [vmem:[#allocation11 + $0x810] sm:$0xff]
    %v4753 = vld [vmem:[#allocation11 + $0x818] sm:$0xff]
    %v4754 = vld [vmem:[#allocation11 + $0x820] sm:$0xff]
    %v4755 = vld [vmem:[#allocation11 + $0x828] sm:$0xff]
    %v4756 = vld [vmem:[#allocation11 + $0x830] sm:$0xff]
    %v4757 = vld [vmem:[#allocation11 + $0x838] sm:$0xff]
    %v4758 = vld [vmem:[#allocation11 + $0x840] sm:$0xff]
    %v4759 = vld [vmem:[#allocation11 + $0x848] sm:$0xff]
    %v4760 = vld [vmem:[#allocation11 + $0x850] sm:$0xff]
    %v4761 = vld [vmem:[#allocation11 + $0x858] sm:$0xff]
    %v4762 = vld [vmem:[#allocation11 + $0x860] sm:$0xff]
    %v4763 = vld [vmem:[#allocation11 + $0x868] sm:$0xff]
    %v4764 = vld [vmem:[#allocation11 + $0x870] sm:$0xff]
    %v4765 = vld [vmem:[#allocation11 + $0x878] sm:$0xff]
    %v4766 = vld [vmem:[#allocation11 + $0x880] sm:$0xff]
    %v4767 = vld [vmem:[#allocation11 + $0x888] sm:$0xff]
    %v4768 = vld [vmem:[#allocation11 + $0x890] sm:$0xff]
    %v4769 = vld [vmem:[#allocation11 + $0x898] sm:$0xff]
    %v4770 = vld [vmem:[#allocation11 + $0x8a0] sm:$0xff]
    %v4771 = vld [vmem:[#allocation11 + $0x8a8] sm:$0xff]
    %v4772 = vld [vmem:[#allocation11 + $0x8b0] sm:$0xff]
    %v4773 = vld [vmem:[#allocation11 + $0x8b8] sm:$0xff]
    %v4774 = vld [vmem:[#allocation11 + $0x8c0] sm:$0xff]
    %v4775 = vld [vmem:[#allocation11 + $0x8c8] sm:$0xff]
    %v4776 = vld [vmem:[#allocation11 + $0x8d0] sm:$0xff]
    %v4777 = vld [vmem:[#allocation11 + $0x8d8] sm:$0xff]
    %v4778 = vld [vmem:[#allocation11 + $0x8e0] sm:$0xff]
    %v4779 = vld [vmem:[#allocation11 + $0x8e8] sm:$0xff]
    %v4780 = vld [vmem:[#allocation11 + $0x8f0] sm:$0xff]
    %v4781 = vld [vmem:[#allocation11 + $0x8f8] sm:$0xff]
    %v5070 = vunpack.c.l.b16 %v4494
    %v5071 = vunpack.c.h.b16 %v4494
    %v5072 = vunpack.c.l.b16 %v4495
    %v5073 = vunpack.c.h.b16 %v4495
    %v5074 = vunpack.c.l.b16 %v4496
    %v5075 = vunpack.c.h.b16 %v4496
    %v5076 = vunpack.c.l.b16 %v4497
    %v5077 = vunpack.c.h.b16 %v4497
    %v5078 = vunpack.c.l.b16 %v4498
    %v5079 = vunpack.c.h.b16 %v4498
    %v5080 = vunpack.c.l.b16 %v4499
    %v5081 = vunpack.c.h.b16 %v4499
    %v5082 = vunpack.c.l.b16 %v4500
    %v5083 = vunpack.c.h.b16 %v4500
    %v5084 = vunpack.c.l.b16 %v4501
    %v5085 = vunpack.c.h.b16 %v4501
    %v5086 = vunpack.c.l.b16 %v4502
    %v5087 = vunpack.c.h.b16 %v4502
    %v5088 = vunpack.c.l.b16 %v4503
    %v5089 = vunpack.c.h.b16 %v4503
    %v5090 = vunpack.c.l.b16 %v4504
    %v5091 = vunpack.c.h.b16 %v4504
    %v5092 = vunpack.c.l.b16 %v4505
    %v5093 = vunpack.c.h.b16 %v4505
    %v5094 = vunpack.c.l.b16 %v4506
    %v5095 = vunpack.c.h.b16 %v4506
    %v5096 = vunpack.c.l.b16 %v4507
    %v5097 = vunpack.c.h.b16 %v4507
    %v5098 = vunpack.c.l.b16 %v4508
    %v5099 = vunpack.c.h.b16 %v4508
    %v5100 = vunpack.c.l.b16 %v4509
    %v5101 = vunpack.c.h.b16 %v4509
    %v5102 = vunpack.c.l.b16 %v4510
    %v5103 = vunpack.c.h.b16 %v4510
    %v5104 = vunpack.c.l.b16 %v4511
    %v5105 = vunpack.c.h.b16 %v4511
    %v5106 = vunpack.c.l.b16 %v4512
    %v5107 = vunpack.c.h.b16 %v4512
    %v5108 = vunpack.c.l.b16 %v4513
    %v5109 = vunpack.c.h.b16 %v4513
    %v5110 = vunpack.c.l.b16 %v4514
    %v5111 = vunpack.c.h.b16 %v4514
    %v5112 = vunpack.c.l.b16 %v4515
    %v5113 = vunpack.c.h.b16 %v4515
    %v5114 = vunpack.c.l.b16 %v4516
    %v5115 = vunpack.c.h.b16 %v4516
    %v5116 = vunpack.c.l.b16 %v4517
    %v5117 = vunpack.c.h.b16 %v4517
    %v5118 = vunpack.c.l.b16 %v4518
    %v5119 = vunpack.c.h.b16 %v4518
    %v5120 = vunpack.c.l.b16 %v4519
    %v5121 = vunpack.c.h.b16 %v4519
    %v5122 = vunpack.c.l.b16 %v4520
    %v5123 = vunpack.c.h.b16 %v4520
    %v5124 = vunpack.c.l.b16 %v4521
    %v5125 = vunpack.c.h.b16 %v4521
    %v5126 = vunpack.c.l.b16 %v4522
    %v5127 = vunpack.c.h.b16 %v4522
    %v5128 = vunpack.c.l.b16 %v4523
    %v5129 = vunpack.c.h.b16 %v4523
    %v5130 = vunpack.c.l.b16 %v4524
    %v5131 = vunpack.c.h.b16 %v4524
    %v5132 = vunpack.c.l.b16 %v4525
    %v5133 = vunpack.c.h.b16 %v4525
    %v5134 = vunpack.c.l.b16 %v4526
    %v5135 = vunpack.c.h.b16 %v4526
    %v5136 = vunpack.c.l.b16 %v4527
    %v5137 = vunpack.c.h.b16 %v4527
    %v5138 = vunpack.c.l.b16 %v4528
    %v5139 = vunpack.c.h.b16 %v4528
    %v5140 = vunpack.c.l.b16 %v4529
    %v5141 = vunpack.c.h.b16 %v4529
    %v5142 = vunpack.c.l.b16 %v4530
    %v5143 = vunpack.c.h.b16 %v4530
    %v5144 = vunpack.c.l.b16 %v4531
    %v5145 = vunpack.c.h.b16 %v4531
    %v5146 = vunpack.c.l.b16 %v4532
    %v5147 = vunpack.c.h.b16 %v4532
    %v5148 = vunpack.c.l.b16 %v4533
    %v5149 = vunpack.c.h.b16 %v4533
    %v5150 = vunpack.c.l.b16 %v4534
    %v5151 = vunpack.c.h.b16 %v4534
    %v5152 = vunpack.c.l.b16 %v4535
    %v5153 = vunpack.c.h.b16 %v4535
    %v5154 = vunpack.c.l.b16 %v4536
    %v5155 = vunpack.c.h.b16 %v4536
    %v5156 = vunpack.c.l.b16 %v4537
    %v5157 = vunpack.c.h.b16 %v4537
    %v5158 = vunpack.c.l.b16 %v4538
    %v5159 = vunpack.c.h.b16 %v4538
    %v5160 = vunpack.c.l.b16 %v4539
    %v5161 = vunpack.c.h.b16 %v4539
    %v5162 = vunpack.c.l.b16 %v4540
    %v5163 = vunpack.c.h.b16 %v4540
    %v5164 = vunpack.c.l.b16 %v4541
    %v5165 = vunpack.c.h.b16 %v4541
    %v5166 = vunpack.c.l.b16 %v4542
    %v5167 = vunpack.c.h.b16 %v4542
    %v5168 = vunpack.c.l.b16 %v4543
    %v5169 = vunpack.c.h.b16 %v4543
    %v5170 = vunpack.c.l.b16 %v4544
    %v5171 = vunpack.c.h.b16 %v4544
    %v5172 = vunpack.c.l.b16 %v4545
    %v5173 = vunpack.c.h.b16 %v4545
    %v5174 = vunpack.c.l.b16 %v4546
    %v5175 = vunpack.c.h.b16 %v4546
    %v5176 = vunpack.c.l.b16 %v4547
    %v5177 = vunpack.c.h.b16 %v4547
    %v5178 = vunpack.c.l.b16 %v4548
    %v5179 = vunpack.c.h.b16 %v4548
    %v5180 = vunpack.c.l.b16 %v4549
    %v5181 = vunpack.c.h.b16 %v4549
    %v5182 = vunpack.c.l.b16 %v4550
    %v5183 = vunpack.c.h.b16 %v4550
    %v5184 = vunpack.c.l.b16 %v4551
    %v5185 = vunpack.c.h.b16 %v4551
    %v5186 = vunpack.c.l.b16 %v4552
    %v5187 = vunpack.c.h.b16 %v4552
    %v5188 = vunpack.c.l.b16 %v4553
    %v5189 = vunpack.c.h.b16 %v4553
    %v5190 = vunpack.c.l.b16 %v4554
    %v5191 = vunpack.c.h.b16 %v4554
    %v5192 = vunpack.c.l.b16 %v4555
    %v5193 = vunpack.c.h.b16 %v4555
    %v5194 = vunpack.c.l.b16 %v4556
    %v5195 = vunpack.c.h.b16 %v4556
    %v5196 = vunpack.c.l.b16 %v4557
    %v5197 = vunpack.c.h.b16 %v4557
    %v5198 = vunpack.c.l.b16 %v4558
    %v5199 = vunpack.c.h.b16 %v4558
    %v5200 = vunpack.c.l.b16 %v4559
    %v5201 = vunpack.c.h.b16 %v4559
    %v5202 = vunpack.c.l.b16 %v4560
    %v5203 = vunpack.c.h.b16 %v4560
    %v5204 = vunpack.c.l.b16 %v4561
    %v5205 = vunpack.c.h.b16 %v4561
    %v5206 = vunpack.c.l.b16 %v4562
    %v5207 = vunpack.c.h.b16 %v4562
    %v5208 = vunpack.c.l.b16 %v4563
    %v5209 = vunpack.c.h.b16 %v4563
    %v5210 = vunpack.c.l.b16 %v4564
    %v5211 = vunpack.c.h.b16 %v4564
    %v5212 = vunpack.c.l.b16 %v4565
    %v5213 = vunpack.c.h.b16 %v4565
    %v5214 = vunpack.c.l.b16 %v4566
    %v5215 = vunpack.c.h.b16 %v4566
    %v5216 = vunpack.c.l.b16 %v4567
    %v5217 = vunpack.c.h.b16 %v4567
    %v5218 = vunpack.c.l.b16 %v4568
    %v5219 = vunpack.c.h.b16 %v4568
    %v5220 = vunpack.c.l.b16 %v4569
    %v5221 = vunpack.c.h.b16 %v4569
    %v5222 = vunpack.c.l.b16 %v4570
    %v5223 = vunpack.c.h.b16 %v4570
    %v5224 = vunpack.c.l.b16 %v4571
    %v5225 = vunpack.c.h.b16 %v4571
    %v5226 = vunpack.c.l.b16 %v4572
    %v5227 = vunpack.c.h.b16 %v4572
    %v5228 = vunpack.c.l.b16 %v4573
    %v5229 = vunpack.c.h.b16 %v4573
    %v5230 = vunpack.c.l.b16 %v4574
    %v5231 = vunpack.c.h.b16 %v4574
    %v5232 = vunpack.c.l.b16 %v4575
    %v5233 = vunpack.c.h.b16 %v4575
    %v5234 = vunpack.c.l.b16 %v4576
    %v5235 = vunpack.c.h.b16 %v4576
    %v5236 = vunpack.c.l.b16 %v4577
    %v5237 = vunpack.c.h.b16 %v4577
    %v5238 = vunpack.c.l.b16 %v4578
    %v5239 = vunpack.c.h.b16 %v4578
    %v5240 = vunpack.c.l.b16 %v4579
    %v5241 = vunpack.c.h.b16 %v4579
    %v5242 = vunpack.c.l.b16 %v4580
    %v5243 = vunpack.c.h.b16 %v4580
    %v5244 = vunpack.c.l.b16 %v4581
    %v5245 = vunpack.c.h.b16 %v4581
    %v5246 = vunpack.c.l.b16 %v4582
    %v5247 = vunpack.c.h.b16 %v4582
    %v5248 = vunpack.c.l.b16 %v4583
    %v5249 = vunpack.c.h.b16 %v4583
    %v5250 = vunpack.c.l.b16 %v4584
    %v5251 = vunpack.c.h.b16 %v4584
    %v5252 = vunpack.c.l.b16 %v4585
    %v5253 = vunpack.c.h.b16 %v4585
    %v5254 = vunpack.c.l.b16 %v4586
    %v5255 = vunpack.c.h.b16 %v4586
    %v5256 = vunpack.c.l.b16 %v4587
    %v5257 = vunpack.c.h.b16 %v4587
    %v5258 = vunpack.c.l.b16 %v4588
    %v5259 = vunpack.c.h.b16 %v4588
    %v5260 = vunpack.c.l.b16 %v4589
    %v5261 = vunpack.c.h.b16 %v4589
    %v5262 = vunpack.c.l.b16 %v4590
    %v5263 = vunpack.c.h.b16 %v4590
    %v5264 = vunpack.c.l.b16 %v4591
    %v5265 = vunpack.c.h.b16 %v4591
    %v5266 = vunpack.c.l.b16 %v4592
    %v5267 = vunpack.c.h.b16 %v4592
    %v5268 = vunpack.c.l.b16 %v4593
    %v5269 = vunpack.c.h.b16 %v4593
    %v5270 = vunpack.c.l.b16 %v4594
    %v5271 = vunpack.c.h.b16 %v4594
    %v5272 = vunpack.c.l.b16 %v4595
    %v5273 = vunpack.c.h.b16 %v4595
    %v5274 = vunpack.c.l.b16 %v4596
    %v5275 = vunpack.c.h.b16 %v4596
    %v5276 = vunpack.c.l.b16 %v4597
    %v5277 = vunpack.c.h.b16 %v4597
    %v5278 = vunpack.c.l.b16 %v4598
    %v5279 = vunpack.c.h.b16 %v4598
    %v5280 = vunpack.c.l.b16 %v4599
    %v5281 = vunpack.c.h.b16 %v4599
    %v5282 = vunpack.c.l.b16 %v4600
    %v5283 = vunpack.c.h.b16 %v4600
    %v5284 = vunpack.c.l.b16 %v4601
    %v5285 = vunpack.c.h.b16 %v4601
    %v5286 = vunpack.c.l.b16 %v4602
    %v5287 = vunpack.c.h.b16 %v4602
    %v5288 = vunpack.c.l.b16 %v4603
    %v5289 = vunpack.c.h.b16 %v4603
    %v5290 = vunpack.c.l.b16 %v4604
    %v5291 = vunpack.c.h.b16 %v4604
    %v5292 = vunpack.c.l.b16 %v4605
    %v5293 = vunpack.c.h.b16 %v4605
    %v5294 = vunpack.c.l.b16 %v4606
    %v5295 = vunpack.c.h.b16 %v4606
    %v5296 = vunpack.c.l.b16 %v4607
    %v5297 = vunpack.c.h.b16 %v4607
    %v5298 = vunpack.c.l.b16 %v4608
    %v5299 = vunpack.c.h.b16 %v4608
    %v5300 = vunpack.c.l.b16 %v4609
    %v5301 = vunpack.c.h.b16 %v4609
    %v5302 = vunpack.c.l.b16 %v4610
    %v5303 = vunpack.c.h.b16 %v4610
    %v5304 = vunpack.c.l.b16 %v4611
    %v5305 = vunpack.c.h.b16 %v4611
    %v5306 = vunpack.c.l.b16 %v4612
    %v5307 = vunpack.c.h.b16 %v4612
    %v5308 = vunpack.c.l.b16 %v4613
    %v5309 = vunpack.c.h.b16 %v4613
    %v5310 = vunpack.c.l.b16 %v4614
    %v5311 = vunpack.c.h.b16 %v4614
    %v5312 = vunpack.c.l.b16 %v4615
    %v5313 = vunpack.c.h.b16 %v4615
    %v5314 = vunpack.c.l.b16 %v4616
    %v5315 = vunpack.c.h.b16 %v4616
    %v5316 = vunpack.c.l.b16 %v4617
    %v5317 = vunpack.c.h.b16 %v4617
    %v5318 = vunpack.c.l.b16 %v4618
    %v5319 = vunpack.c.h.b16 %v4618
    %v5320 = vunpack.c.l.b16 %v4619
    %v5321 = vunpack.c.h.b16 %v4619
    %v5322 = vunpack.c.l.b16 %v4620
    %v5323 = vunpack.c.h.b16 %v4620
    %v5324 = vunpack.c.l.b16 %v4621
    %v5325 = vunpack.c.h.b16 %v4621
    %v5326 = vunpack.c.l.b16 %v4622
    %v5327 = vunpack.c.h.b16 %v4622
    %v5328 = vunpack.c.l.b16 %v4623
    %v5329 = vunpack.c.h.b16 %v4623
    %v5330 = vunpack.c.l.b16 %v4624
    %v5331 = vunpack.c.h.b16 %v4624
    %v5332 = vunpack.c.l.b16 %v4625
    %v5333 = vunpack.c.h.b16 %v4625
    %v5334 = vunpack.c.l.b16 %v4626
    %v5335 = vunpack.c.h.b16 %v4626
    %v5336 = vunpack.c.l.b16 %v4627
    %v5337 = vunpack.c.h.b16 %v4627
    %v5338 = vunpack.c.l.b16 %v4628
    %v5339 = vunpack.c.h.b16 %v4628
    %v5340 = vunpack.c.l.b16 %v4629
    %v5341 = vunpack.c.h.b16 %v4629
    %v5342 = vunpack.c.l.b16 %v4630
    %v5343 = vunpack.c.h.b16 %v4630
    %v5344 = vunpack.c.l.b16 %v4631
    %v5345 = vunpack.c.h.b16 %v4631
    %v5346 = vunpack.c.l.b16 %v4632
    %v5347 = vunpack.c.h.b16 %v4632
    %v5348 = vunpack.c.l.b16 %v4633
    %v5349 = vunpack.c.h.b16 %v4633
    %v5350 = vunpack.c.l.b16 %v4634
    %v5351 = vunpack.c.h.b16 %v4634
    %v5352 = vunpack.c.l.b16 %v4635
    %v5353 = vunpack.c.h.b16 %v4635
    %v5354 = vunpack.c.l.b16 %v4636
    %v5355 = vunpack.c.h.b16 %v4636
    %v5356 = vunpack.c.l.b16 %v4637
    %v5357 = vunpack.c.h.b16 %v4637
    %v5358 = vunpack.c.l.b16 %v4638
    %v5359 = vunpack.c.h.b16 %v4638
    %v5360 = vunpack.c.l.b16 %v4639
    %v5361 = vunpack.c.h.b16 %v4639
    %v5362 = vunpack.c.l.b16 %v4640
    %v5363 = vunpack.c.h.b16 %v4640
    %v5364 = vunpack.c.l.b16 %v4641
    %v5365 = vunpack.c.h.b16 %v4641
    %v5366 = vunpack.c.l.b16 %v4642
    %v5367 = vunpack.c.h.b16 %v4642
    %v5368 = vunpack.c.l.b16 %v4643
    %v5369 = vunpack.c.h.b16 %v4643
    %v5370 = vunpack.c.l.b16 %v4644
    %v5371 = vunpack.c.h.b16 %v4644
    %v5372 = vunpack.c.l.b16 %v4645
    %v5373 = vunpack.c.h.b16 %v4645
    %v5374 = vunpack.c.l.b16 %v4646
    %v5375 = vunpack.c.h.b16 %v4646
    %v5376 = vunpack.c.l.b16 %v4647
    %v5377 = vunpack.c.h.b16 %v4647
    %v5378 = vunpack.c.l.b16 %v4648
    %v5379 = vunpack.c.h.b16 %v4648
    %v5380 = vunpack.c.l.b16 %v4649
    %v5381 = vunpack.c.h.b16 %v4649
    %v5382 = vunpack.c.l.b16 %v4650
    %v5383 = vunpack.c.h.b16 %v4650
    %v5384 = vunpack.c.l.b16 %v4651
    %v5385 = vunpack.c.h.b16 %v4651
    %v5386 = vunpack.c.l.b16 %v4652
    %v5387 = vunpack.c.h.b16 %v4652
    %v5388 = vunpack.c.l.b16 %v4653
    %v5389 = vunpack.c.h.b16 %v4653
    %v5390 = vunpack.c.l.b16 %v4654
    %v5391 = vunpack.c.h.b16 %v4654
    %v5392 = vunpack.c.l.b16 %v4655
    %v5393 = vunpack.c.h.b16 %v4655
    %v5394 = vunpack.c.l.b16 %v4656
    %v5395 = vunpack.c.h.b16 %v4656
    %v5396 = vunpack.c.l.b16 %v4657
    %v5397 = vunpack.c.h.b16 %v4657
    %v5398 = vunpack.c.l.b16 %v4658
    %v5399 = vunpack.c.h.b16 %v4658
    %v5400 = vunpack.c.l.b16 %v4659
    %v5401 = vunpack.c.h.b16 %v4659
    %v5402 = vunpack.c.l.b16 %v4660
    %v5403 = vunpack.c.h.b16 %v4660
    %v5404 = vunpack.c.l.b16 %v4661
    %v5405 = vunpack.c.h.b16 %v4661
    %v5406 = vunpack.c.l.b16 %v4662
    %v5407 = vunpack.c.h.b16 %v4662
    %v5408 = vunpack.c.l.b16 %v4663
    %v5409 = vunpack.c.h.b16 %v4663
    %v5410 = vunpack.c.l.b16 %v4664
    %v5411 = vunpack.c.h.b16 %v4664
    %v5412 = vunpack.c.l.b16 %v4665
    %v5413 = vunpack.c.h.b16 %v4665
    %v5414 = vunpack.c.l.b16 %v4666
    %v5415 = vunpack.c.h.b16 %v4666
    %v5416 = vunpack.c.l.b16 %v4667
    %v5417 = vunpack.c.h.b16 %v4667
    %v5418 = vunpack.c.l.b16 %v4668
    %v5419 = vunpack.c.h.b16 %v4668
    %v5420 = vunpack.c.l.b16 %v4669
    %v5421 = vunpack.c.h.b16 %v4669
    %v5422 = vunpack.c.l.b16 %v4670
    %v5423 = vunpack.c.h.b16 %v4670
    %v5424 = vunpack.c.l.b16 %v4671
    %v5425 = vunpack.c.h.b16 %v4671
    %v5426 = vunpack.c.l.b16 %v4672
    %v5427 = vunpack.c.h.b16 %v4672
    %v5428 = vunpack.c.l.b16 %v4673
    %v5429 = vunpack.c.h.b16 %v4673
    %v5430 = vunpack.c.l.b16 %v4674
    %v5431 = vunpack.c.h.b16 %v4674
    %v5432 = vunpack.c.l.b16 %v4675
    %v5433 = vunpack.c.h.b16 %v4675
    %v5434 = vunpack.c.l.b16 %v4676
    %v5435 = vunpack.c.h.b16 %v4676
    %v5436 = vunpack.c.l.b16 %v4677
    %v5437 = vunpack.c.h.b16 %v4677
    %v5438 = vunpack.c.l.b16 %v4678
    %v5439 = vunpack.c.h.b16 %v4678
    %v5440 = vunpack.c.l.b16 %v4679
    %v5441 = vunpack.c.h.b16 %v4679
    %v5442 = vunpack.c.l.b16 %v4680
    %v5443 = vunpack.c.h.b16 %v4680
    %v5444 = vunpack.c.l.b16 %v4681
    %v5445 = vunpack.c.h.b16 %v4681
    %v5446 = vunpack.c.l.b16 %v4682
    %v5447 = vunpack.c.h.b16 %v4682
    %v5448 = vunpack.c.l.b16 %v4683
    %v5449 = vunpack.c.h.b16 %v4683
    %v5450 = vunpack.c.l.b16 %v4684
    %v5451 = vunpack.c.h.b16 %v4684
    %v5452 = vunpack.c.l.b16 %v4685
    %v5453 = vunpack.c.h.b16 %v4685
    %v5454 = vunpack.c.l.b16 %v4686
    %v5455 = vunpack.c.h.b16 %v4686
    %v5456 = vunpack.c.l.b16 %v4687
    %v5457 = vunpack.c.h.b16 %v4687
    %v5458 = vunpack.c.l.b16 %v4688
    %v5459 = vunpack.c.h.b16 %v4688
    %v5460 = vunpack.c.l.b16 %v4689
    %v5461 = vunpack.c.h.b16 %v4689
    %v5462 = vunpack.c.l.b16 %v4690
    %v5463 = vunpack.c.h.b16 %v4690
    %v5464 = vunpack.c.l.b16 %v4691
    %v5465 = vunpack.c.h.b16 %v4691
    %v5466 = vunpack.c.l.b16 %v4692
    %v5467 = vunpack.c.h.b16 %v4692
    %v5468 = vunpack.c.l.b16 %v4693
    %v5469 = vunpack.c.h.b16 %v4693
    %v5470 = vunpack.c.l.b16 %v4694
    %v5471 = vunpack.c.h.b16 %v4694
    %v5472 = vunpack.c.l.b16 %v4695
    %v5473 = vunpack.c.h.b16 %v4695
    %v5474 = vunpack.c.l.b16 %v4696
    %v5475 = vunpack.c.h.b16 %v4696
    %v5476 = vunpack.c.l.b16 %v4697
    %v5477 = vunpack.c.h.b16 %v4697
    %v5478 = vunpack.c.l.b16 %v4698
    %v5479 = vunpack.c.h.b16 %v4698
    %v5480 = vunpack.c.l.b16 %v4699
    %v5481 = vunpack.c.h.b16 %v4699
    %v5482 = vunpack.c.l.b16 %v4700
    %v5483 = vunpack.c.h.b16 %v4700
    %v5484 = vunpack.c.l.b16 %v4701
    %v5485 = vunpack.c.h.b16 %v4701
    %v5486 = vunpack.c.l.b16 %v4702
    %v5487 = vunpack.c.h.b16 %v4702
    %v5488 = vunpack.c.l.b16 %v4703
    %v5489 = vunpack.c.h.b16 %v4703
    %v5490 = vunpack.c.l.b16 %v4704
    %v5491 = vunpack.c.h.b16 %v4704
    %v5492 = vunpack.c.l.b16 %v4705
    %v5493 = vunpack.c.h.b16 %v4705
    %v5494 = vunpack.c.l.b16 %v4706
    %v5495 = vunpack.c.h.b16 %v4706
    %v5496 = vunpack.c.l.b16 %v4707
    %v5497 = vunpack.c.h.b16 %v4707
    %v5498 = vunpack.c.l.b16 %v4708
    %v5499 = vunpack.c.h.b16 %v4708
    %v5500 = vunpack.c.l.b16 %v4709
    %v5501 = vunpack.c.h.b16 %v4709
    %v5502 = vunpack.c.l.b16 %v4710
    %v5503 = vunpack.c.h.b16 %v4710
    %v5504 = vunpack.c.l.b16 %v4711
    %v5505 = vunpack.c.h.b16 %v4711
    %v5506 = vunpack.c.l.b16 %v4712
    %v5507 = vunpack.c.h.b16 %v4712
    %v5508 = vunpack.c.l.b16 %v4713
    %v5509 = vunpack.c.h.b16 %v4713
    %v5510 = vunpack.c.l.b16 %v4714
    %v5511 = vunpack.c.h.b16 %v4714
    %v5512 = vunpack.c.l.b16 %v4715
    %v5513 = vunpack.c.h.b16 %v4715
    %v5514 = vunpack.c.l.b16 %v4716
    %v5515 = vunpack.c.h.b16 %v4716
    %v5516 = vunpack.c.l.b16 %v4717
    %v5517 = vunpack.c.h.b16 %v4717
    %v5518 = vunpack.c.l.b16 %v4718
    %v5519 = vunpack.c.h.b16 %v4718
    %v5520 = vunpack.c.l.b16 %v4719
    %v5521 = vunpack.c.h.b16 %v4719
    %v5522 = vunpack.c.l.b16 %v4720
    %v5523 = vunpack.c.h.b16 %v4720
    %v5524 = vunpack.c.l.b16 %v4721
    %v5525 = vunpack.c.h.b16 %v4721
    %v5526 = vunpack.c.l.b16 %v4722
    %v5527 = vunpack.c.h.b16 %v4722
    %v5528 = vunpack.c.l.b16 %v4723
    %v5529 = vunpack.c.h.b16 %v4723
    %v5530 = vunpack.c.l.b16 %v4724
    %v5531 = vunpack.c.h.b16 %v4724
    %v5532 = vunpack.c.l.b16 %v4725
    %v5533 = vunpack.c.h.b16 %v4725
    %v5534 = vunpack.c.l.b16 %v4726
    %v5535 = vunpack.c.h.b16 %v4726
    %v5536 = vunpack.c.l.b16 %v4727
    %v5537 = vunpack.c.h.b16 %v4727
    %v5538 = vunpack.c.l.b16 %v4728
    %v5539 = vunpack.c.h.b16 %v4728
    %v5540 = vunpack.c.l.b16 %v4729
    %v5541 = vunpack.c.h.b16 %v4729
    %v5542 = vunpack.c.l.b16 %v4730
    %v5543 = vunpack.c.h.b16 %v4730
    %v5544 = vunpack.c.l.b16 %v4731
    %v5545 = vunpack.c.h.b16 %v4731
    %v5546 = vunpack.c.l.b16 %v4732
    %v5547 = vunpack.c.h.b16 %v4732
    %v5548 = vunpack.c.l.b16 %v4733
    %v5549 = vunpack.c.h.b16 %v4733
    %v5550 = vunpack.c.l.b16 %v4734
    %v5551 = vunpack.c.h.b16 %v4734
    %v5552 = vunpack.c.l.b16 %v4735
    %v5553 = vunpack.c.h.b16 %v4735
    %v5554 = vunpack.c.l.b16 %v4736
    %v5555 = vunpack.c.h.b16 %v4736
    %v5556 = vunpack.c.l.b16 %v4737
    %v5557 = vunpack.c.h.b16 %v4737
    %v5558 = vunpack.c.l.b16 %v4738
    %v5559 = vunpack.c.h.b16 %v4738
    %v5560 = vunpack.c.l.b16 %v4739
    %v5561 = vunpack.c.h.b16 %v4739
    %v5562 = vunpack.c.l.b16 %v4740
    %v5563 = vunpack.c.h.b16 %v4740
    %v5564 = vunpack.c.l.b16 %v4741
    %v5565 = vunpack.c.h.b16 %v4741
    %v5566 = vunpack.c.l.b16 %v4742
    %v5567 = vunpack.c.h.b16 %v4742
    %v5568 = vunpack.c.l.b16 %v4743
    %v5569 = vunpack.c.h.b16 %v4743
    %v5570 = vunpack.c.l.b16 %v4744
    %v5571 = vunpack.c.h.b16 %v4744
    %v5572 = vunpack.c.l.b16 %v4745
    %v5573 = vunpack.c.h.b16 %v4745
    %v5574 = vunpack.c.l.b16 %v4746
    %v5575 = vunpack.c.h.b16 %v4746
    %v5576 = vunpack.c.l.b16 %v4747
    %v5577 = vunpack.c.h.b16 %v4747
    %v5578 = vunpack.c.l.b16 %v4748
    %v5579 = vunpack.c.h.b16 %v4748
    %v5580 = vunpack.c.l.b16 %v4749
    %v5581 = vunpack.c.h.b16 %v4749
    %v5582 = vunpack.c.l.b16 %v4750
    %v5583 = vunpack.c.h.b16 %v4750
    %v5584 = vunpack.c.l.b16 %v4751
    %v5585 = vunpack.c.h.b16 %v4751
    %v5586 = vunpack.c.l.b16 %v4752
    %v5587 = vunpack.c.h.b16 %v4752
    %v5588 = vunpack.c.l.b16 %v4753
    %v5589 = vunpack.c.h.b16 %v4753
    %v5590 = vunpack.c.l.b16 %v4754
    %v5591 = vunpack.c.h.b16 %v4754
    %v5592 = vunpack.c.l.b16 %v4755
    %v5593 = vunpack.c.h.b16 %v4755
    %v5594 = vunpack.c.l.b16 %v4756
    %v5595 = vunpack.c.h.b16 %v4756
    %v5596 = vunpack.c.l.b16 %v4757
    %v5597 = vunpack.c.h.b16 %v4757
    %v5598 = vunpack.c.l.b16 %v4758
    %v5599 = vunpack.c.h.b16 %v4758
    %v5600 = vunpack.c.l.b16 %v4759
    %v5601 = vunpack.c.h.b16 %v4759
    %v5602 = vunpack.c.l.b16 %v4760
    %v5603 = vunpack.c.h.b16 %v4760
    %v5604 = vunpack.c.l.b16 %v4761
    %v5605 = vunpack.c.h.b16 %v4761
    %v5606 = vunpack.c.l.b16 %v4762
    %v5607 = vunpack.c.h.b16 %v4762
    %v5608 = vunpack.c.l.b16 %v4763
    %v5609 = vunpack.c.h.b16 %v4763
    %v5610 = vunpack.c.l.b16 %v4764
    %v5611 = vunpack.c.h.b16 %v4764
    %v5612 = vunpack.c.l.b16 %v4765
    %v5613 = vunpack.c.h.b16 %v4765
    %v5614 = vunpack.c.l.b16 %v4766
    %v5615 = vunpack.c.h.b16 %v4766
    %v5616 = vunpack.c.l.b16 %v4767
    %v5617 = vunpack.c.h.b16 %v4767
    %v5618 = vunpack.c.l.b16 %v4768
    %v5619 = vunpack.c.h.b16 %v4768
    %v5620 = vunpack.c.l.b16 %v4769
    %v5621 = vunpack.c.h.b16 %v4769
    %v5622 = vunpack.c.l.b16 %v4770
    %v5623 = vunpack.c.h.b16 %v4770
    %v5624 = vunpack.c.l.b16 %v4771
    %v5625 = vunpack.c.h.b16 %v4771
    %v5626 = vunpack.c.l.b16 %v4772
    %v5627 = vunpack.c.h.b16 %v4772
    %v5628 = vunpack.c.l.b16 %v4773
    %v5629 = vunpack.c.h.b16 %v4773
    %v5630 = vunpack.c.l.b16 %v4774
    %v5631 = vunpack.c.h.b16 %v4774
    %v5632 = vunpack.c.l.b16 %v4775
    %v5633 = vunpack.c.h.b16 %v4775
    %v5634 = vunpack.c.l.b16 %v4776
    %v5635 = vunpack.c.h.b16 %v4776
    %v5636 = vunpack.c.l.b16 %v4777
    %v5637 = vunpack.c.h.b16 %v4777
    %v5638 = vunpack.c.l.b16 %v4778
    %v5639 = vunpack.c.h.b16 %v4778
    %v5640 = vunpack.c.l.b16 %v4779
    %v5641 = vunpack.c.h.b16 %v4779
    %v5642 = vunpack.c.l.b16 %v4780
    %v5643 = vunpack.c.h.b16 %v4780
    %v5644 = vunpack.c.l.b16 %v4781
    %v5645 = vunpack.c.h.b16 %v4781
    %v5646 = vpack.c.b16 %v5076, %v5070
    %v5647 = vpack.c.b16 %v5077, %v5071
    %v5648 = vpack.c.b16 %v5078, %v5072
    %v5649 = vpack.c.b16 %v5079, %v5073
    %v5650 = vpack.c.b16 %v5080, %v5074
    %v5651 = vpack.c.b16 %v5081, %v5075
    %v5652 = vpack.c.b16 %v5088, %v5082
    %v5653 = vpack.c.b16 %v5089, %v5083
    %v5654 = vpack.c.b16 %v5090, %v5084
    %v5655 = vpack.c.b16 %v5091, %v5085
    %v5656 = vpack.c.b16 %v5092, %v5086
    %v5657 = vpack.c.b16 %v5093, %v5087
    %v5658 = vpack.c.b16 %v5100, %v5094
    %v5659 = vpack.c.b16 %v5101, %v5095
    %v5660 = vpack.c.b16 %v5102, %v5096
    %v5661 = vpack.c.b16 %v5103, %v5097
    %v5662 = vpack.c.b16 %v5104, %v5098
    %v5663 = vpack.c.b16 %v5105, %v5099
    %v5664 = vpack.c.b16 %v5112, %v5106
    %v5665 = vpack.c.b16 %v5113, %v5107
    %v5666 = vpack.c.b16 %v5114, %v5108
    %v5667 = vpack.c.b16 %v5115, %v5109
    %v5668 = vpack.c.b16 %v5116, %v5110
    %v5669 = vpack.c.b16 %v5117, %v5111
    %v5670 = vpack.c.b16 %v5124, %v5118
    %v5671 = vpack.c.b16 %v5125, %v5119
    %v5672 = vpack.c.b16 %v5126, %v5120
    %v5673 = vpack.c.b16 %v5127, %v5121
    %v5674 = vpack.c.b16 %v5128, %v5122
    %v5675 = vpack.c.b16 %v5129, %v5123
    %v5676 = vpack.c.b16 %v5136, %v5130
    %v5677 = vpack.c.b16 %v5137, %v5131
    %v5678 = vpack.c.b16 %v5138, %v5132
    %v5679 = vpack.c.b16 %v5139, %v5133
    %v5680 = vpack.c.b16 %v5140, %v5134
    %v5681 = vpack.c.b16 %v5141, %v5135
    %v5682 = vpack.c.b16 %v5148, %v5142
    %v5683 = vpack.c.b16 %v5149, %v5143
    %v5684 = vpack.c.b16 %v5150, %v5144
    %v5685 = vpack.c.b16 %v5151, %v5145
    %v5686 = vpack.c.b16 %v5152, %v5146
    %v5687 = vpack.c.b16 %v5153, %v5147
    %v5688 = vpack.c.b16 %v5160, %v5154
    %v5689 = vpack.c.b16 %v5161, %v5155
    %v5690 = vpack.c.b16 %v5162, %v5156
    %v5691 = vpack.c.b16 %v5163, %v5157
    %v5692 = vpack.c.b16 %v5164, %v5158
    %v5693 = vpack.c.b16 %v5165, %v5159
    %v5694 = vpack.c.b16 %v5172, %v5166
    %v5695 = vpack.c.b16 %v5173, %v5167
    %v5696 = vpack.c.b16 %v5174, %v5168
    %v5697 = vpack.c.b16 %v5175, %v5169
    %v5698 = vpack.c.b16 %v5176, %v5170
    %v5699 = vpack.c.b16 %v5177, %v5171
    %v5700 = vpack.c.b16 %v5184, %v5178
    %v5701 = vpack.c.b16 %v5185, %v5179
    %v5702 = vpack.c.b16 %v5186, %v5180
    %v5703 = vpack.c.b16 %v5187, %v5181
    %v5704 = vpack.c.b16 %v5188, %v5182
    %v5705 = vpack.c.b16 %v5189, %v5183
    %v5706 = vpack.c.b16 %v5196, %v5190
    %v5707 = vpack.c.b16 %v5197, %v5191
    %v5708 = vpack.c.b16 %v5198, %v5192
    %v5709 = vpack.c.b16 %v5199, %v5193
    %v5710 = vpack.c.b16 %v5200, %v5194
    %v5711 = vpack.c.b16 %v5201, %v5195
    %v5712 = vpack.c.b16 %v5208, %v5202
    %v5713 = vpack.c.b16 %v5209, %v5203
    %v5714 = vpack.c.b16 %v5210, %v5204
    %v5715 = vpack.c.b16 %v5211, %v5205
    %v5716 = vpack.c.b16 %v5212, %v5206
    %v5717 = vpack.c.b16 %v5213, %v5207
    %v5718 = vpack.c.b16 %v5220, %v5214
    %v5719 = vpack.c.b16 %v5221, %v5215
    %v5720 = vpack.c.b16 %v5222, %v5216
    %v5721 = vpack.c.b16 %v5223, %v5217
    %v5722 = vpack.c.b16 %v5224, %v5218
    %v5723 = vpack.c.b16 %v5225, %v5219
    %v5724 = vpack.c.b16 %v5232, %v5226
    %v5725 = vpack.c.b16 %v5233, %v5227
    %v5726 = vpack.c.b16 %v5234, %v5228
    %v5727 = vpack.c.b16 %v5235, %v5229
    %v5728 = vpack.c.b16 %v5236, %v5230
    %v5729 = vpack.c.b16 %v5237, %v5231
    %v5730 = vpack.c.b16 %v5244, %v5238
    %v5731 = vpack.c.b16 %v5245, %v5239
    %v5732 = vpack.c.b16 %v5246, %v5240
    %v5733 = vpack.c.b16 %v5247, %v5241
    %v5734 = vpack.c.b16 %v5248, %v5242
    %v5735 = vpack.c.b16 %v5249, %v5243
    %v5736 = vpack.c.b16 %v5256, %v5250
    %v5737 = vpack.c.b16 %v5257, %v5251
    %v5738 = vpack.c.b16 %v5258, %v5252
    %v5739 = vpack.c.b16 %v5259, %v5253
    %v5740 = vpack.c.b16 %v5260, %v5254
    %v5741 = vpack.c.b16 %v5261, %v5255
    %v5742 = vpack.c.b16 %v5268, %v5262
    %v5743 = vpack.c.b16 %v5269, %v5263
    %v5744 = vpack.c.b16 %v5270, %v5264
    %v5745 = vpack.c.b16 %v5271, %v5265
    %v5746 = vpack.c.b16 %v5272, %v5266
    %v5747 = vpack.c.b16 %v5273, %v5267
    %v5748 = vpack.c.b16 %v5280, %v5274
    %v5749 = vpack.c.b16 %v5281, %v5275
    %v5750 = vpack.c.b16 %v5282, %v5276
    %v5751 = vpack.c.b16 %v5283, %v5277
    %v5752 = vpack.c.b16 %v5284, %v5278
    %v5753 = vpack.c.b16 %v5285, %v5279
    %v5754 = vpack.c.b16 %v5292, %v5286
    %v5755 = vpack.c.b16 %v5293, %v5287
    %v5756 = vpack.c.b16 %v5294, %v5288
    %v5757 = vpack.c.b16 %v5295, %v5289
    %v5758 = vpack.c.b16 %v5296, %v5290
    %v5759 = vpack.c.b16 %v5297, %v5291
    %v5760 = vpack.c.b16 %v5304, %v5298
    %v5761 = vpack.c.b16 %v5305, %v5299
    %v5762 = vpack.c.b16 %v5306, %v5300
    %v5763 = vpack.c.b16 %v5307, %v5301
    %v5764 = vpack.c.b16 %v5308, %v5302
    %v5765 = vpack.c.b16 %v5309, %v5303
    %v5766 = vpack.c.b16 %v5316, %v5310
    %v5767 = vpack.c.b16 %v5317, %v5311
    %v5768 = vpack.c.b16 %v5318, %v5312
    %v5769 = vpack.c.b16 %v5319, %v5313
    %v5770 = vpack.c.b16 %v5320, %v5314
    %v5771 = vpack.c.b16 %v5321, %v5315
    %v5772 = vpack.c.b16 %v5328, %v5322
    %v5773 = vpack.c.b16 %v5329, %v5323
    %v5774 = vpack.c.b16 %v5330, %v5324
    %v5775 = vpack.c.b16 %v5331, %v5325
    %v5776 = vpack.c.b16 %v5332, %v5326
    %v5777 = vpack.c.b16 %v5333, %v5327
    %v5778 = vpack.c.b16 %v5340, %v5334
    %v5779 = vpack.c.b16 %v5341, %v5335
    %v5780 = vpack.c.b16 %v5342, %v5336
    %v5781 = vpack.c.b16 %v5343, %v5337
    %v5782 = vpack.c.b16 %v5344, %v5338
    %v5783 = vpack.c.b16 %v5345, %v5339
    %v5784 = vpack.c.b16 %v5352, %v5346
    %v5785 = vpack.c.b16 %v5353, %v5347
    %v5786 = vpack.c.b16 %v5354, %v5348
    %v5787 = vpack.c.b16 %v5355, %v5349
    %v5788 = vpack.c.b16 %v5356, %v5350
    %v5789 = vpack.c.b16 %v5357, %v5351
    %v5790 = vpack.c.b16 %v5364, %v5358
    %v5791 = vpack.c.b16 %v5365, %v5359
    %v5792 = vpack.c.b16 %v5366, %v5360
    %v5793 = vpack.c.b16 %v5367, %v5361
    %v5794 = vpack.c.b16 %v5368, %v5362
    %v5795 = vpack.c.b16 %v5369, %v5363
    %v5796 = vpack.c.b16 %v5376, %v5370
    %v5797 = vpack.c.b16 %v5377, %v5371
    %v5798 = vpack.c.b16 %v5378, %v5372
    %v5799 = vpack.c.b16 %v5379, %v5373
    %v5800 = vpack.c.b16 %v5380, %v5374
    %v5801 = vpack.c.b16 %v5381, %v5375
    %v5802 = vpack.c.b16 %v5388, %v5382
    %v5803 = vpack.c.b16 %v5389, %v5383
    %v5804 = vpack.c.b16 %v5390, %v5384
    %v5805 = vpack.c.b16 %v5391, %v5385
    %v5806 = vpack.c.b16 %v5392, %v5386
    %v5807 = vpack.c.b16 %v5393, %v5387
    %v5808 = vpack.c.b16 %v5400, %v5394
    %v5809 = vpack.c.b16 %v5401, %v5395
    %v5810 = vpack.c.b16 %v5402, %v5396
    %v5811 = vpack.c.b16 %v5403, %v5397
    %v5812 = vpack.c.b16 %v5404, %v5398
    %v5813 = vpack.c.b16 %v5405, %v5399
    %v5814 = vpack.c.b16 %v5412, %v5406
    %v5815 = vpack.c.b16 %v5413, %v5407
    %v5816 = vpack.c.b16 %v5414, %v5408
    %v5817 = vpack.c.b16 %v5415, %v5409
    %v5818 = vpack.c.b16 %v5416, %v5410
    %v5819 = vpack.c.b16 %v5417, %v5411
    %v5820 = vpack.c.b16 %v5424, %v5418
    %v5821 = vpack.c.b16 %v5425, %v5419
    %v5822 = vpack.c.b16 %v5426, %v5420
    %v5823 = vpack.c.b16 %v5427, %v5421
    %v5824 = vpack.c.b16 %v5428, %v5422
    %v5825 = vpack.c.b16 %v5429, %v5423
    %v5826 = vpack.c.b16 %v5436, %v5430
    %v5827 = vpack.c.b16 %v5437, %v5431
    %v5828 = vpack.c.b16 %v5438, %v5432
    %v5829 = vpack.c.b16 %v5439, %v5433
    %v5830 = vpack.c.b16 %v5440, %v5434
    %v5831 = vpack.c.b16 %v5441, %v5435
    %v5832 = vpack.c.b16 %v5448, %v5442
    %v5833 = vpack.c.b16 %v5449, %v5443
    %v5834 = vpack.c.b16 %v5450, %v5444
    %v5835 = vpack.c.b16 %v5451, %v5445
    %v5836 = vpack.c.b16 %v5452, %v5446
    %v5837 = vpack.c.b16 %v5453, %v5447
    %v5838 = vpack.c.b16 %v5460, %v5454
    %v5839 = vpack.c.b16 %v5461, %v5455
    %v5840 = vpack.c.b16 %v5462, %v5456
    %v5841 = vpack.c.b16 %v5463, %v5457
    %v5842 = vpack.c.b16 %v5464, %v5458
    %v5843 = vpack.c.b16 %v5465, %v5459
    %v5844 = vpack.c.b16 %v5472, %v5466
    %v5845 = vpack.c.b16 %v5473, %v5467
    %v5846 = vpack.c.b16 %v5474, %v5468
    %v5847 = vpack.c.b16 %v5475, %v5469
    %v5848 = vpack.c.b16 %v5476, %v5470
    %v5849 = vpack.c.b16 %v5477, %v5471
    %v5850 = vpack.c.b16 %v5484, %v5478
    %v5851 = vpack.c.b16 %v5485, %v5479
    %v5852 = vpack.c.b16 %v5486, %v5480
    %v5853 = vpack.c.b16 %v5487, %v5481
    %v5854 = vpack.c.b16 %v5488, %v5482
    %v5855 = vpack.c.b16 %v5489, %v5483
    %v5856 = vpack.c.b16 %v5496, %v5490
    %v5857 = vpack.c.b16 %v5497, %v5491
    %v5858 = vpack.c.b16 %v5498, %v5492
    %v5859 = vpack.c.b16 %v5499, %v5493
    %v5860 = vpack.c.b16 %v5500, %v5494
    %v5861 = vpack.c.b16 %v5501, %v5495
    %v5862 = vpack.c.b16 %v5508, %v5502
    %v5863 = vpack.c.b16 %v5509, %v5503
    %v5864 = vpack.c.b16 %v5510, %v5504
    %v5865 = vpack.c.b16 %v5511, %v5505
    %v5866 = vpack.c.b16 %v5512, %v5506
    %v5867 = vpack.c.b16 %v5513, %v5507
    %v5868 = vpack.c.b16 %v5520, %v5514
    %v5869 = vpack.c.b16 %v5521, %v5515
    %v5870 = vpack.c.b16 %v5522, %v5516
    %v5871 = vpack.c.b16 %v5523, %v5517
    %v5872 = vpack.c.b16 %v5524, %v5518
    %v5873 = vpack.c.b16 %v5525, %v5519
    %v5874 = vpack.c.b16 %v5532, %v5526
    %v5875 = vpack.c.b16 %v5533, %v5527
    %v5876 = vpack.c.b16 %v5534, %v5528
    %v5877 = vpack.c.b16 %v5535, %v5529
    %v5878 = vpack.c.b16 %v5536, %v5530
    %v5879 = vpack.c.b16 %v5537, %v5531
    %v5880 = vpack.c.b16 %v5544, %v5538
    %v5881 = vpack.c.b16 %v5545, %v5539
    %v5882 = vpack.c.b16 %v5546, %v5540
    %v5883 = vpack.c.b16 %v5547, %v5541
    %v5884 = vpack.c.b16 %v5548, %v5542
    %v5885 = vpack.c.b16 %v5549, %v5543
    %v5886 = vpack.c.b16 %v5556, %v5550
    %v5887 = vpack.c.b16 %v5557, %v5551
    %v5888 = vpack.c.b16 %v5558, %v5552
    %v5889 = vpack.c.b16 %v5559, %v5553
    %v5890 = vpack.c.b16 %v5560, %v5554
    %v5891 = vpack.c.b16 %v5561, %v5555
    %v5892 = vpack.c.b16 %v5568, %v5562
    %v5893 = vpack.c.b16 %v5569, %v5563
    %v5894 = vpack.c.b16 %v5570, %v5564
    %v5895 = vpack.c.b16 %v5571, %v5565
    %v5896 = vpack.c.b16 %v5572, %v5566
    %v5897 = vpack.c.b16 %v5573, %v5567
    %v5898 = vpack.c.b16 %v5580, %v5574
    %v5899 = vpack.c.b16 %v5581, %v5575
    %v5900 = vpack.c.b16 %v5582, %v5576
    %v5901 = vpack.c.b16 %v5583, %v5577
    %v5902 = vpack.c.b16 %v5584, %v5578
    %v5903 = vpack.c.b16 %v5585, %v5579
    %v5904 = vpack.c.b16 %v5592, %v5586
    %v5905 = vpack.c.b16 %v5593, %v5587
    %v5906 = vpack.c.b16 %v5594, %v5588
    %v5907 = vpack.c.b16 %v5595, %v5589
    %v5908 = vpack.c.b16 %v5596, %v5590
    %v5909 = vpack.c.b16 %v5597, %v5591
    %v5910 = vpack.c.b16 %v5604, %v5598
    %v5911 = vpack.c.b16 %v5605, %v5599
    %v5912 = vpack.c.b16 %v5606, %v5600
    %v5913 = vpack.c.b16 %v5607, %v5601
    %v5914 = vpack.c.b16 %v5608, %v5602
    %v5915 = vpack.c.b16 %v5609, %v5603
    %v5916 = vpack.c.b16 %v5616, %v5610
    %v5917 = vpack.c.b16 %v5617, %v5611
    %v5918 = vpack.c.b16 %v5618, %v5612
    %v5919 = vpack.c.b16 %v5619, %v5613
    %v5920 = vpack.c.b16 %v5620, %v5614
    %v5921 = vpack.c.b16 %v5621, %v5615
    %v5922 = vpack.c.b16 %v5628, %v5622
    %v5923 = vpack.c.b16 %v5629, %v5623
    %v5924 = vpack.c.b16 %v5630, %v5624
    %v5925 = vpack.c.b16 %v5631, %v5625
    %v5926 = vpack.c.b16 %v5632, %v5626
    %v5927 = vpack.c.b16 %v5633, %v5627
    %v5928 = vpack.c.b16 %v5640, %v5634
    %v5929 = vpack.c.b16 %v5641, %v5635
    %v5930 = vpack.c.b16 %v5642, %v5636
    %v5931 = vpack.c.b16 %v5643, %v5637
    %v5932 = vpack.c.b16 %v5644, %v5638
    %v5933 = vpack.c.b16 %v5645, %v5639
    %6222 = vmatprep.subr.bf16.mxu0 %v5647
    %6223 = vmatpush1.bf16.msra.mxu0 %v5646
    %6224 = vmatprep.subr.bf16.mxu0 %v5653
    %6225 = vmatpush1.bf16.msra.mxu0 %v5652
    %6226 = vmatprep.subr.bf16.mxu0 %v5659
    %6227 = vmatpush1.bf16.msra.mxu0 %v5658
    %6228 = vmatprep.subr.bf16.mxu0 %v5665
    %6229 = vmatpush1.bf16.msra.mxu0 %v5664
    %6230 = vmatprep.subr.bf16.mxu0 %v5671
    %6231 = vmatpush1.bf16.msra.mxu0 %v5670
    %6232 = vmatprep.subr.bf16.mxu0 %v5677
    %6233 = vmatpush1.bf16.msra.mxu0 %v5676
    %6234 = vmatprep.subr.bf16.mxu0 %v5683
    %6235 = vmatpush1.bf16.msra.mxu0 %v5682
    %6236 = vmatprep.subr.bf16.mxu0 %v5689
    %6237 = vmatpush1.bf16.msra.mxu0 %v5688
    %6238 = vmatprep.subr.bf16.mxu0 %v5695
    %6239 = vmatpush1.bf16.msra.mxu0 %v5694
    %6240 = vmatprep.subr.bf16.mxu0 %v5701
    %6241 = vmatpush1.bf16.msra.mxu0 %v5700
    %6242 = vmatprep.subr.bf16.mxu0 %v5707
    %6243 = vmatpush1.bf16.msra.mxu0 %v5706
    %6244 = vmatprep.subr.bf16.mxu0 %v5713
    %6245 = vmatpush1.bf16.msra.mxu0 %v5712
    %6246 = vmatprep.subr.bf16.mxu0 %v5719
    %6247 = vmatpush1.bf16.msra.mxu0 %v5718
    %6248 = vmatprep.subr.bf16.mxu0 %v5725
    %6249 = vmatpush1.bf16.msra.mxu0 %v5724
    %6250 = vmatprep.subr.bf16.mxu0 %v5731
    %6251 = vmatpush1.bf16.msra.mxu0 %v5730
    %6252 = vmatprep.subr.bf16.mxu0 %v5737
    %6253 = vmatpush1.bf16.msra.mxu0 %v5736
    %6254 = vmatprep.mubr.bf16.mxu0 %v4489
    %6255 = vmatmul.mubr.bf16.gmra.mrb[0].mxu0 %v4488
    %v6256 = vpop.f32.mrb[0].mxu0
    %v6257 = vadd.f32 0.0, %v6256
    %v6258 = vpop.f32.mrb[0].mxu0
    %v6259 = vadd.f32 0.0, %v6258
    %v6260 = vpop.f32.mrb[0].mxu0
    %v6261 = vpop.f32.mrb[0].mxu0
    %6262 = vdwg.mxu0
    %6263 = vmatprep.subr.bf16.mxu0 %v5743
    %6264 = vmatpush1.bf16.msra.mxu0 %v5742
    %6265 = vmatprep.subr.bf16.mxu0 %v5749
    %6266 = vmatpush1.bf16.msra.mxu0 %v5748
    %6267 = vmatprep.subr.bf16.mxu0 %v5755
    %6268 = vmatpush1.bf16.msra.mxu0 %v5754
    %6269 = vmatprep.subr.bf16.mxu0 %v5761
    %6270 = vmatpush1.bf16.msra.mxu0 %v5760
    %6271 = vmatprep.subr.bf16.mxu0 %v5767
    %6272 = vmatpush1.bf16.msra.mxu0 %v5766
    %6273 = vmatprep.subr.bf16.mxu0 %v5773
    %6274 = vmatpush1.bf16.msra.mxu0 %v5772
    %6275 = vmatprep.subr.bf16.mxu0 %v5779
    %6276 = vmatpush1.bf16.msra.mxu0 %v5778
    %6277 = vmatprep.subr.bf16.mxu0 %v5785
    %6278 = vmatpush1.bf16.msra.mxu0 %v5784
    %6279 = vmatprep.subr.bf16.mxu0 %v5791
    %6280 = vmatpush1.bf16.msra.mxu0 %v5790
    %6281 = vmatprep.subr.bf16.mxu0 %v5797
    %6282 = vmatpush1.bf16.msra.mxu0 %v5796
    %6283 = vmatprep.subr.bf16.mxu0 %v5803
    %6284 = vmatpush1.bf16.msra.mxu0 %v5802
    %6285 = vmatprep.subr.bf16.mxu0 %v5809
    %6286 = vmatpush1.bf16.msra.mxu0 %v5808
    %6287 = vmatprep.subr.bf16.mxu0 %v5815
    %6288 = vmatpush1.bf16.msra.mxu0 %v5814
    %6289 = vmatprep.subr.bf16.mxu0 %v5821
    %6290 = vmatpush1.bf16.msra.mxu0 %v5820
    %6291 = vmatprep.subr.bf16.mxu0 %v5827
    %6292 = vmatpush1.bf16.msra.mxu0 %v5826
    %6293 = vmatprep.subr.bf16.mxu0 %v5833
    %6294 = vmatpush1.bf16.msra.mxu0 %v5832
    %6295 = vmatprep.mubr.bf16.mxu0 %v4491
    %6296 = vmatmul.mubr.bf16.gmra.mrb[0].mxu0 %v4490
    %v6297 = vpop.f32.mrb[0].mxu0
    %v6298 = vadd.f32 %v6257, %v6297
    %v6299 = vpop.f32.mrb[0].mxu0
    %v6300 = vadd.f32 %v6259, %v6299
    %v6301 = vpop.f32.mrb[0].mxu0
    %v6302 = vpop.f32.mrb[0].mxu0
    %6303 = vdwg.mxu0
    %6304 = vmatprep.subr.bf16.mxu0 %v5839
    %6305 = vmatpush1.bf16.msra.mxu0 %v5838
    %6306 = vmatprep.subr.bf16.mxu0 %v5845
    %6307 = vmatpush1.bf16.msra.mxu0 %v5844
    %6308 = vmatprep.subr.bf16.mxu0 %v5851
    %6309 = vmatpush1.bf16.msra.mxu0 %v5850
    %6310 = vmatprep.subr.bf16.mxu0 %v5857
    %6311 = vmatpush1.bf16.msra.mxu0 %v5856
    %6312 = vmatprep.subr.bf16.mxu0 %v5863
    %6313 = vmatpush1.bf16.msra.mxu0 %v5862
    %6314 = vmatprep.subr.bf16.mxu0 %v5869
    %6315 = vmatpush1.bf16.msra.mxu0 %v5868
    %6316 = vmatprep.subr.bf16.mxu0 %v5875
    %6317 = vmatpush1.bf16.msra.mxu0 %v5874
    %6318 = vmatprep.subr.bf16.mxu0 %v5881
    %6319 = vmatpush1.bf16.msra.mxu0 %v5880
    %6320 = vmatprep.subr.bf16.mxu0 %v5887
    %6321 = vmatpush1.bf16.msra.mxu0 %v5886
    %6322 = vmatprep.subr.bf16.mxu0 %v5893
    %6323 = vmatpush1.bf16.msra.mxu0 %v5892
    %6324 = vmatprep.subr.bf16.mxu0 %v5899
    %6325 = vmatpush1.bf16.msra.mxu0 %v5898
    %6326 = vmatprep.subr.bf16.mxu0 %v5905
    %6327 = vmatpush1.bf16.msra.mxu0 %v5904
    %6328 = vmatprep.subr.bf16.mxu0 %v5911
    %6329 = vmatpush1.bf16.msra.mxu0 %v5910
    %6330 = vmatprep.subr.bf16.mxu0 %v5917
    %6331 = vmatpush1.bf16.msra.mxu0 %v5916
    %6332 = vmatprep.subr.bf16.mxu0 %v5923
    %6333 = vmatpush1.bf16.msra.mxu0 %v5922
    %6334 = vmatprep.subr.bf16.mxu0 %v5929
    %6335 = vmatpush1.bf16.msra.mxu0 %v5928
    %6336 = vmatprep.mubr.bf16.mxu0 %v4493
    %6337 = vmatmul.mubr.bf16.gmra.mrb[0].mxu0 %v4492
    %v6338 = vpop.f32.mrb[0].mxu0
    %v6339 = vadd.f32 %v6298, %v6338
    %v6340 = vpop.f32.mrb[0].mxu0
    %v6341 = vadd.f32 %v6300, %v6340
    %v6342 = vpop.f32.mrb[0].mxu0
    %v6343 = vpop.f32.mrb[0].mxu0
    %6344 = vdwg.mxu0
    %6345 = vmatprep.subr.bf16.mxu0 %v5649
    %6346 = vmatpush1.bf16.msra.mxu0 %v5648
    %6347 = vmatprep.subr.bf16.mxu0 %v5655
    %6348 = vmatpush1.bf16.msra.mxu0 %v5654
    %6349 = vmatprep.subr.bf16.mxu0 %v5661
    %6350 = vmatpush1.bf16.msra.mxu0 %v5660
    %6351 = vmatprep.subr.bf16.mxu0 %v5667
    %6352 = vmatpush1.bf16.msra.mxu0 %v5666
    %6353 = vmatprep.subr.bf16.mxu0 %v5673
    %6354 = vmatpush1.bf16.msra.mxu0 %v5672
    %6355 = vmatprep.subr.bf16.mxu0 %v5679
    %6356 = vmatpush1.bf16.msra.mxu0 %v5678
    %6357 = vmatprep.subr.bf16.mxu0 %v5685
    %6358 = vmatpush1.bf16.msra.mxu0 %v5684
    %6359 = vmatprep.subr.bf16.mxu0 %v5691
    %6360 = vmatpush1.bf16.msra.mxu0 %v5690
    %6361 = vmatprep.subr.bf16.mxu0 %v5697
    %6362 = vmatpush1.bf16.msra.mxu0 %v5696
    %6363 = vmatprep.subr.bf16.mxu0 %v5703
    %6364 = vmatpush1.bf16.msra.mxu0 %v5702
    %6365 = vmatprep.subr.bf16.mxu0 %v5709
    %6366 = vmatpush1.bf16.msra.mxu0 %v5708
    %6367 = vmatprep.subr.bf16.mxu0 %v5715
    %6368 = vmatpush1.bf16.msra.mxu0 %v5714
    %6369 = vmatprep.subr.bf16.mxu0 %v5721
    %6370 = vmatpush1.bf16.msra.mxu0 %v5720
    %6371 = vmatprep.subr.bf16.mxu0 %v5727
    %6372 = vmatpush1.bf16.msra.mxu0 %v5726
    %6373 = vmatprep.subr.bf16.mxu0 %v5733
    %6374 = vmatpush1.bf16.msra.mxu0 %v5732
    %6375 = vmatprep.subr.bf16.mxu0 %v5739
    %6376 = vmatpush1.bf16.msra.mxu0 %v5738
    %6377 = vmatprep.mubr.bf16.mxu0 %v4489
    %6378 = vmatmul.mubr.bf16.gmra.mrb[0].mxu0 %v4488
    %v6379 = vpop.f32.mrb[0].mxu0
    %v6380 = vadd.f32 0.0, %v6379
    %v6381 = vpop.f32.mrb[0].mxu0
    %v6382 = vadd.f32 0.0, %v6381
    %v6383 = vpop.f32.mrb[0].mxu0
    %v6384 = vpop.f32.mrb[0].mxu0
    %6385 = vdwg.mxu0
    %6386 = vmatprep.subr.bf16.mxu0 %v5745
    %6387 = vmatpush1.bf16.msra.mxu0 %v5744
    %6388 = vmatprep.subr.bf16.mxu0 %v5751
    %6389 = vmatpush1.bf16.msra.mxu0 %v5750
    %6390 = vmatprep.subr.bf16.mxu0 %v5757
    %6391 = vmatpush1.bf16.msra.mxu0 %v5756
    %6392 = vmatprep.subr.bf16.mxu0 %v5763
    %6393 = vmatpush1.bf16.msra.mxu0 %v5762
    %6394 = vmatprep.subr.bf16.mxu0 %v5769
    %6395 = vmatpush1.bf16.msra.mxu0 %v5768
    %6396 = vmatprep.subr.bf16.mxu0 %v5775
    %6397 = vmatpush1.bf16.msra.mxu0 %v5774
    %6398 = vmatprep.subr.bf16.mxu0 %v5781
    %6399 = vmatpush1.bf16.msra.mxu0 %v5780
    %6400 = vmatprep.subr.bf16.mxu0 %v5787
    %6401 = vmatpush1.bf16.msra.mxu0 %v5786
    %6402 = vmatprep.subr.bf16.mxu0 %v5793
    %6403 = vmatpush1.bf16.msra.mxu0 %v5792
    %6404 = vmatprep.subr.bf16.mxu0 %v5799
    %6405 = vmatpush1.bf16.msra.mxu0 %v5798
    %6406 = vmatprep.subr.bf16.mxu0 %v5805
    %6407 = vmatpush1.bf16.msra.mxu0 %v5804
    %6408 = vmatprep.subr.bf16.mxu0 %v5811
    %6409 = vmatpush1.bf16.msra.mxu0 %v5810
    %6410 = vmatprep.subr.bf16.mxu0 %v5817
    %6411 = vmatpush1.bf16.msra.mxu0 %v5816
    %6412 = vmatprep.subr.bf16.mxu0 %v5823
    %6413 = vmatpush1.bf16.msra.mxu0 %v5822
    %6414 = vmatprep.subr.bf16.mxu0 %v5829
    %6415 = vmatpush1.bf16.msra.mxu0 %v5828
    %6416 = vmatprep.subr.bf16.mxu0 %v5835
    %6417 = vmatpush1.bf16.msra.mxu0 %v5834
    %6418 = vmatprep.mubr.bf16.mxu0 %v4491
    %6419 = vmatmul.mubr.bf16.gmra.mrb[0].mxu0 %v4490
    %v6420 = vpop.f32.mrb[0].mxu0
    %v6421 = vadd.f32 %v6380, %v6420
    %v6422 = vpop.f32.mrb[0].mxu0
    %v6423 = vadd.f32 %v6382, %v6422
    %v6424 = vpop.f32.mrb[0].mxu0
    %v6425 = vpop.f32.mrb[0].mxu0
    %6426 = vdwg.mxu0
    %6427 = vmatprep.subr.bf16.mxu0 %v5841
    %6428 = vmatpush1.bf16.msra.mxu0 %v5840
    %6429 = vmatprep.subr.bf16.mxu0 %v5847
    %6430 = vmatpush1.bf16.msra.mxu0 %v5846
    %6431 = vmatprep.subr.bf16.mxu0 %v5853
    %6432 = vmatpush1.bf16.msra.mxu0 %v5852
    %6433 = vmatprep.subr.bf16.mxu0 %v5859
    %6434 = vmatpush1.bf16.msra.mxu0 %v5858
    %6435 = vmatprep.subr.bf16.mxu0 %v5865
    %6436 = vmatpush1.bf16.msra.mxu0 %v5864
    %6437 = vmatprep.subr.bf16.mxu0 %v5871
    %6438 = vmatpush1.bf16.msra.mxu0 %v5870
    %6439 = vmatprep.subr.bf16.mxu0 %v5877
    %6440 = vmatpush1.bf16.msra.mxu0 %v5876
    %6441 = vmatprep.subr.bf16.mxu0 %v5883
    %6442 = vmatpush1.bf16.msra.mxu0 %v5882
    %6443 = vmatprep.subr.bf16.mxu0 %v5889
    %6444 = vmatpush1.bf16.msra.mxu0 %v5888
    %6445 = vmatprep.subr.bf16.mxu0 %v5895
    %6446 = vmatpush1.bf16.msra.mxu0 %v5894
    %6447 = vmatprep.subr.bf16.mxu0 %v5901
    %6448 = vmatpush1.bf16.msra.mxu0 %v5900
    %6449 = vmatprep.subr.bf16.mxu0 %v5907
    %6450 = vmatpush1.bf16.msra.mxu0 %v5906
    %6451 = vmatprep.subr.bf16.mxu0 %v5913
    %6452 = vmatpush1.bf16.msra.mxu0 %v5912
    %6453 = vmatprep.subr.bf16.mxu0 %v5919
    %6454 = vmatpush1.bf16.msra.mxu0 %v5918
    %6455 = vmatprep.subr.bf16.mxu0 %v5925
    %6456 = vmatpush1.bf16.msra.mxu0 %v5924
    %6457 = vmatprep.subr.bf16.mxu0 %v5931
    %6458 = vmatpush1.bf16.msra.mxu0 %v5930
    %6459 = vmatprep.mubr.bf16.mxu0 %v4493
    %6460 = vmatmul.mubr.bf16.gmra.mrb[0].mxu0 %v4492
    %v6461 = vpop.f32.mrb[0].mxu0
    %v6462 = vadd.f32 %v6421, %v6461
    %v6463 = vpop.f32.mrb[0].mxu0
    %v6464 = vadd.f32 %v6423, %v6463
    %v6465 = vpop.f32.mrb[0].mxu0
    %v6466 = vpop.f32.mrb[0].mxu0
    %6467 = vdwg.mxu0
    %6468 = vmatprep.subr.bf16.mxu0 %v5651
    %6469 = vmatpush1.bf16.msra.mxu0 %v5650
    %6470 = vmatprep.subr.bf16.mxu0 %v5657
    %6471 = vmatpush1.bf16.msra.mxu0 %v5656
    %6472 = vmatprep.subr.bf16.mxu0 %v5663
    %6473 = vmatpush1.bf16.msra.mxu0 %v5662
    %6474 = vmatprep.subr.bf16.mxu0 %v5669
    %6475 = vmatpush1.bf16.msra.mxu0 %v5668
    %6476 = vmatprep.subr.bf16.mxu0 %v5675
    %6477 = vmatpush1.bf16.msra.mxu0 %v5674
    %6478 = vmatprep.subr.bf16.mxu0 %v5681
    %6479 = vmatpush1.bf16.msra.mxu0 %v5680
    %6480 = vmatprep.subr.bf16.mxu0 %v5687
    %6481 = vmatpush1.bf16.msra.mxu0 %v5686
    %6482 = vmatprep.subr.bf16.mxu0 %v5693
    %6483 = vmatpush1.bf16.msra.mxu0 %v5692
    %6484 = vmatprep.subr.bf16.mxu0 %v5699
    %6485 = vmatpush1.bf16.msra.mxu0 %v5698
    %6486 = vmatprep.subr.bf16.mxu0 %v5705
    %6487 = vmatpush1.bf16.msra.mxu0 %v5704
    %6488 = vmatprep.subr.bf16.mxu0 %v5711
    %6489 = vmatpush1.bf16.msra.mxu0 %v5710
    %6490 = vmatprep.subr.bf16.mxu0 %v5717
    %6491 = vmatpush1.bf16.msra.mxu0 %v5716
    %6492 = vmatprep.subr.bf16.mxu0 %v5723
    %6493 = vmatpush1.bf16.msra.mxu0 %v5722
    %6494 = vmatprep.subr.bf16.mxu0 %v5729
    %6495 = vmatpush1.bf16.msra.mxu0 %v5728
    %6496 = vmatprep.subr.bf16.mxu0 %v5735
    %6497 = vmatpush1.bf16.msra.mxu0 %v5734
    %6498 = vmatprep.subr.bf16.mxu0 %v5741
    %6499 = vmatpush1.bf16.msra.mxu0 %v5740
    %6500 = vmatprep.mubr.bf16.mxu0 %v4489
    %6501 = vmatmul.mubr.bf16.gmra.mrb[0].mxu0 %v4488
    %v6502 = vpop.f32.mrb[0].mxu0
    %v6503 = vadd.f32 0.0, %v6502
    %v6504 = vpop.f32.mrb[0].mxu0
    %v6505 = vadd.f32 0.0, %v6504
    %v6506 = vpop.f32.mrb[0].mxu0
    %v6507 = vpop.f32.mrb[0].mxu0
    %6508 = vdwg.mxu0
    %6509 = vmatprep.subr.bf16.mxu0 %v5747
    %6510 = vmatpush1.bf16.msra.mxu0 %v5746
    %6511 = vmatprep.subr.bf16.mxu0 %v5753
    %6512 = vmatpush1.bf16.msra.mxu0 %v5752
    %6513 = vmatprep.subr.bf16.mxu0 %v5759
    %6514 = vmatpush1.bf16.msra.mxu0 %v5758
    %6515 = vmatprep.subr.bf16.mxu0 %v5765
    %6516 = vmatpush1.bf16.msra.mxu0 %v5764
    %6517 = vmatprep.subr.bf16.mxu0 %v5771
    %6518 = vmatpush1.bf16.msra.mxu0 %v5770
    %6519 = vmatprep.subr.bf16.mxu0 %v5777
    %6520 = vmatpush1.bf16.msra.mxu0 %v5776
    %6521 = vmatprep.subr.bf16.mxu0 %v5783
    %6522 = vmatpush1.bf16.msra.mxu0 %v5782
    %6523 = vmatprep.subr.bf16.mxu0 %v5789
    %6524 = vmatpush1.bf16.msra.mxu0 %v5788
    %6525 = vmatprep.subr.bf16.mxu0 %v5795
    %6526 = vmatpush1.bf16.msra.mxu0 %v5794
    %6527 = vmatprep.subr.bf16.mxu0 %v5801
    %6528 = vmatpush1.bf16.msra.mxu0 %v5800
    %6529 = vmatprep.subr.bf16.mxu0 %v5807
    %6530 = vmatpush1.bf16.msra.mxu0 %v5806
    %6531 = vmatprep.subr.bf16.mxu0 %v5813
    %6532 = vmatpush1.bf16.msra.mxu0 %v5812
    %6533 = vmatprep.subr.bf16.mxu0 %v5819
    %6534 = vmatpush1.bf16.msra.mxu0 %v5818
    %6535 = vmatprep.subr.bf16.mxu0 %v5825
    %6536 = vmatpush1.bf16.msra.mxu0 %v5824
    %6537 = vmatprep.subr.bf16.mxu0 %v5831
    %6538 = vmatpush1.bf16.msra.mxu0 %v5830
    %6539 = vmatprep.subr.bf16.mxu0 %v5837
    %6540 = vmatpush1.bf16.msra.mxu0 %v5836
    %6541 = vmatprep.mubr.bf16.mxu0 %v4491
    %6542 = vmatmul.mubr.bf16.gmra.mrb[0].mxu0 %v4490
    %v6543 = vpop.f32.mrb[0].mxu0
    %v6544 = vadd.f32 %v6503, %v6543
    %v6545 = vpop.f32.mrb[0].mxu0
    %v6546 = vadd.f32 %v6505, %v6545
    %v6547 = vpop.f32.mrb[0].mxu0
    %v6548 = vpop.f32.mrb[0].mxu0
    %6549 = vdwg.mxu0
    %6550 = vmatprep.subr.bf16.mxu0 %v5843
    %6551 = vmatpush1.bf16.msra.mxu0 %v5842
    %6552 = vmatprep.subr.bf16.mxu0 %v5849
    %6553 = vmatpush1.bf16.msra.mxu0 %v5848
    %6554 = vmatprep.subr.bf16.mxu0 %v5855
    %6555 = vmatpush1.bf16.msra.mxu0 %v5854
    %6556 = vmatprep.subr.bf16.mxu0 %v5861
    %6557 = vmatpush1.bf16.msra.mxu0 %v5860
    %6558 = vmatprep.subr.bf16.mxu0 %v5867
    %6559 = vmatpush1.bf16.msra.mxu0 %v5866
    %6560 = vmatprep.subr.bf16.mxu0 %v5873
    %6561 = vmatpush1.bf16.msra.mxu0 %v5872
    %6562 = vmatprep.subr.bf16.mxu0 %v5879
    %6563 = vmatpush1.bf16.msra.mxu0 %v5878
    %6564 = vmatprep.subr.bf16.mxu0 %v5885
    %6565 = vmatpush1.bf16.msra.mxu0 %v5884
    %6566 = vmatprep.subr.bf16.mxu0 %v5891
    %6567 = vmatpush1.bf16.msra.mxu0 %v5890
    %6568 = vmatprep.subr.bf16.mxu0 %v5897
    %6569 = vmatpush1.bf16.msra.mxu0 %v5896
    %6570 = vmatprep.subr.bf16.mxu0 %v5903
    %6571 = vmatpush1.bf16.msra.mxu0 %v5902
    %6572 = vmatprep.subr.bf16.mxu0 %v5909
    %6573 = vmatpush1.bf16.msra.mxu0 %v5908
    %6574 = vmatprep.subr.bf16.mxu0 %v5915
    %6575 = vmatpush1.bf16.msra.mxu0 %v5914
    %6576 = vmatprep.subr.bf16.mxu0 %v5921
    %6577 = vmatpush1.bf16.msra.mxu0 %v5920
    %6578 = vmatprep.subr.bf16.mxu0 %v5927
    %6579 = vmatpush1.bf16.msra.mxu0 %v5926
    %6580 = vmatprep.subr.bf16.mxu0 %v5933
    %6581 = vmatpush1.bf16.msra.mxu0 %v5932
    %6582 = vmatprep.mubr.bf16.mxu0 %v4493
    %6583 = vmatmul.mubr.bf16.gmra.mrb[0].mxu0 %v4492
    %v6584 = vpop.f32.mrb[0].mxu0
    %v6585 = vadd.f32 %v6544, %v6584
    %v6586 = vpop.f32.mrb[0].mxu0
    %v6587 = vadd.f32 %v6546, %v6586
    %v6588 = vpop.f32.mrb[0].mxu0
    %v6589 = vpop.f32.mrb[0].mxu0
    %6590 = vdwg.mxu0
    %v6591 = vadd.f32 %v4201, %v6339
    %v6592 = vadd.f32 %v4203, %v6341
    %v6593 = vadd.f32 %v4324, %v6462
    %v6594 = vadd.f32 %v4326, %v6464
    %v6595 = vadd.f32 %v4447, %v6585
    %v6596 = vadd.f32 %v4449, %v6587
    %v6597 = vld [vmem:[#allocation13] sm:$0x3f]
    %v6599 = vlaneseq
    %v6600 = vshrl.u32 %v6599, 7
    %v6601 = vsub.s32 0, %v6600
    %v6602 = vrot.slane %v6597, %v6601
    %v6603 = vlaneseq
    %v6604 = vshrl.u32 %v6603, 7
    %v6605 = vsub.s32 1, %v6604
    %v6606 = vrot.slane %v6597, %v6605
    %v6607 = vlaneseq
    %v6608 = vshrl.u32 %v6607, 7
    %v6609 = vsub.s32 2, %v6608
    %v6610 = vrot.slane %v6597, %v6609
    %v6611 = vlaneseq
    %v6612 = vshrl.u32 %v6611, 7
    %v6613 = vsub.s32 3, %v6612
    %v6614 = vrot.slane %v6597, %v6613
    %v6615 = vlaneseq
    %v6616 = vshrl.u32 %v6615, 7
    %v6617 = vsub.s32 4, %v6616
    %v6618 = vrot.slane %v6597, %v6617
    %v6619 = vlaneseq
    %v6620 = vshrl.u32 %v6619, 7
    %v6621 = vsub.s32 5, %v6620
    %v6622 = vrot.slane %v6597, %v6621
    %v6629 = vadd.f32 %v6591, %v6602
    %v6630 = vadd.f32 %v6592, %v6606
    %v6631 = vadd.f32 %v6593, %v6610
    %v6632 = vadd.f32 %v6594, %v6614
    %v6633 = vadd.f32 %v6595, %v6618
    %v6634 = vadd.f32 %v6596, %v6622
    %vm6635 = vcmp.gt.f32.partialorder %v6629, 0.0
    %vm6636 = vcmp.gt.f32.partialorder %v6630, 0.0
    %vm6637 = vcmp.gt.f32.partialorder %v6631, 0.0
    %vm6638 = vcmp.gt.f32.partialorder %v6632, 0.0
    %vm6639 = vcmp.gt.f32.partialorder %v6633, 0.0
    %vm6640 = vcmp.gt.f32.partialorder %v6634, 0.0
    %v6641 = vmul.f32 %v6629, 0.01
    %v6642 = vmul.f32 %v6630, 0.01
    %v6643 = vmul.f32 %v6631, 0.01
    %v6644 = vmul.f32 %v6632, 0.01
    %v6645 = vmul.f32 %v6633, 0.01
    %v6646 = vmul.f32 %v6634, 0.01
    %v6647 = vsel %vm6635, %v6629, %v6641
    %v6648 = vsel %vm6636, %v6630, %v6642
    %v6649 = vsel %vm6637, %v6631, %v6643
    %v6650 = vsel %vm6638, %v6632, %v6644
    %v6651 = vsel %vm6639, %v6633, %v6645
    %v6652 = vsel %vm6640, %v6634, %v6646
    %v6653 = vpack.c.bf16 %v6647, %v6647
    %v6654 = vpack.c.bf16 %v6648, %v6648
    %v6655 = vpack.c.bf16 %v6649, %v6649
    %v6656 = vpack.c.bf16 %v6650, %v6650
    %v6657 = vpack.c.bf16 %v6651, %v6651
    %v6658 = vpack.c.bf16 %v6652, %v6652
    %v6659 = vld [vmem:[#allocation14] sm:$0xff]
    %v6660 = vld [vmem:[#allocation14 + $0x8] sm:$0xff]
    %v6661 = vld [vmem:[#allocation14 + $0x10] sm:$0xff]
    %v6662 = vld [vmem:[#allocation14 + $0x18] sm:$0xff]
    %v6663 = vld [vmem:[#allocation14 + $0x20] sm:$0xff]
    %v6664 = vld [vmem:[#allocation14 + $0x28] sm:$0xff]
    %v6665 = vld [vmem:[#allocation14 + $0x30] sm:$0xff]
    %v6666 = vld [vmem:[#allocation14 + $0x38] sm:$0xff]
    %v6667 = vld [vmem:[#allocation14 + $0x40] sm:$0xff]
    %v6668 = vld [vmem:[#allocation14 + $0x48] sm:$0xff]
    %v6669 = vld [vmem:[#allocation14 + $0x50] sm:$0xff]
    %v6670 = vld [vmem:[#allocation14 + $0x58] sm:$0xff]
    %v6671 = vld [vmem:[#allocation14 + $0x60] sm:$0xff]
    %v6672 = vld [vmem:[#allocation14 + $0x68] sm:$0xff]
    %v6673 = vld [vmem:[#allocation14 + $0x70] sm:$0xff]
    %v6674 = vld [vmem:[#allocation14 + $0x78] sm:$0xff]
    %v6675 = vld [vmem:[#allocation14 + $0x80] sm:$0xff]
    %v6676 = vld [vmem:[#allocation14 + $0x88] sm:$0xff]
    %v6677 = vld [vmem:[#allocation14 + $0x90] sm:$0xff]
    %v6678 = vld [vmem:[#allocation14 + $0x98] sm:$0xff]
    %v6679 = vld [vmem:[#allocation14 + $0xa0] sm:$0xff]
    %v6680 = vld [vmem:[#allocation14 + $0xa8] sm:$0xff]
    %v6681 = vld [vmem:[#allocation14 + $0xb0] sm:$0xff]
    %v6682 = vld [vmem:[#allocation14 + $0xb8] sm:$0xff]
    %v6683 = vld [vmem:[#allocation14 + $0xc0] sm:$0xff]
    %v6684 = vld [vmem:[#allocation14 + $0xc8] sm:$0xff]
    %v6685 = vld [vmem:[#allocation14 + $0xd0] sm:$0xff]
    %v6686 = vld [vmem:[#allocation14 + $0xd8] sm:$0xff]
    %v6687 = vld [vmem:[#allocation14 + $0xe0] sm:$0xff]
    %v6688 = vld [vmem:[#allocation14 + $0xe8] sm:$0xff]
    %v6689 = vld [vmem:[#allocation14 + $0xf0] sm:$0xff]
    %v6690 = vld [vmem:[#allocation14 + $0xf8] sm:$0xff]
    %v6691 = vld [vmem:[#allocation14 + $0x100] sm:$0xff]
    %v6692 = vld [vmem:[#allocation14 + $0x108] sm:$0xff]
    %v6693 = vld [vmem:[#allocation14 + $0x110] sm:$0xff]
    %v6694 = vld [vmem:[#allocation14 + $0x118] sm:$0xff]
    %v6695 = vld [vmem:[#allocation14 + $0x120] sm:$0xff]
    %v6696 = vld [vmem:[#allocation14 + $0x128] sm:$0xff]
    %v6697 = vld [vmem:[#allocation14 + $0x130] sm:$0xff]
    %v6698 = vld [vmem:[#allocation14 + $0x138] sm:$0xff]
    %v6699 = vld [vmem:[#allocation14 + $0x140] sm:$0xff]
    %v6700 = vld [vmem:[#allocation14 + $0x148] sm:$0xff]
    %v6701 = vld [vmem:[#allocation14 + $0x150] sm:$0xff]
    %v6702 = vld [vmem:[#allocation14 + $0x158] sm:$0xff]
    %v6703 = vld [vmem:[#allocation14 + $0x160] sm:$0xff]
    %v6704 = vld [vmem:[#allocation14 + $0x168] sm:$0xff]
    %v6705 = vld [vmem:[#allocation14 + $0x170] sm:$0xff]
    %v6706 = vld [vmem:[#allocation14 + $0x178] sm:$0xff]
    %v6707 = vld [vmem:[#allocation14 + $0x180] sm:$0xff]
    %v6708 = vld [vmem:[#allocation14 + $0x188] sm:$0xff]
    %v6709 = vld [vmem:[#allocation14 + $0x190] sm:$0xff]
    %v6710 = vld [vmem:[#allocation14 + $0x198] sm:$0xff]
    %v6711 = vld [vmem:[#allocation14 + $0x1a0] sm:$0xff]
    %v6712 = vld [vmem:[#allocation14 + $0x1a8] sm:$0xff]
    %v6713 = vld [vmem:[#allocation14 + $0x1b0] sm:$0xff]
    %v6714 = vld [vmem:[#allocation14 + $0x1b8] sm:$0xff]
    %v6715 = vld [vmem:[#allocation14 + $0x1c0] sm:$0xff]
    %v6716 = vld [vmem:[#allocation14 + $0x1c8] sm:$0xff]
    %v6717 = vld [vmem:[#allocation14 + $0x1d0] sm:$0xff]
    %v6718 = vld [vmem:[#allocation14 + $0x1d8] sm:$0xff]
    %v6719 = vld [vmem:[#allocation14 + $0x1e0] sm:$0xff]
    %v6720 = vld [vmem:[#allocation14 + $0x1e8] sm:$0xff]
    %v6721 = vld [vmem:[#allocation14 + $0x1f0] sm:$0xff]
    %v6722 = vld [vmem:[#allocation14 + $0x1f8] sm:$0xff]
    %v6723 = vld [vmem:[#allocation14 + $0x200] sm:$0xff]
    %v6724 = vld [vmem:[#allocation14 + $0x208] sm:$0xff]
    %v6725 = vld [vmem:[#allocation14 + $0x210] sm:$0xff]
    %v6726 = vld [vmem:[#allocation14 + $0x218] sm:$0xff]
    %v6727 = vld [vmem:[#allocation14 + $0x220] sm:$0xff]
    %v6728 = vld [vmem:[#allocation14 + $0x228] sm:$0xff]
    %v6729 = vld [vmem:[#allocation14 + $0x230] sm:$0xff]
    %v6730 = vld [vmem:[#allocation14 + $0x238] sm:$0xff]
    %v6731 = vld [vmem:[#allocation14 + $0x240] sm:$0xff]
    %v6732 = vld [vmem:[#allocation14 + $0x248] sm:$0xff]
    %v6733 = vld [vmem:[#allocation14 + $0x250] sm:$0xff]
    %v6734 = vld [vmem:[#allocation14 + $0x258] sm:$0xff]
    %v6735 = vld [vmem:[#allocation14 + $0x260] sm:$0xff]
    %v6736 = vld [vmem:[#allocation14 + $0x268] sm:$0xff]
    %v6737 = vld [vmem:[#allocation14 + $0x270] sm:$0xff]
    %v6738 = vld [vmem:[#allocation14 + $0x278] sm:$0xff]
    %v6739 = vld [vmem:[#allocation14 + $0x280] sm:$0xff]
    %v6740 = vld [vmem:[#allocation14 + $0x288] sm:$0xff]
    %v6741 = vld [vmem:[#allocation14 + $0x290] sm:$0xff]
    %v6742 = vld [vmem:[#allocation14 + $0x298] sm:$0xff]
    %v6743 = vld [vmem:[#allocation14 + $0x2a0] sm:$0xff]
    %v6744 = vld [vmem:[#allocation14 + $0x2a8] sm:$0xff]
    %v6745 = vld [vmem:[#allocation14 + $0x2b0] sm:$0xff]
    %v6746 = vld [vmem:[#allocation14 + $0x2b8] sm:$0xff]
    %v6747 = vld [vmem:[#allocation14 + $0x2c0] sm:$0xff]
    %v6748 = vld [vmem:[#allocation14 + $0x2c8] sm:$0xff]
    %v6749 = vld [vmem:[#allocation14 + $0x2d0] sm:$0xff]
    %v6750 = vld [vmem:[#allocation14 + $0x2d8] sm:$0xff]
    %v6751 = vld [vmem:[#allocation14 + $0x2e0] sm:$0xff]
    %v6752 = vld [vmem:[#allocation14 + $0x2e8] sm:$0xff]
    %v6753 = vld [vmem:[#allocation14 + $0x2f0] sm:$0xff]
    %v6754 = vld [vmem:[#allocation14 + $0x2f8] sm:$0xff]
    %v6755 = vld [vmem:[#allocation16] sm:$0x3]
    %v6757 = vlaneseq
    %v6758 = vshrl.u32 %v6757, 7
    %v6759 = vsub.s32 0, %v6758
    %v6760 = vrot.slane %v6755, %v6759
    %v6761 = vlaneseq
    %v6762 = vshrl.u32 %v6761, 7
    %v6763 = vsub.s32 1, %v6762
    %v6764 = vrot.slane %v6755, %v6763
    %v6863 = vunpack.c.l.b16 %v6659
    %v6864 = vunpack.c.h.b16 %v6659
    %v6865 = vunpack.c.l.b16 %v6660
    %v6866 = vunpack.c.h.b16 %v6660
    %v6867 = vunpack.c.l.b16 %v6661
    %v6868 = vunpack.c.h.b16 %v6661
    %v6869 = vunpack.c.l.b16 %v6662
    %v6870 = vunpack.c.h.b16 %v6662
    %v6871 = vunpack.c.l.b16 %v6663
    %v6872 = vunpack.c.h.b16 %v6663
    %v6873 = vunpack.c.l.b16 %v6664
    %v6874 = vunpack.c.h.b16 %v6664
    %v6875 = vunpack.c.l.b16 %v6665
    %v6876 = vunpack.c.h.b16 %v6665
    %v6877 = vunpack.c.l.b16 %v6666
    %v6878 = vunpack.c.h.b16 %v6666
    %v6879 = vunpack.c.l.b16 %v6667
    %v6880 = vunpack.c.h.b16 %v6667
    %v6881 = vunpack.c.l.b16 %v6668
    %v6882 = vunpack.c.h.b16 %v6668
    %v6883 = vunpack.c.l.b16 %v6669
    %v6884 = vunpack.c.h.b16 %v6669
    %v6885 = vunpack.c.l.b16 %v6670
    %v6886 = vunpack.c.h.b16 %v6670
    %v6887 = vunpack.c.l.b16 %v6671
    %v6888 = vunpack.c.h.b16 %v6671
    %v6889 = vunpack.c.l.b16 %v6672
    %v6890 = vunpack.c.h.b16 %v6672
    %v6891 = vunpack.c.l.b16 %v6673
    %v6892 = vunpack.c.h.b16 %v6673
    %v6893 = vunpack.c.l.b16 %v6674
    %v6894 = vunpack.c.h.b16 %v6674
    %v6895 = vunpack.c.l.b16 %v6675
    %v6896 = vunpack.c.h.b16 %v6675
    %v6897 = vunpack.c.l.b16 %v6676
    %v6898 = vunpack.c.h.b16 %v6676
    %v6899 = vunpack.c.l.b16 %v6677
    %v6900 = vunpack.c.h.b16 %v6677
    %v6901 = vunpack.c.l.b16 %v6678
    %v6902 = vunpack.c.h.b16 %v6678
    %v6903 = vunpack.c.l.b16 %v6679
    %v6904 = vunpack.c.h.b16 %v6679
    %v6905 = vunpack.c.l.b16 %v6680
    %v6906 = vunpack.c.h.b16 %v6680
    %v6907 = vunpack.c.l.b16 %v6681
    %v6908 = vunpack.c.h.b16 %v6681
    %v6909 = vunpack.c.l.b16 %v6682
    %v6910 = vunpack.c.h.b16 %v6682
    %v6911 = vunpack.c.l.b16 %v6683
    %v6912 = vunpack.c.h.b16 %v6683
    %v6913 = vunpack.c.l.b16 %v6684
    %v6914 = vunpack.c.h.b16 %v6684
    %v6915 = vunpack.c.l.b16 %v6685
    %v6916 = vunpack.c.h.b16 %v6685
    %v6917 = vunpack.c.l.b16 %v6686
    %v6918 = vunpack.c.h.b16 %v6686
    %v6919 = vunpack.c.l.b16 %v6687
    %v6920 = vunpack.c.h.b16 %v6687
    %v6921 = vunpack.c.l.b16 %v6688
    %v6922 = vunpack.c.h.b16 %v6688
    %v6923 = vunpack.c.l.b16 %v6689
    %v6924 = vunpack.c.h.b16 %v6689
    %v6925 = vunpack.c.l.b16 %v6690
    %v6926 = vunpack.c.h.b16 %v6690
    %v6927 = vunpack.c.l.b16 %v6691
    %v6928 = vunpack.c.h.b16 %v6691
    %v6929 = vunpack.c.l.b16 %v6692
    %v6930 = vunpack.c.h.b16 %v6692
    %v6931 = vunpack.c.l.b16 %v6693
    %v6932 = vunpack.c.h.b16 %v6693
    %v6933 = vunpack.c.l.b16 %v6694
    %v6934 = vunpack.c.h.b16 %v6694
    %v6935 = vunpack.c.l.b16 %v6695
    %v6936 = vunpack.c.h.b16 %v6695
    %v6937 = vunpack.c.l.b16 %v6696
    %v6938 = vunpack.c.h.b16 %v6696
    %v6939 = vunpack.c.l.b16 %v6697
    %v6940 = vunpack.c.h.b16 %v6697
    %v6941 = vunpack.c.l.b16 %v6698
    %v6942 = vunpack.c.h.b16 %v6698
    %v6943 = vunpack.c.l.b16 %v6699
    %v6944 = vunpack.c.h.b16 %v6699
    %v6945 = vunpack.c.l.b16 %v6700
    %v6946 = vunpack.c.h.b16 %v6700
    %v6947 = vunpack.c.l.b16 %v6701
    %v6948 = vunpack.c.h.b16 %v6701
    %v6949 = vunpack.c.l.b16 %v6702
    %v6950 = vunpack.c.h.b16 %v6702
    %v6951 = vunpack.c.l.b16 %v6703
    %v6952 = vunpack.c.h.b16 %v6703
    %v6953 = vunpack.c.l.b16 %v6704
    %v6954 = vunpack.c.h.b16 %v6704
    %v6955 = vunpack.c.l.b16 %v6705
    %v6956 = vunpack.c.h.b16 %v6705
    %v6957 = vunpack.c.l.b16 %v6706
    %v6958 = vunpack.c.h.b16 %v6706
    %v6959 = vunpack.c.l.b16 %v6707
    %v6960 = vunpack.c.h.b16 %v6707
    %v6961 = vunpack.c.l.b16 %v6708
    %v6962 = vunpack.c.h.b16 %v6708
    %v6963 = vunpack.c.l.b16 %v6709
    %v6964 = vunpack.c.h.b16 %v6709
    %v6965 = vunpack.c.l.b16 %v6710
    %v6966 = vunpack.c.h.b16 %v6710
    %v6967 = vunpack.c.l.b16 %v6711
    %v6968 = vunpack.c.h.b16 %v6711
    %v6969 = vunpack.c.l.b16 %v6712
    %v6970 = vunpack.c.h.b16 %v6712
    %v6971 = vunpack.c.l.b16 %v6713
    %v6972 = vunpack.c.h.b16 %v6713
    %v6973 = vunpack.c.l.b16 %v6714
    %v6974 = vunpack.c.h.b16 %v6714
    %v6975 = vunpack.c.l.b16 %v6715
    %v6976 = vunpack.c.h.b16 %v6715
    %v6977 = vunpack.c.l.b16 %v6716
    %v6978 = vunpack.c.h.b16 %v6716
    %v6979 = vunpack.c.l.b16 %v6717
    %v6980 = vunpack.c.h.b16 %v6717
    %v6981 = vunpack.c.l.b16 %v6718
    %v6982 = vunpack.c.h.b16 %v6718
    %v6983 = vunpack.c.l.b16 %v6719
    %v6984 = vunpack.c.h.b16 %v6719
    %v6985 = vunpack.c.l.b16 %v6720
    %v6986 = vunpack.c.h.b16 %v6720
    %v6987 = vunpack.c.l.b16 %v6721
    %v6988 = vunpack.c.h.b16 %v6721
    %v6989 = vunpack.c.l.b16 %v6722
    %v6990 = vunpack.c.h.b16 %v6722
    %v6991 = vunpack.c.l.b16 %v6723
    %v6992 = vunpack.c.h.b16 %v6723
    %v6993 = vunpack.c.l.b16 %v6724
    %v6994 = vunpack.c.h.b16 %v6724
    %v6995 = vunpack.c.l.b16 %v6725
    %v6996 = vunpack.c.h.b16 %v6725
    %v6997 = vunpack.c.l.b16 %v6726
    %v6998 = vunpack.c.h.b16 %v6726
    %v6999 = vunpack.c.l.b16 %v6727
    %v7000 = vunpack.c.h.b16 %v6727
    %v7001 = vunpack.c.l.b16 %v6728
    %v7002 = vunpack.c.h.b16 %v6728
    %v7003 = vunpack.c.l.b16 %v6729
    %v7004 = vunpack.c.h.b16 %v6729
    %v7005 = vunpack.c.l.b16 %v6730
    %v7006 = vunpack.c.h.b16 %v6730
    %v7007 = vunpack.c.l.b16 %v6731
    %v7008 = vunpack.c.h.b16 %v6731
    %v7009 = vunpack.c.l.b16 %v6732
    %v7010 = vunpack.c.h.b16 %v6732
    %v7011 = vunpack.c.l.b16 %v6733
    %v7012 = vunpack.c.h.b16 %v6733
    %v7013 = vunpack.c.l.b16 %v6734
    %v7014 = vunpack.c.h.b16 %v6734
    %v7015 = vunpack.c.l.b16 %v6735
    %v7016 = vunpack.c.h.b16 %v6735
    %v7017 = vunpack.c.l.b16 %v6736
    %v7018 = vunpack.c.h.b16 %v6736
    %v7019 = vunpack.c.l.b16 %v6737
    %v7020 = vunpack.c.h.b16 %v6737
    %v7021 = vunpack.c.l.b16 %v6738
    %v7022 = vunpack.c.h.b16 %v6738
    %v7023 = vunpack.c.l.b16 %v6739
    %v7024 = vunpack.c.h.b16 %v6739
    %v7025 = vunpack.c.l.b16 %v6740
    %v7026 = vunpack.c.h.b16 %v6740
    %v7027 = vunpack.c.l.b16 %v6741
    %v7028 = vunpack.c.h.b16 %v6741
    %v7029 = vunpack.c.l.b16 %v6742
    %v7030 = vunpack.c.h.b16 %v6742
    %v7031 = vunpack.c.l.b16 %v6743
    %v7032 = vunpack.c.h.b16 %v6743
    %v7033 = vunpack.c.l.b16 %v6744
    %v7034 = vunpack.c.h.b16 %v6744
    %v7035 = vunpack.c.l.b16 %v6745
    %v7036 = vunpack.c.h.b16 %v6745
    %v7037 = vunpack.c.l.b16 %v6746
    %v7038 = vunpack.c.h.b16 %v6746
    %v7039 = vunpack.c.l.b16 %v6747
    %v7040 = vunpack.c.h.b16 %v6747
    %v7041 = vunpack.c.l.b16 %v6748
    %v7042 = vunpack.c.h.b16 %v6748
    %v7043 = vunpack.c.l.b16 %v6749
    %v7044 = vunpack.c.h.b16 %v6749
    %v7045 = vunpack.c.l.b16 %v6750
    %v7046 = vunpack.c.h.b16 %v6750
    %v7047 = vunpack.c.l.b16 %v6751
    %v7048 = vunpack.c.h.b16 %v6751
    %v7049 = vunpack.c.l.b16 %v6752
    %v7050 = vunpack.c.h.b16 %v6752
    %v7051 = vunpack.c.l.b16 %v6753
    %v7052 = vunpack.c.h.b16 %v6753
    %v7053 = vunpack.c.l.b16 %v6754
    %v7054 = vunpack.c.h.b16 %v6754
    %v7055 = vpack.c.b16 %v6865, %v6863
    %v7056 = vpack.c.b16 %v6866, %v6864
    %v7057 = vpack.c.b16 %v6869, %v6867
    %v7058 = vpack.c.b16 %v6870, %v6868
    %v7059 = vpack.c.b16 %v6873, %v6871
    %v7060 = vpack.c.b16 %v6874, %v6872
    %v7061 = vpack.c.b16 %v6877, %v6875
    %v7062 = vpack.c.b16 %v6878, %v6876
    %v7063 = vpack.c.b16 %v6881, %v6879
    %v7064 = vpack.c.b16 %v6882, %v6880
    %v7065 = vpack.c.b16 %v6885, %v6883
    %v7066 = vpack.c.b16 %v6886, %v6884
    %v7067 = vpack.c.b16 %v6889, %v6887
    %v7068 = vpack.c.b16 %v6890, %v6888
    %v7069 = vpack.c.b16 %v6893, %v6891
    %v7070 = vpack.c.b16 %v6894, %v6892
    %v7071 = vpack.c.b16 %v6897, %v6895
    %v7072 = vpack.c.b16 %v6898, %v6896
    %v7073 = vpack.c.b16 %v6901, %v6899
    %v7074 = vpack.c.b16 %v6902, %v6900
    %v7075 = vpack.c.b16 %v6905, %v6903
    %v7076 = vpack.c.b16 %v6906, %v6904
    %v7077 = vpack.c.b16 %v6909, %v6907
    %v7078 = vpack.c.b16 %v6910, %v6908
    %v7079 = vpack.c.b16 %v6913, %v6911
    %v7080 = vpack.c.b16 %v6914, %v6912
    %v7081 = vpack.c.b16 %v6917, %v6915
    %v7082 = vpack.c.b16 %v6918, %v6916
    %v7083 = vpack.c.b16 %v6921, %v6919
    %v7084 = vpack.c.b16 %v6922, %v6920
    %v7085 = vpack.c.b16 %v6925, %v6923
    %v7086 = vpack.c.b16 %v6926, %v6924
    %v7087 = vpack.c.b16 %v6929, %v6927
    %v7088 = vpack.c.b16 %v6930, %v6928
    %v7089 = vpack.c.b16 %v6933, %v6931
    %v7090 = vpack.c.b16 %v6934, %v6932
    %v7091 = vpack.c.b16 %v6937, %v6935
    %v7092 = vpack.c.b16 %v6938, %v6936
    %v7093 = vpack.c.b16 %v6941, %v6939
    %v7094 = vpack.c.b16 %v6942, %v6940
    %v7095 = vpack.c.b16 %v6945, %v6943
    %v7096 = vpack.c.b16 %v6946, %v6944
    %v7097 = vpack.c.b16 %v6949, %v6947
    %v7098 = vpack.c.b16 %v6950, %v6948
    %v7099 = vpack.c.b16 %v6953, %v6951
    %v7100 = vpack.c.b16 %v6954, %v6952
    %v7101 = vpack.c.b16 %v6957, %v6955
    %v7102 = vpack.c.b16 %v6958, %v6956
    %v7103 = vpack.c.b16 %v6961, %v6959
    %v7104 = vpack.c.b16 %v6962, %v6960
    %v7105 = vpack.c.b16 %v6965, %v6963
    %v7106 = vpack.c.b16 %v6966, %v6964
    %v7107 = vpack.c.b16 %v6969, %v6967
    %v7108 = vpack.c.b16 %v6970, %v6968
    %v7109 = vpack.c.b16 %v6973, %v6971
    %v7110 = vpack.c.b16 %v6974, %v6972
    %v7111 = vpack.c.b16 %v6977, %v6975
    %v7112 = vpack.c.b16 %v6978, %v6976
    %v7113 = vpack.c.b16 %v6981, %v6979
    %v7114 = vpack.c.b16 %v6982, %v6980
    %v7115 = vpack.c.b16 %v6985, %v6983
    %v7116 = vpack.c.b16 %v6986, %v6984
    %v7117 = vpack.c.b16 %v6989, %v6987
    %v7118 = vpack.c.b16 %v6990, %v6988
    %v7119 = vpack.c.b16 %v6993, %v6991
    %v7120 = vpack.c.b16 %v6994, %v6992
    %v7121 = vpack.c.b16 %v6997, %v6995
    %v7122 = vpack.c.b16 %v6998, %v6996
    %v7123 = vpack.c.b16 %v7001, %v6999
    %v7124 = vpack.c.b16 %v7002, %v7000
    %v7125 = vpack.c.b16 %v7005, %v7003
    %v7126 = vpack.c.b16 %v7006, %v7004
    %v7127 = vpack.c.b16 %v7009, %v7007
    %v7128 = vpack.c.b16 %v7010, %v7008
    %v7129 = vpack.c.b16 %v7013, %v7011
    %v7130 = vpack.c.b16 %v7014, %v7012
    %v7131 = vpack.c.b16 %v7017, %v7015
    %v7132 = vpack.c.b16 %v7018, %v7016
    %v7133 = vpack.c.b16 %v7021, %v7019
    %v7134 = vpack.c.b16 %v7022, %v7020
    %v7135 = vpack.c.b16 %v7025, %v7023
    %v7136 = vpack.c.b16 %v7026, %v7024
    %v7137 = vpack.c.b16 %v7029, %v7027
    %v7138 = vpack.c.b16 %v7030, %v7028
    %v7139 = vpack.c.b16 %v7033, %v7031
    %v7140 = vpack.c.b16 %v7034, %v7032
    %v7141 = vpack.c.b16 %v7037, %v7035
    %v7142 = vpack.c.b16 %v7038, %v7036
    %v7143 = vpack.c.b16 %v7041, %v7039
    %v7144 = vpack.c.b16 %v7042, %v7040
    %v7145 = vpack.c.b16 %v7045, %v7043
    %v7146 = vpack.c.b16 %v7046, %v7044
    %v7147 = vpack.c.b16 %v7049, %v7047
    %v7148 = vpack.c.b16 %v7050, %v7048
    %v7149 = vpack.c.b16 %v7053, %v7051
    %v7150 = vpack.c.b16 %v7054, %v7052
    %7247 = vmatprep.subr.bf16.mxu0 %v7056
    %7248 = vmatpush1.bf16.msra.mxu0 %v7055
    %7249 = vmatprep.subr.bf16.mxu0 %v7058
    %7250 = vmatpush1.bf16.msra.mxu0 %v7057
    %7251 = vmatprep.subr.bf16.mxu0 %v7060
    %7252 = vmatpush1.bf16.msra.mxu0 %v7059
    %7253 = vmatprep.subr.bf16.mxu0 %v7062
    %7254 = vmatpush1.bf16.msra.mxu0 %v7061
    %7255 = vmatprep.subr.bf16.mxu0 %v7064
    %7256 = vmatpush1.bf16.msra.mxu0 %v7063
    %7257 = vmatprep.subr.bf16.mxu0 %v7066
    %7258 = vmatpush1.bf16.msra.mxu0 %v7065
    %7259 = vmatprep.subr.bf16.mxu0 %v7068
    %7260 = vmatpush1.bf16.msra.mxu0 %v7067
    %7261 = vmatprep.subr.bf16.mxu0 %v7070
    %7262 = vmatpush1.bf16.msra.mxu0 %v7069
    %7263 = vmatprep.subr.bf16.mxu0 %v7072
    %7264 = vmatpush1.bf16.msra.mxu0 %v7071
    %7265 = vmatprep.subr.bf16.mxu0 %v7074
    %7266 = vmatpush1.bf16.msra.mxu0 %v7073
    %7267 = vmatprep.subr.bf16.mxu0 %v7076
    %7268 = vmatpush1.bf16.msra.mxu0 %v7075
    %7269 = vmatprep.subr.bf16.mxu0 %v7078
    %7270 = vmatpush1.bf16.msra.mxu0 %v7077
    %7271 = vmatprep.subr.bf16.mxu0 %v7080
    %7272 = vmatpush1.bf16.msra.mxu0 %v7079
    %7273 = vmatprep.subr.bf16.mxu0 %v7082
    %7274 = vmatpush1.bf16.msra.mxu0 %v7081
    %7275 = vmatprep.subr.bf16.mxu0 %v7084
    %7276 = vmatpush1.bf16.msra.mxu0 %v7083
    %7277 = vmatprep.subr.bf16.mxu0 %v7086
    %7278 = vmatpush1.bf16.msra.mxu0 %v7085
    %7279 = vmatprep.mubr.bf16.mxu0 %v6654
    %7280 = vmatmul.mubr.bf16.gmra.mrb[0].mxu0 %v6653
    %v7281 = vpop.f32.mrb[0].mxu0
    %v7282 = vadd.f32 %v6760, %v7281
    %v7283 = vpop.f32.mrb[0].mxu0
    %v7284 = vadd.f32 %v6764, %v7283
    %v7285 = vpop.f32.mrb[0].mxu0
    %v7286 = vpop.f32.mrb[0].mxu0
    %7287 = vdwg.mxu0
    %7288 = vmatprep.subr.bf16.mxu0 %v7088
    %7289 = vmatpush1.bf16.msra.mxu0 %v7087
    %7290 = vmatprep.subr.bf16.mxu0 %v7090
    %7291 = vmatpush1.bf16.msra.mxu0 %v7089
    %7292 = vmatprep.subr.bf16.mxu0 %v7092
    %7293 = vmatpush1.bf16.msra.mxu0 %v7091
    %7294 = vmatprep.subr.bf16.mxu0 %v7094
    %7295 = vmatpush1.bf16.msra.mxu0 %v7093
    %7296 = vmatprep.subr.bf16.mxu0 %v7096
    %7297 = vmatpush1.bf16.msra.mxu0 %v7095
    %7298 = vmatprep.subr.bf16.mxu0 %v7098
    %7299 = vmatpush1.bf16.msra.mxu0 %v7097
    %7300 = vmatprep.subr.bf16.mxu0 %v7100
    %7301 = vmatpush1.bf16.msra.mxu0 %v7099
    %7302 = vmatprep.subr.bf16.mxu0 %v7102
    %7303 = vmatpush1.bf16.msra.mxu0 %v7101
    %7304 = vmatprep.subr.bf16.mxu0 %v7104
    %7305 = vmatpush1.bf16.msra.mxu0 %v7103
    %7306 = vmatprep.subr.bf16.mxu0 %v7106
    %7307 = vmatpush1.bf16.msra.mxu0 %v7105
    %7308 = vmatprep.subr.bf16.mxu0 %v7108
    %7309 = vmatpush1.bf16.msra.mxu0 %v7107
    %7310 = vmatprep.subr.bf16.mxu0 %v7110
    %7311 = vmatpush1.bf16.msra.mxu0 %v7109
    %7312 = vmatprep.subr.bf16.mxu0 %v7112
    %7313 = vmatpush1.bf16.msra.mxu0 %v7111
    %7314 = vmatprep.subr.bf16.mxu0 %v7114
    %7315 = vmatpush1.bf16.msra.mxu0 %v7113
    %7316 = vmatprep.subr.bf16.mxu0 %v7116
    %7317 = vmatpush1.bf16.msra.mxu0 %v7115
    %7318 = vmatprep.subr.bf16.mxu0 %v7118
    %7319 = vmatpush1.bf16.msra.mxu0 %v7117
    %7320 = vmatprep.mubr.bf16.mxu0 %v6656
    %7321 = vmatmul.mubr.bf16.gmra.mrb[0].mxu0 %v6655
    %v7322 = vpop.f32.mrb[0].mxu0
    %v7323 = vadd.f32 %v7282, %v7322
    %v7324 = vpop.f32.mrb[0].mxu0
    %v7325 = vadd.f32 %v7284, %v7324
    %v7326 = vpop.f32.mrb[0].mxu0
    %v7327 = vpop.f32.mrb[0].mxu0
    %7328 = vdwg.mxu0
    %7329 = vmatprep.subr.bf16.mxu0 %v7120
    %7330 = vmatpush1.bf16.msra.mxu0 %v7119
    %7331 = vmatprep.subr.bf16.mxu0 %v7122
    %7332 = vmatpush1.bf16.msra.mxu0 %v7121
    %7333 = vmatprep.subr.bf16.mxu0 %v7124
    %7334 = vmatpush1.bf16.msra.mxu0 %v7123
    %7335 = vmatprep.subr.bf16.mxu0 %v7126
    %7336 = vmatpush1.bf16.msra.mxu0 %v7125
    %7337 = vmatprep.subr.bf16.mxu0 %v7128
    %7338 = vmatpush1.bf16.msra.mxu0 %v7127
    %7339 = vmatprep.subr.bf16.mxu0 %v7130
    %7340 = vmatpush1.bf16.msra.mxu0 %v7129
    %7341 = vmatprep.subr.bf16.mxu0 %v7132
    %7342 = vmatpush1.bf16.msra.mxu0 %v7131
    %7343 = vmatprep.subr.bf16.mxu0 %v7134
    %7344 = vmatpush1.bf16.msra.mxu0 %v7133
    %7345 = vmatprep.subr.bf16.mxu0 %v7136
    %7346 = vmatpush1.bf16.msra.mxu0 %v7135
    %7347 = vmatprep.subr.bf16.mxu0 %v7138
    %7348 = vmatpush1.bf16.msra.mxu0 %v7137
    %7349 = vmatprep.subr.bf16.mxu0 %v7140
    %7350 = vmatpush1.bf16.msra.mxu0 %v7139
    %7351 = vmatprep.subr.bf16.mxu0 %v7142
    %7352 = vmatpush1.bf16.msra.mxu0 %v7141
    %7353 = vmatprep.subr.bf16.mxu0 %v7144
    %7354 = vmatpush1.bf16.msra.mxu0 %v7143
    %7355 = vmatprep.subr.bf16.mxu0 %v7146
    %7356 = vmatpush1.bf16.msra.mxu0 %v7145
    %7357 = vmatprep.subr.bf16.mxu0 %v7148
    %7358 = vmatpush1.bf16.msra.mxu0 %v7147
    %7359 = vmatprep.subr.bf16.mxu0 %v7150
    %7360 = vmatpush1.bf16.msra.mxu0 %v7149
    %7361 = vmatprep.mubr.bf16.mxu0 %v6658
    %7362 = vmatmul.mubr.bf16.gmra.mrb[0].mxu0 %v6657
    %v7363 = vpop.f32.mrb[0].mxu0
    %v7364 = vadd.f32 %v7323, %v7363
    %v7365 = vpop.f32.mrb[0].mxu0
    %v7366 = vadd.f32 %v7325, %v7365
    %v7367 = vpop.f32.mrb[0].mxu0
    %v7368 = vpop.f32.mrb[0].mxu0
    %7369 = vdwg.mxu0
    %vm7370 = vcmp.gt.f32.partialorder %v7364, 0.0
    %vm7371 = vcmp.gt.f32.partialorder %v7366, 0.0
    %v7372 = vmul.f32 %v7364, 0.01
    %v7373 = vmul.f32 %v7366, 0.01
    %v7374 = vsel %vm7370, %v7364, %v7372
    %v7375 = vsel %vm7371, %v7366, %v7373
    %v7376 = vpack.c.bf16 %v7374, %v7374
    %v7377 = vpack.c.bf16 %v7375, %v7375
    %v7378 = vld [vmem:[#allocation17] sm:$0xf]
    %v7379 = vld [vmem:[#allocation17 + $0x4] sm:$0xf]
    %v7380 = vld [vmem:[#allocation17 + $0x8] sm:$0xf]
    %v7381 = vld [vmem:[#allocation17 + $0xc] sm:$0xf]
    %v7382 = vld [vmem:[#allocation17 + $0x10] sm:$0xf]
    %v7383 = vld [vmem:[#allocation17 + $0x14] sm:$0xf]
    %v7384 = vld [vmem:[#allocation17 + $0x18] sm:$0xf]
    %v7385 = vld [vmem:[#allocation17 + $0x1c] sm:$0xf]
    %v7386 = vld [vmem:[#allocation17 + $0x20] sm:$0xf]
    %v7387 = vld [vmem:[#allocation17 + $0x24] sm:$0xf]
    %v7388 = vld [vmem:[#allocation17 + $0x28] sm:$0xf]
    %v7389 = vld [vmem:[#allocation17 + $0x2c] sm:$0xf]
    %v7390 = vld [vmem:[#allocation17 + $0x30] sm:$0xf]
    %v7391 = vld [vmem:[#allocation17 + $0x34] sm:$0xf]
    %v7392 = vld [vmem:[#allocation17 + $0x38] sm:$0xf]
    %v7393 = vld [vmem:[#allocation17 + $0x3c] sm:$0xf]
    %v7394 = vld [vmem:[#allocation17 + $0x40] sm:$0xf]
    %v7395 = vld [vmem:[#allocation17 + $0x44] sm:$0xf]
    %v7396 = vld [vmem:[#allocation17 + $0x48] sm:$0xf]
    %v7397 = vld [vmem:[#allocation17 + $0x4c] sm:$0xf]
    %v7398 = vld [vmem:[#allocation17 + $0x50] sm:$0xf]
    %v7399 = vld [vmem:[#allocation17 + $0x54] sm:$0xf]
    %v7400 = vld [vmem:[#allocation17 + $0x58] sm:$0xf]
    %v7401 = vld [vmem:[#allocation17 + $0x5c] sm:$0xf]
    %v7402 = vld [vmem:[#allocation17 + $0x60] sm:$0xf]
    %v7403 = vld [vmem:[#allocation17 + $0x64] sm:$0xf]
    %v7404 = vld [vmem:[#allocation17 + $0x68] sm:$0xf]
    %v7405 = vld [vmem:[#allocation17 + $0x6c] sm:$0xf]
    %v7406 = vld [vmem:[#allocation17 + $0x70] sm:$0xf]
    %v7407 = vld [vmem:[#allocation17 + $0x74] sm:$0xf]
    %v7408 = vld [vmem:[#allocation17 + $0x78] sm:$0xf]
    %v7409 = vld [vmem:[#allocation17 + $0x7c] sm:$0xf]
    %v7410 = vld [vmem:[#allocation19] sm:$0x1]
    %v7412 = vlaneseq
    %v7413 = vshrl.u32 %v7412, 7
    %v7414 = vsub.s32 0, %v7413
    %v7415 = vrot.slane %v7410, %v7414
    %v7449 = vunpack.c.l.b16 %v7378
    %v7450 = vunpack.c.l.b16 %v7379
    %v7451 = vunpack.c.l.b16 %v7380
    %v7452 = vunpack.c.l.b16 %v7381
    %v7453 = vunpack.c.l.b16 %v7382
    %v7454 = vunpack.c.l.b16 %v7383
    %v7455 = vunpack.c.l.b16 %v7384
    %v7456 = vunpack.c.l.b16 %v7385
    %v7457 = vunpack.c.l.b16 %v7386
    %v7458 = vunpack.c.l.b16 %v7387
    %v7459 = vunpack.c.l.b16 %v7388
    %v7460 = vunpack.c.l.b16 %v7389
    %v7461 = vunpack.c.l.b16 %v7390
    %v7462 = vunpack.c.l.b16 %v7391
    %v7463 = vunpack.c.l.b16 %v7392
    %v7464 = vunpack.c.l.b16 %v7393
    %v7465 = vunpack.c.l.b16 %v7394
    %v7466 = vunpack.c.l.b16 %v7395
    %v7467 = vunpack.c.l.b16 %v7396
    %v7468 = vunpack.c.l.b16 %v7397
    %v7469 = vunpack.c.l.b16 %v7398
    %v7470 = vunpack.c.l.b16 %v7399
    %v7471 = vunpack.c.l.b16 %v7400
    %v7472 = vunpack.c.l.b16 %v7401
    %v7473 = vunpack.c.l.b16 %v7402
    %v7474 = vunpack.c.l.b16 %v7403
    %v7475 = vunpack.c.l.b16 %v7404
    %v7476 = vunpack.c.l.b16 %v7405
    %v7477 = vunpack.c.l.b16 %v7406
    %v7478 = vunpack.c.l.b16 %v7407
    %v7479 = vunpack.c.l.b16 %v7408
    %v7480 = vunpack.c.l.b16 %v7409
    %v7481 = vpack.c.b16 %v7450, %v7449
    %v7482 = vpack.c.b16 %v7452, %v7451
    %v7483 = vpack.c.b16 %v7454, %v7453
    %v7484 = vpack.c.b16 %v7456, %v7455
    %v7485 = vpack.c.b16 %v7458, %v7457
    %v7486 = vpack.c.b16 %v7460, %v7459
    %v7487 = vpack.c.b16 %v7462, %v7461
    %v7488 = vpack.c.b16 %v7464, %v7463
    %v7489 = vpack.c.b16 %v7466, %v7465
    %v7490 = vpack.c.b16 %v7468, %v7467
    %v7491 = vpack.c.b16 %v7470, %v7469
    %v7492 = vpack.c.b16 %v7472, %v7471
    %v7493 = vpack.c.b16 %v7474, %v7473
    %v7494 = vpack.c.b16 %v7476, %v7475
    %v7495 = vpack.c.b16 %v7478, %v7477
    %v7496 = vpack.c.b16 %v7480, %v7479
    %7513 = vmatprep.subr.bf16.mxu0 0
    %7514 = vmatpush1.bf16.msra.mxu0 %v7481
    %7515 = vmatprep.subr.bf16.mxu0 0
    %7516 = vmatpush1.bf16.msra.mxu0 %v7482
    %7517 = vmatprep.subr.bf16.mxu0 0
    %7518 = vmatpush1.bf16.msra.mxu0 %v7483
    %7519 = vmatprep.subr.bf16.mxu0 0
    %7520 = vmatpush1.bf16.msra.mxu0 %v7484
    %7521 = vmatprep.subr.bf16.mxu0 0
    %7522 = vmatpush1.bf16.msra.mxu0 %v7485
    %7523 = vmatprep.subr.bf16.mxu0 0
    %7524 = vmatpush1.bf16.msra.mxu0 %v7486
    %7525 = vmatprep.subr.bf16.mxu0 0
    %7526 = vmatpush1.bf16.msra.mxu0 %v7487
    %7527 = vmatprep.subr.bf16.mxu0 0
    %7528 = vmatpush1.bf16.msra.mxu0 %v7488
    %7529 = vmatprep.subr.bf16.mxu0 0
    %7530 = vmatpush1.bf16.msra.mxu0 %v7489
    %7531 = vmatprep.subr.bf16.mxu0 0
    %7532 = vmatpush1.bf16.msra.mxu0 %v7490
    %7533 = vmatprep.subr.bf16.mxu0 0
    %7534 = vmatpush1.bf16.msra.mxu0 %v7491
    %7535 = vmatprep.subr.bf16.mxu0 0
    %7536 = vmatpush1.bf16.msra.mxu0 %v7492
    %7537 = vmatprep.subr.bf16.mxu0 0
    %7538 = vmatpush1.bf16.msra.mxu0 %v7493
    %7539 = vmatprep.subr.bf16.mxu0 0
    %7540 = vmatpush1.bf16.msra.mxu0 %v7494
    %7541 = vmatprep.subr.bf16.mxu0 0
    %7542 = vmatpush1.bf16.msra.mxu0 %v7495
    %7543 = vmatprep.subr.bf16.mxu0 0
    %7544 = vmatpush1.bf16.msra.mxu0 %v7496
    %7545 = vmatprep.mubr.bf16.mxu0 %v7377
    %7546 = vmatmul.mubr.bf16.gmra.mrb[0].mxu0 %v7376
    %v7547 = vpop.f32.mrb[0].mxu0
    %v7548 = vadd.f32 %v7415, %v7547
    %v7549 = vpop.f32.mrb[0].mxu0
    %v7550 = vpop.f32.mrb[0].mxu0
    %v7551 = vpop.f32.mrb[0].mxu0
    %7552 = vdwg.mxu0
    %7553 = vst [vmem:[#allocation20] sm:$0x3] %v7548
    // Predicated region
    $region90: #{_bloomnet_head_impl.1} parent=1 // pred_check
      _
    $region91: #{_bloomnet_head_impl.1} parent=1 // pred_check_branch
      %7555 = sbr.rel (0) target = $region93
    $region92: #{_bloomnet_head_impl.1} parent=1 // pred_region
      %s7557 = ssub.s32 32, 32
      %7558 = vsyncadd [#allocation4], %s7557
      %s7560 = sshll.u32 [#allocation20], 4
      %s7561 = int_to_ptr.vmem [resolvable:$true] %s7560
      %7563 = dma.vmem_to_hbm [thread:$0]  %s7561, 32, %s11, [#allocation4]
    $region93: #{_bloomnet_head_impl.1} parent=1 // pred_fallthru
      _
    // Predicated region
    $region94: #{_bloomnet_head_impl.1} parent=1 // pred_check
      _
    $region95: #{_bloomnet_head_impl.1} parent=1 // pred_check_branch
      %7565 = sbr.rel (0) target = $region97
    $region96: #{_bloomnet_head_impl.1} parent=1 // pred_region
      %7566 = dma.done [#allocation4], 32
    $region97: #{_bloomnet_head_impl.1} parent=1 // pred_fallthru
      _
    %7567 = vsyncpa [#allocation3], 1
    %7568 = vsyncpa [#allocation6], 1
    %7569 = vsyncpa [#allocation9], 1
    %7570 = vsyncpa [#allocation12], 1
    %7571 = vsyncpa [#allocation15], 1
    %7572 = vsyncpa [#allocation18], 1
    %7573 = vsyncpa [#allocation4], 1

</llo_original>
